<compile_context>
chip_gen: v7x
topology: tpu7x:2x2x1
jax: 0.10.0
libtpu: 0.0.40
codegen_flags: <defaults>
</compile_context>

<pallas_src>
import itertools
import functools

import numpy as np
import jax
import jax.numpy as jnp
from jax.experimental import pallas as pl
from jax.experimental.pallas import tpu as pltpu


_NEG_PAD = -1.0e4   # pad value for padded point columns: softplus->0, sigmoid->0
_Q_ALIGN = 128      # lane-dense query padding
_G_ALIGN = 16       # sublane padding of the target axis (bf16-friendly)


def _round_up(x, m):
    return ((x + m - 1) // m) * m


# ----------------------------------------------------------------------------
# Pallas kernel: transposed per-batch cost matrix
#   C^T[b] = w_mask*CE^T + w_class*(-prob)^T + w_dice*dice^T  with shape [Gpad, Qpad],
# accumulated over TP chunks (grid axis 1).
# ----------------------------------------------------------------------------
def _make_cost_kernel(w_class, w_mask, w_dice, p_true):
    contract_last = (((1,), (1,)), ((), ()))   # contract last axis of both operands
    inv_p = 1.0 / float(p_true)

    def kernel(logits_ref, onehot_ref, outm_ref, tgtm_ref, c_ref,
               acc_xt, acc_st, acc_sp, acc_ss, acc_ts):
        k = pl.program_id(1)

        @pl.when(k == 0)
        def _init():
            acc_xt[...] = jnp.zeros_like(acc_xt)
            acc_st[...] = jnp.zeros_like(acc_st)
            acc_sp[...] = jnp.zeros_like(acc_sp)
            acc_ss[...] = jnp.zeros_like(acc_ss)
            acc_ts[...] = jnp.zeros_like(acc_ts)

        # ---- streamed TP chunk (bf16 in HBM, f32 elementwise math) ----
        x_bf = outm_ref[...]                          # [Qp, TK] bf16 mask logits
        t_bf = tgtm_ref[...]                          # [Gp, TK] bf16 binary targets
        x = x_bf.astype(jnp.float32)

        # one exp per element: e = exp(-|x|) gives both sigmoid and softplus
        e = jnp.exp(-jnp.abs(x))
        r = pl.reciprocal(1.0 + e, approx=True)       # EUP
        sig = jnp.where(x >= 0.0, r, e * r)           # sigmoid(x)
        softplus = jnp.maximum(x, 0.0) + jnp.log1p(e)  # softplus(x)

        # transposed [G, Q] accumulations: bf16 MXU operands, f32 accumulate
        acc_xt[...] += jax.lax.dot_general(t_bf, x_bf, contract_last,
                                           preferred_element_type=jnp.float32)
        acc_st[...] += jax.lax.dot_general(t_bf, sig.astype(jnp.bfloat16),
                                           contract_last,
                                           preferred_element_type=jnp.float32)

        # per-query row sums (broadcast along G at finalize) and per-target sums
        acc_sp[...] += jnp.sum(softplus, axis=-1)[None, :]
        acc_ss[...] += jnp.sum(sig, axis=-1)[None, :]
        acc_ts[...] += jnp.sum(t_bf.astype(jnp.float32), axis=-1, keepdims=True)

        @pl.when(k == pl.num_programs(1) - 1)
        def _finalize():
            # cost_class^T[g, q] = -softmax(logits)[q, label_g]  (exact f32)
            logits = logits_ref[...]                              # [Qp, K] f32
            m = jnp.max(logits, axis=-1, keepdims=True)
            ex = jnp.exp(logits - m)
            prob = ex / jnp.sum(ex, axis=-1, keepdims=True)       # exact divide
            oh = onehot_ref[...].astype(jnp.float32)              # [Gp, K]
            cost_class = -jax.lax.dot_general(oh, prob, contract_last,
                                              preferred_element_type=jnp.float32)

            # batch_sigmoid_ce_loss^T: (rowsum(softplus(x))[q] - (t.x)[g,q]) / P
            cost_mask = (acc_sp[...] - acc_xt[...]) * inv_p

            # batch_dice_loss^T
            denom = acc_ss[...] + acc_ts[...]                     # [1,Q] + [G,1]
            cost_dice = 1.0 - (2.0 * acc_st[...] + 1.0) / (denom + 1.0)

            c_ref[...] = (w_mask * cost_mask
                          + w_class * cost_class
                          + w_dice * cost_dice).astype(c_ref.dtype)

    return kernel


def _batched_cost_matrices(logits, onehot, out_pts, tgt_pts, *,
                           w_class, w_mask, w_dice, p_true, tk):
    """logits [B,Qp,K] f32, onehot [B,Gp,K] bf16, out_pts [B,Qp,TPp] bf16,
       tgt_pts [B,Gp,TPp] bf16  ->  C^T [B, Gp, Qp] f32 (one pallas_call)."""
    B, Qp, K = logits.shape
    Gp = onehot.shape[1]
    TPp = out_pts.shape[-1]
    assert TPp % tk == 0
    num_k = TPp // tk

    kernel = _make_cost_kernel(float(w_class), float(w_mask), float(w_dice), p_true)
    return pl.pallas_call(
        kernel,
        out_shape=jax.ShapeDtypeStruct((B, Gp, Qp), jnp.float32),
        grid=(B, num_k),
        in_specs=[
            pl.BlockSpec((None, Qp, K), lambda b, k: (b, 0, 0)),   # logits (k-invariant)
            pl.BlockSpec((None, Gp, K), lambda b, k: (b, 0, 0)),   # onehot (k-invariant)
            pl.BlockSpec((None, Qp, tk), lambda b, k: (b, 0, k)),  # out_pts chunk
            pl.BlockSpec((None, Gp, tk), lambda b, k: (b, 0, k)),  # tgt_pts chunk
        ],
        out_specs=pl.BlockSpec((None, Gp, Qp), lambda b, k: (b, 0, 0)),
        scratch_shapes=[
            pltpu.VMEM((Gp, Qp), jnp.float32),   # sum_p t*x
            pltpu.VMEM((Gp, Qp), jnp.float32),   # sum_p t*sigmoid(x)
            pltpu.VMEM((1, Qp), jnp.float32),    # sum_p softplus(x)
            pltpu.VMEM((1, Qp), jnp.float32),    # sum_p sigmoid(x)
            pltpu.VMEM((Gp, 1), jnp.float32),    # sum_p t
        ],
        compiler_params=pltpu.CompilerParams(
            dimension_semantics=("parallel", "arbitrary"),
            vmem_limit_bytes=32 * 1024 * 1024,
        ),
    )(logits, onehot, out_pts, tgt_pts)


# ----------------------------------------------------------------------------
# point_sample (F.grid_sample bilinear, zeros padding, align_corners=False)
# as a 4-tap gather on the flattened spatial axis (no dense sampling matrix).
# ----------------------------------------------------------------------------
def _point_sample_flat(masks_flat, coords, H, W):
    """masks_flat [N, T, H*W] f32, coords [P, 2] in [0,1] (x, y) -> [N, T, P] f32."""
    x = coords[:, 0] * W - 0.5
    y = coords[:, 1] * H - 0.5
    x0 = jnp.floor(x); x1 = x0 + 1.0
    y0 = jnp.floor(y); y1 = y0 + 1.0
    wx1 = x - x0; wx0 = 1.0 - wx1
    wy1 = y - y0; wy0 = 1.0 - wy1

    def tap(ix, iy, w):
        valid = ((ix >= 0) & (ix < W) & (iy >= 0) & (iy < H)).astype(jnp.float32)
        idx = (jnp.clip(iy, 0, H - 1).astype(jnp.int32) * W
               + jnp.clip(ix, 0, W - 1).astype(jnp.int32))          # [P]
        vals = jnp.take(masks_flat, idx, axis=-1)                   # [N, T, P]
        return vals * (w * valid)[None, None, :]

    return (tap(x0, y0, wx0 * wy0) + tap(x1, y0, wx1 * wy0)
            + tap(x0, y1, wx0 * wy1) + tap(x1, y1, wx1 * wy1))


# ----------------------------------------------------------------------------
# Single jitted device program: point sampling (gathers), padding, one_hot,
# bf16 casts and the batched Pallas cost kernel.
# ----------------------------------------------------------------------------
@functools.partial(jax.jit,
                   static_argnames=("w_class", "w_mask", "w_dice", "point_chunk"))
def _matcher_cost_forward(pred_logits, pred_masks, labels_pad, masks_pad,
                          point_coords, *, w_class, w_mask, w_dice, point_chunk):
    B, Q, K = pred_logits.shape
    Gp = labels_pad.shape[1]
    T, H, W = pred_masks.shape[-3:]
    P = point_coords.shape[1]
    TP = T * P                                   # true number of sampled features

    Qp = _round_up(Q, _Q_ALIGN)
    tk = _round_up(min(int(point_chunk), _round_up(TP, 128)), 128)
    TPp = _round_up(TP, tk)

    pm = pred_masks.reshape(B, Q, T, H * W).astype(jnp.float32)
    tm = masks_pad.reshape(B, Gp, T, H * W).astype(jnp.float32)
    sample = functools.partial(_point_sample_flat, H=H, W=W)
    out_pts = jax.vmap(sample)(pm, point_coords).reshape(B, Q, TP)
    tgt_pts = jax.vmap(sample)(tm, point_coords).reshape(B, Gp, TP)

    # Pad: Q -> Qp (rows sliced off on host), TP -> TPp (zero-contribution columns:
    # x padded with a large negative value, t padded with 0).
    out_pts = jnp.pad(out_pts, ((0, 0), (0, Qp - Q), (0, TPp - TP)),
                      constant_values=_NEG_PAD)
    tgt_pts = jnp.pad(tgt_pts, ((0, 0), (0, 0), (0, TPp - TP)))
    logits = jnp.pad(pred_logits.astype(jnp.float32), ((0, 0), (0, Qp - Q), (0, 0)))

    onehot = jax.nn.one_hot(labels_pad, K, dtype=jnp.bfloat16)      # [B, Gp, K]

    return _batched_cost_matrices(
        logits, onehot,
        out_pts.astype(jnp.bfloat16), tgt_pts.astype(jnp.bfloat16),
        w_class=w_class, w_mask=w_mask, w_dice=w_dice, p_true=TP, tk=tk)


# ----------------------------------------------------------------------------
# Hungarian assignment (exact brute force for small sizes, host side).
# ----------------------------------------------------------------------------
def linear_sum_assignment_bruteforce(C):
    C = np.asarray(C)
    Q, G = C.shape
    assert Q >= G
    best_cost = np.inf
    best = ()
    cols = list(range(G))
    for perm in itertools.permutations(range(Q), G):
        cost = C[list(perm), cols].sum() if G > 0 else 0.0
        if cost < best_cost:
            best_cost = cost
            best = perm
    rows = np.asarray(best, dtype=np.int64)
    cols = np.arange(G, dtype=np.int64)
    order = np.argsort(rows) if G > 0 else np.arange(0, dtype=np.int64)
    return rows[order], cols[order]


# ----------------------------------------------------------------------------
# Matcher module
# ----------------------------------------------------------------------------
class VideoTrackHungarianMatcher:
    def __init__(self, cost_class=1.0, cost_mask=1.0, cost_dice=1.0,
                 num_points=64, point_chunk=512):
        assert cost_class != 0 or cost_mask != 0 or cost_dice != 0, "all costs cant be 0"
        self.cost_class = float(cost_class)
        self.cost_mask = float(cost_mask)
        self.cost_dice = float(cost_dice)
        self.num_points = int(num_points)
        self.point_chunk = int(point_chunk)

    def forward(self, outputs, targets, key):
        """outputs: 'pred_logits' [B,Q,K], 'pred_masks' [B,Q,T,H,W];
           targets: list of dicts with 'labels' [G_b] int, 'masks' [G_b,T,H,W]."""
        pred_logits = outputs["pred_logits"]
        pred_masks = outputs["pred_masks"]
        B, Q, K = pred_logits.shape
        T, H, W = pred_masks.shape[-3:]

        g_list = [int(np.asarray(t["labels"]).shape[0]) for t in targets]
        Gp = max(_G_ALIGN, _round_up(max(g_list), _G_ALIGN))

        # Host-side numpy padding of targets; one transfer per array.
        labels_np = np.zeros((B, Gp), dtype=np.int32)
        masks_np = np.zeros((B, Gp, T, H, W), dtype=np.float32)
        for b, tgt in enumerate(targets):
            g = g_list[b]
            labels_np[b, :g] = np.asarray(tgt["labels"], dtype=np.int32)
            masks_np[b, :g] = np.asarray(tgt["masks"], dtype=np.float32)
        labels_pad = jax.device_put(labels_np)
        masks_pad = jax.device_put(masks_np)

        # Random point coords (replaces torch.rand), one set per batch element.
        point_coords = jax.random.uniform(key, (B, self.num_points, 2),
                                          dtype=jnp.float32)

        Ct = _matcher_cost_forward(pred_logits, pred_masks, labels_pad, masks_pad,
                                   point_coords,
                                   w_class=self.cost_class, w_mask=self.cost_mask,
                                   w_dice=self.cost_dice,
                                   point_chunk=self.point_chunk)   # [B, Gp, Qp]
        Ct = jax.block_until_ready(Ct)

        # Single device -> host transfer, then solve the assignment on host.
        C_host = np.asarray(jax.device_get(Ct))
        indices = []
        for b, g in enumerate(g_list):
            Cb = C_host[b, :g, :Q].T                               # [Q, g]
            i, j = linear_sum_assignment_bruteforce(Cb)
            indices.append((i, j))
        return indices, C_host, point_coords


# ----------------------------------------------------------------------------
# Host-side numpy reference for the kernel math and the point sampling.
# ----------------------------------------------------------------------------
def _point_sample_flat_np(masks_flat, coords, H, W):
    x = coords[:, 0] * W - 0.5
    y = coords[:, 1] * H - 0.5
    x0 = np.floor(x); x1 = x0 + 1.0
    y0 = np.floor(y); y1 = y0 + 1.0
    wx1 = x - x0; wx0 = 1.0 - wx1
    wy1 = y - y0; wy0 = 1.0 - wy1
    out = np.zeros(masks_flat.shape[:-1] + (coords.shape[0],), dtype=np.float64)
    for ix, iy, w in ((x0, y0, wx0 * wy0), (x1, y0, wx1 * wy0),
                      (x0, y1, wx0 * wy1), (x1, y1, wx1 * wy1)):
        valid = ((ix >= 0) & (ix < W) & (iy >= 0) & (iy < H)).astype(np.float64)
        idx = (np.clip(iy, 0, H - 1).astype(np.int64) * W
               + np.clip(ix, 0, W - 1).astype(np.int64))
        out += masks_flat[..., idx] * (w * valid)[None, None, :]
    return out


def _reference_cost(logits, labels, x, t, wc, wm, wd):
    logits = np.asarray(logits, np.float64)
    x = np.asarray(x, np.float64)
    t = np.asarray(t, np.float64)
    e = np.exp(logits - logits.max(-1, keepdims=True))
    prob = e / e.sum(-1, keepdims=True)
    cost_class = -prob[:, np.asarray(labels)]
    P = x.shape[1]
    pos = np.logaddexp(0.0, -x)        # softplus(-x)
    neg = np.logaddexp(0.0, x)         # softplus(x)
    cost_mask = (pos @ t.T + neg @ (1.0 - t).T) / P
    sig = 1.0 / (1.0 + np.exp(-x))
    numer = 2.0 * (sig @ t.T)
    denom = sig.sum(-1)[:, None] + t.sum(-1)[None, :]
    cost_dice = 1.0 - (numer + 1.0) / (denom + 1.0)
    return wm * cost_mask + wc * cost_class + wd * cost_dice


# ----------------------------------------------------------------------------
# Demo
# ----------------------------------------------------------------------------
if __name__ == "__main__":
    key = jax.random.PRNGKey(0)
    B, Q, K = 2, 16, 8           # batch, queries, num_classes(+no-object)
    T, H, W = 2, 16, 16          # frames, mask spatial
    num_points = 128             # T * num_points = 256 -> two 128-wide point chunks
    G_per_batch = [4, 3]

    k1, k2, k3, k4, kfwd = jax.random.split(key, 5)
    pred_logits = jax.random.normal(k1, (B, Q, K), dtype=jnp.float32)
    pred_masks = jax.random.normal(k2, (B, Q, T, H, W), dtype=jnp.float32)

    targets = []
    tkeys = jax.random.split(k3, B)
    lkeys = jax.random.split(k4, B)
    for b in range(B):
        G = G_per_batch[b]
        labels = jax.random.randint(lkeys[b], (G,), 0, K)
        masks = (jax.random.uniform(tkeys[b], (G, T, H, W)) > 0.5).astype(jnp.float32)
        targets.append({"labels": labels, "masks": masks})

    matcher = VideoTrackHungarianMatcher(cost_class=2.0, cost_mask=5.0, cost_dice=5.0,
                                         num_points=num_points, point_chunk=128)
    outputs = {"pred_logits": pred_logits, "pred_masks": pred_masks}
    indices, C_host, point_coords = matcher.forward(outputs, targets, kfwd)

    # ---- sanity: matching validity ----
    for b, (i, j) in enumerate(indices):
        assert len(i) == len(j) == G_per_batch[b]
        assert len(set(i.tolist())) == len(i)

    # ---- numerical check of the Pallas kernel against a numpy reference ----
    for b in range(B):
        G = G_per_batch[b]
        coords = np.asarray(point_coords[b], dtype=np.float64)
        pm = np.asarray(pred_masks[b], np.float64).reshape(Q, T, H * W)
        tm = np.asarray(targets[b]["masks"], np.float64).reshape(G, T, H * W)
        out_pts = _point_sample_flat_np(pm, coords, H, W).reshape(Q, T * num_points)
        tgt_pts = _point_sample_flat_np(tm, coords, H, W).reshape(G, T * num_points)
        ref = _reference_cost(np.asarray(pred_logits[b]),
                              np.asarray(targets[b]["labels"]),
                              out_pts, tgt_pts, 2.0, 5.0, 5.0)            # [Q, G]
        np.testing.assert_allclose(C_host[b, :G, :Q].T, ref, rtol=1e-1, atol=1e-1)

    print("KERNEL_OK")
</pallas_src>

<mosaic_0001>
module attributes {stable_mosaic.version = 11 : i64} {
  func.func @kernel(%arg0: i32, %arg1: i32, %arg2: memref<1x128x8xf32, #tpu.memory_space<vmem>>, %arg3: memref<1x16x8xbf16, #tpu.memory_space<vmem>>, %arg4: memref<1x128x128xbf16, #tpu.memory_space<vmem>>, %arg5: memref<1x16x128xbf16, #tpu.memory_space<vmem>>, %arg6: memref<1x16x128xf32, #tpu.memory_space<vmem>>, %arg7: memref<16x128xf32, #tpu.memory_space<vmem>>, %arg8: memref<16x128xf32, #tpu.memory_space<vmem>>, %arg9: memref<1x128xf32, #tpu.memory_space<vmem>>, %arg10: memref<1x128xf32, #tpu.memory_space<vmem>>, %arg11: memref<16x1xf32, #tpu.memory_space<vmem>>) attributes {dimension_semantics = [#tpu.dimension_semantics<parallel>, #tpu.dimension_semantics<arbitrary>], iteration_bounds = array<i64: 2, 2>, scalar_prefetch = 0 : i64, scratch_operands = 5 : i64, tpu.core_type = #tpu.core_type<tc>, window_params = [{transform_indices = @transform_0, window_bounds = array<i64: 1, 128, 8>}, {transform_indices = @transform_1, window_bounds = array<i64: 1, 16, 8>}, {transform_indices = @transform_2, window_bounds = array<i64: 1, 128, 128>}, {transform_indices = @transform_3, window_bounds = array<i64: 1, 16, 128>}, {transform_indices = @transform_4, window_bounds = array<i64: 1, 16, 128>}]} {
    %c0_i32 = arith.constant 0 : i32
    %0 = arith.cmpi eq, %arg1, %c0_i32 : i32
    %1 = arith.extui %0 : i1 to i32
    %c0_i32_0 = arith.constant 0 : i32
    %2 = arith.cmpi ne, %1, %c0_i32_0 : i32
    scf.if %2 {
      %cst_35 = arith.constant 0.000000e+00 : f32
      %51 = vector.broadcast %cst_35 : f32 to vector<16x128xf32>
      %c0_36 = arith.constant 0 : index
      %c0_37 = arith.constant 0 : index
      %52 = vector.load %arg7[%c0_36, %c0_37] : memref<16x128xf32, #tpu.memory_space<vmem>>, vector<16x128xf32>
      tpu.vector_store %arg7[%c0_36, %c0_37], %51 {strides = array<i32>} : memref<16x128xf32, #tpu.memory_space<vmem>>, vector<16x128xf32>,
      %cst_38 = arith.constant 0.000000e+00 : f32
      %53 = vector.broadcast %cst_38 : f32 to vector<16x128xf32>
      %c0_39 = arith.constant 0 : index
      %c0_40 = arith.constant 0 : index
      %54 = vector.load %arg8[%c0_39, %c0_40] : memref<16x128xf32, #tpu.memory_space<vmem>>, vector<16x128xf32>
      tpu.vector_store %arg8[%c0_39, %c0_40], %53 {strides = array<i32>} : memref<16x128xf32, #tpu.memory_space<vmem>>, vector<16x128xf32>,
      %cst_41 = arith.constant 0.000000e+00 : f32
      %55 = vector.broadcast %cst_41 : f32 to vector<1x128xf32>
      %c0_42 = arith.constant 0 : index
      %c0_43 = arith.constant 0 : index
      %56 = vector.load %arg9[%c0_42, %c0_43] : memref<1x128xf32, #tpu.memory_space<vmem>>, vector<1x128xf32>
      tpu.vector_store %arg9[%c0_42, %c0_43], %55 {strides = array<i32>} : memref<1x128xf32, #tpu.memory_space<vmem>>, vector<1x128xf32>,
      %cst_44 = arith.constant 0.000000e+00 : f32
      %57 = vector.broadcast %cst_44 : f32 to vector<1x128xf32>
      %c0_45 = arith.constant 0 : index
      %c0_46 = arith.constant 0 : index
      %58 = vector.load %arg10[%c0_45, %c0_46] : memref<1x128xf32, #tpu.memory_space<vmem>>, vector<1x128xf32>
      tpu.vector_store %arg10[%c0_45, %c0_46], %57 {strides = array<i32>} : memref<1x128xf32, #tpu.memory_space<vmem>>, vector<1x128xf32>,
      %cst_47 = arith.constant 0.000000e+00 : f32
      %59 = vector.broadcast %cst_47 : f32 to vector<16x1xf32>
      %c0_48 = arith.constant 0 : index
      %c0_49 = arith.constant 0 : index
      %60 = vector.load %arg11[%c0_48, %c0_49] : memref<16x1xf32, #tpu.memory_space<vmem>>, vector<16x1xf32>
      tpu.vector_store %arg11[%c0_48, %c0_49], %59 {strides = array<i32>} : memref<16x1xf32, #tpu.memory_space<vmem>>, vector<16x1xf32>,
    } else {
    }
    %c0 = arith.constant 0 : index
    %c0_1 = arith.constant 0 : index
    %c0_2 = arith.constant 0 : index
    %3 = vector.load %arg4[%c0, %c0_1, %c0_2] : memref<1x128x128xbf16, #tpu.memory_space<vmem>>, vector<1x128x128xbf16>
    %4 = vector.shape_cast %3 : vector<1x128x128xbf16> to vector<128x128xbf16>
    %c0_3 = arith.constant 0 : index
    %c0_4 = arith.constant 0 : index
    %c0_5 = arith.constant 0 : index
    %5 = vector.load %arg5[%c0_3, %c0_4, %c0_5] : memref<1x16x128xbf16, #tpu.memory_space<vmem>>, vector<1x16x128xbf16>
    %6 = vector.shape_cast %5 : vector<1x16x128xbf16> to vector<16x128xbf16>
    %7 = arith.extf %4 : vector<128x128xbf16> to vector<128x128xf32>
    %8 = math.absf %7 : vector<128x128xf32>
    %cst = arith.constant 0.000000e+00 : f32
    %9 = vector.broadcast %cst : f32 to vector<128x128xf32>
    %10 = arith.subf %9, %8 : vector<128x128xf32>
    %11 = math.exp %10 : vector<128x128xf32>
    %cst_6 = arith.constant 1.000000e+00 : f32
    %12 = vector.broadcast %cst_6 : f32 to vector<128x128xf32>
    %13 = arith.addf %12, %11 : vector<128x128xf32>
    %14 = tpu.reciprocal %13 {approx = true} : vector<128x128xf32> -> vector<128x128xf32>
    %cst_7 = arith.constant 0.000000e+00 : f32
    %15 = vector.broadcast %cst_7 : f32 to vector<128x128xf32>
    %16 = arith.cmpf oge, %7, %15 : vector<128x128xf32>
    %17 = arith.mulf %11, %14 : vector<128x128xf32>
    %18 = arith.select %16, %14, %17 : vector<128x128xi1>, vector<128x128xf32>
    %cst_8 = arith.constant 0.000000e+00 : f32
    %19 = vector.broadcast %cst_8 : f32 to vector<128x128xf32>
    %20 = arith.maximumf %7, %19 : vector<128x128xf32>
    %21 = math.log1p %11 : vector<128x128xf32>
    %22 = arith.addf %20, %21 : vector<128x128xf32>
    %c0_9 = arith.constant 0 : index
    %c0_10 = arith.constant 0 : index
    %23 = vector.load %arg7[%c0_9, %c0_10] : memref<16x128xf32, #tpu.memory_space<vmem>>, vector<16x128xf32>
    %cst_11 = arith.constant dense<0.000000e+00> : vector<16x128xf32>
    %24 = tpu.matmul %6, %4, %cst_11 {dimension_numbers = #tpu.dot_dimension_numbers<[1], [1], [0], [0], [0, 0, 1, 0], [], []>} : vector<16x128xbf16>, vector<128x128xbf16>, vector<16x128xf32> -> vector<16x128xf32>
    %25 = arith.addf %23, %24 : vector<16x128xf32>
    %c0_12 = arith.constant 0 : index
    %c0_13 = arith.constant 0 : index
    %26 = vector.load %arg7[%c0_12, %c0_13] : memref<16x128xf32, #tpu.memory_space<vmem>>, vector<16x128xf32>
    tpu.vector_store %arg7[%c0_12, %c0_13], %25 {strides = array<i32>} : memref<16x128xf32, #tpu.memory_space<vmem>>, vector<16x128xf32>,
    %c0_14 = arith.constant 0 : index
    %c0_15 = arith.constant 0 : index
    %27 = vector.load %arg8[%c0_14, %c0_15] : memref<16x128xf32, #tpu.memory_space<vmem>>, vector<16x128xf32>
    %28 = arith.truncf %18 : vector<128x128xf32> to vector<128x128xbf16>
    %cst_16 = arith.constant dense<0.000000e+00> : vector<16x128xf32>
    %29 = tpu.matmul %6, %28, %cst_16 {dimension_numbers = #tpu.dot_dimension_numbers<[1], [1], [0], [0], [0, 0, 1, 0], [], []>} : vector<16x128xbf16>, vector<128x128xbf16>, vector<16x128xf32> -> vector<16x128xf32>
    %30 = arith.addf %27, %29 : vector<16x128xf32>
    %c0_17 = arith.constant 0 : index
    %c0_18 = arith.constant 0 : index
    %31 = vector.load %arg8[%c0_17, %c0_18] : memref<16x128xf32, #tpu.memory_space<vmem>>, vector<16x128xf32>
    tpu.vector_store %arg8[%c0_17, %c0_18], %30 {strides = array<i32>} : memref<16x128xf32, #tpu.memory_space<vmem>>, vector<16x128xf32>,
    %c0_19 = arith.constant 0 : index
    %c0_20 = arith.constant 0 : index
    %32 = vector.load %arg9[%c0_19, %c0_20] : memref<1x128xf32, #tpu.memory_space<vmem>>, vector<1x128xf32>
    %cst_21 = arith.constant dense<0.000000e+00> : vector<128xf32>
    %33 = vector.multi_reduction <add>, %22, %cst_21 [1] : vector<128x128xf32> to vector<128xf32>
    %34 = vector.shape_cast %33 : vector<128xf32> to vector<1x128xf32>
    %35 = arith.addf %32, %34 : vector<1x128xf32>
    %c0_22 = arith.constant 0 : index
    %c0_23 = arith.constant 0 : index
    %36 = vector.load %arg9[%c0_22, %c0_23] : memref<1x128xf32, #tpu.memory_space<vmem>>, vector<1x128xf32>
    tpu.vector_store %arg9[%c0_22, %c0_23], %35 {strides = array<i32>} : memref<1x128xf32, #tpu.memory_space<vmem>>, vector<1x128xf32>,
    %c0_24 = arith.constant 0 : index
    %c0_25 = arith.constant 0 : index
    %37 = vector.load %arg10[%c0_24, %c0_25] : memref<1x128xf32, #tpu.memory_space<vmem>>, vector<1x128xf32>
    %cst_26 = arith.constant dense<0.000000e+00> : vector<128xf32>
    %38 = vector.multi_reduction <add>, %18, %cst_26 [1] : vector<128x128xf32> to vector<128xf32>
    %39 = vector.shape_cast %38 : vector<128xf32> to vector<1x128xf32>
    %40 = arith.addf %37, %39 : vector<1x128xf32>
    %c0_27 = arith.constant 0 : index
    %c0_28 = arith.constant 0 : index
    %41 = vector.load %arg10[%c0_27, %c0_28] : memref<1x128xf32, #tpu.memory_space<vmem>>, vector<1x128xf32>
    tpu.vector_store %arg10[%c0_27, %c0_28], %40 {strides = array<i32>} : memref<1x128xf32, #tpu.memory_space<vmem>>, vector<1x128xf32>,
    %c0_29 = arith.constant 0 : index
    %c0_30 = arith.constant 0 : index
    %42 = vector.load %arg11[%c0_29, %c0_30] : memref<16x1xf32, #tpu.memory_space<vmem>>, vector<16x1xf32>
    %43 = arith.extf %6 : vector<16x128xbf16> to vector<16x128xf32>
    %cst_31 = arith.constant dense<0.000000e+00> : vector<16xf32>
    %44 = vector.multi_reduction <add>, %43, %cst_31 [1] : vector<16x128xf32> to vector<16xf32>
    %45 = vector.shape_cast %44 : vector<16xf32> to vector<16x1xf32>
    %46 = arith.addf %42, %45 : vector<16x1xf32>
    %c0_32 = arith.constant 0 : index
    %c0_33 = arith.constant 0 : index
    %47 = vector.load %arg11[%c0_32, %c0_33] : memref<16x1xf32, #tpu.memory_space<vmem>>, vector<16x1xf32>
    tpu.vector_store %arg11[%c0_32, %c0_33], %46 {strides = array<i32>} : memref<16x1xf32, #tpu.memory_space<vmem>>, vector<16x1xf32>,
    %c1_i32 = arith.constant 1 : i32
    %48 = arith.cmpi eq, %arg1, %c1_i32 : i32
    %49 = arith.extui %48 : i1 to i32
    %c0_i32_34 = arith.constant 0 : i32
    %50 = arith.cmpi ne, %49, %c0_i32_34 : i32
    scf.if %50 {
      %c0_35 = arith.constant 0 : index
      %c0_36 = arith.constant 0 : index
      %c0_37 = arith.constant 0 : index
      %51 = vector.load %arg2[%c0_35, %c0_36, %c0_37] : memref<1x128x8xf32, #tpu.memory_space<vmem>>, vector<1x128x8xf32>
      %52 = vector.shape_cast %51 : vector<1x128x8xf32> to vector<128x8xf32>
      %cst_38 = arith.constant dense<0xFF800000> : vector<128xf32>
      %53 = vector.multi_reduction <maximumf>, %52, %cst_38 [1] : vector<128x8xf32> to vector<128xf32>
      %54 = vector.shape_cast %53 : vector<128xf32> to vector<128x1xf32>
      %55 = vector.broadcast %54 : vector<128x1xf32> to vector<128x8xf32>
      %56 = arith.subf %52, %55 : vector<128x8xf32>
      %57 = math.exp %56 : vector<128x8xf32>
      %cst_39 = arith.constant dense<0.000000e+00> : vector<128xf32>
      %58 = vector.multi_reduction <add>, %57, %cst_39 [1] : vector<128x8xf32> to vector<128xf32>
      %59 = vector.shape_cast %58 : vector<128xf32> to vector<128x1xf32>
      %60 = vector.broadcast %59 : vector<128x1xf32> to vector<128x8xf32>
      %61 = arith.divf %57, %60 : vector<128x8xf32>
      %c0_40 = arith.constant 0 : index
      %c0_41 = arith.constant 0 : index
      %c0_42 = arith.constant 0 : index
      %62 = vector.load %arg3[%c0_40, %c0_41, %c0_42] : memref<1x16x8xbf16, #tpu.memory_space<vmem>>, vector<1x16x8xbf16>
      %63 = vector.shape_cast %62 : vector<1x16x8xbf16> to vector<16x8xbf16>
      %64 = arith.extf %63 : vector<16x8xbf16> to vector<16x8xf32>
      %cst_43 = arith.constant dense<0.000000e+00> : vector<16x128xf32>
      %65 = tpu.matmul %64, %61, %cst_43 {dimension_numbers = #tpu.dot_dimension_numbers<[1], [1], [0], [0], [0, 0, 1, 0], [], []>} : vector<16x8xf32>, vector<128x8xf32>, vector<16x128xf32> -> vector<16x128xf32>
      %cst_44 = arith.constant 0.000000e+00 : f32
      %66 = vector.broadcast %cst_44 : f32 to vector<16x128xf32>
      %67 = arith.subf %66, %65 : vector<16x128xf32>
      %c0_45 = arith.constant 0 : index
      %c0_46 = arith.constant 0 : index
      %68 = vector.load %arg9[%c0_45, %c0_46] : memref<1x128xf32, #tpu.memory_space<vmem>>, vector<1x128xf32>
      %c0_47 = arith.constant 0 : index
      %c0_48 = arith.constant 0 : index
      %69 = vector.load %arg7[%c0_47, %c0_48] : memref<16x128xf32, #tpu.memory_space<vmem>>, vector<16x128xf32>
      %70 = vector.broadcast %68 : vector<1x128xf32> to vector<16x128xf32>
      %71 = arith.subf %70, %69 : vector<16x128xf32>
      %cst_49 = arith.constant 3.906250e-03 : f32
      %72 = vector.broadcast %cst_49 : f32 to vector<16x128xf32>
      %73 = arith.mulf %71, %72 : vector<16x128xf32>
      %c0_50 = arith.constant 0 : index
      %c0_51 = arith.constant 0 : index
      %74 = vector.load %arg10[%c0_50, %c0_51] : memref<1x128xf32, #tpu.memory_space<vmem>>, vector<1x128xf32>
      %c0_52 = arith.constant 0 : index
      %c0_53 = arith.constant 0 : index
      %75 = vector.load %arg11[%c0_52, %c0_53] : memref<16x1xf32, #tpu.memory_space<vmem>>, vector<16x1xf32>
      %76 = vector.broadcast %74 : vector<1x128xf32> to vector<16x128xf32>
      %77 = vector.broadcast %75 : vector<16x1xf32> to vector<16x128xf32>
      %78 = arith.addf %76, %77 : vector<16x128xf32>
      %c0_54 = arith.constant 0 : index
      %c0_55 = arith.constant 0 : index
      %79 = vector.load %arg8[%c0_54, %c0_55] : memref<16x128xf32, #tpu.memory_space<vmem>>, vector<16x128xf32>
      %cst_56 = arith.constant 2.000000e+00 : f32
      %80 = vector.broadcast %cst_56 : f32 to vector<16x128xf32>
      %81 = arith.mulf %80, %79 : vector<16x128xf32>
      %cst_57 = arith.constant 1.000000e+00 : f32
      %82 = vector.broadcast %cst_57 : f32 to vector<16x128xf32>
      %83 = arith.addf %81, %82 : vector<16x128xf32>
      %cst_58 = arith.constant 1.000000e+00 : f32
      %84 = vector.broadcast %cst_58 : f32 to vector<16x128xf32>
      %85 = arith.addf %78, %84 : vector<16x128xf32>
      %86 = arith.divf %83, %85 : vector<16x128xf32>
      %cst_59 = arith.constant 1.000000e+00 : f32
      %87 = vector.broadcast %cst_59 : f32 to vector<16x128xf32>
      %88 = arith.subf %87, %86 : vector<16x128xf32>
      %cst_60 = arith.constant 5.000000e+00 : f32
      %89 = vector.broadcast %cst_60 : f32 to vector<16x128xf32>
      %90 = arith.mulf %89, %73 : vector<16x128xf32>
      %cst_61 = arith.constant 2.000000e+00 : f32
      %91 = vector.broadcast %cst_61 : f32 to vector<16x128xf32>
      %92 = arith.mulf %91, %67 : vector<16x128xf32>
      %93 = arith.addf %90, %92 : vector<16x128xf32>
      %cst_62 = arith.constant 5.000000e+00 : f32
      %94 = vector.broadcast %cst_62 : f32 to vector<16x128xf32>
      %95 = arith.mulf %94, %88 : vector<16x128xf32>
      %96 = arith.addf %93, %95 : vector<16x128xf32>
      %c0_63 = arith.constant 0 : index
      %c0_64 = arith.constant 0 : index
      %c0_65 = arith.constant 0 : index
      %97 = vector.load %arg6[%c0_63, %c0_64, %c0_65] : memref<1x16x128xf32, #tpu.memory_space<vmem>>, vector<1x16x128xf32>
      %98 = vector.shape_cast %97 : vector<1x16x128xf32> to vector<16x128xf32>
      %99 = vector.shape_cast %96 : vector<16x128xf32> to vector<1x16x128xf32>
      tpu.vector_store %arg6[%c0_63, %c0_64, %c0_65], %99 {strides = array<i32>} : memref<1x16x128xf32, #tpu.memory_space<vmem>>, vector<1x16x128xf32>,
    } else {
    }
    return
  }
  func.func @transform_0(%arg0: i32, %arg1: i32) -> (i32, i32, i32) {
    %c0_i32 = arith.constant 0 : i32
    %c0_i32_0 = arith.constant 0 : i32
    %c0_i32_1 = arith.constant 0 : i32
    return %arg0, %c0_i32, %c0_i32_0 : i32, i32, i32
  }
  func.func @transform_1(%arg0: i32, %arg1: i32) -> (i32, i32, i32) {
    %c0_i32 = arith.constant 0 : i32
    %c0_i32_0 = arith.constant 0 : i32
    %c0_i32_1 = arith.constant 0 : i32
    return %arg0, %c0_i32, %c0_i32_0 : i32, i32, i32
  }
  func.func @transform_2(%arg0: i32, %arg1: i32) -> (i32, i32, i32) {
    %c0_i32 = arith.constant 0 : i32
    %c0_i32_0 = arith.constant 0 : i32
    return %arg0, %c0_i32, %arg1 : i32, i32, i32
  }
  func.func @transform_3(%arg0: i32, %arg1: i32) -> (i32, i32, i32) {
    %c0_i32 = arith.constant 0 : i32
    %c0_i32_0 = arith.constant 0 : i32
    return %arg0, %c0_i32, %arg1 : i32, i32, i32
  }
  func.func @transform_4(%arg0: i32, %arg1: i32) -> (i32, i32, i32) {
    %c0_i32 = arith.constant 0 : i32
    %c0_i32_0 = arith.constant 0 : i32
    %c0_i32_1 = arith.constant 0 : i32
    return %arg0, %c0_i32, %c0_i32_0 : i32, i32, i32
  }
}

</mosaic_0001>

<llo_original>
// kernel: _matcher_cost_forward.1
$region0: #{_matcher_cost_forward.1}
  #allocation0 [shape = 'u32[]', space=smem, size = 0x4, offset = 0x4, fixed_abs, tag = 'smem constant byte address 0x4 - core index']
  #allocation1 [shape = 'u32[144,128]{1,0:T(1,128)}', space=vmem, size = 0x12000, scoped, tag = 'internal scratch']
  #allocation2 [shape = 'f32[16,128]{1,0:T(8,128)}', space=vmem, size = 0x2000, scoped, tag = 'scratch operand']
  #allocation3 [shape = 'f32[16,128]{1,0:T(8,128)}', space=vmem, size = 0x2000, scoped, tag = 'scratch operand']
  #allocation4 [shape = 'f32[1,128]{1,0:T(1,128)}', space=vmem, size = 0x200, scoped, tag = 'scratch operand']
  #allocation5 [shape = 'f32[1,128]{1,0:T(1,128)}', space=vmem, size = 0x200, scoped, tag = 'scratch operand']
  #allocation6 [shape = 'f32[16,1]{1,0:T(8,128)}', space=vmem, size = 0x2000, scoped, tag = 'scratch operand']
  %s0 = inlined_call_operand.vmem [shape: f32[2,128,8], index: 0, kind: input, shape index: {}]
  %s1 = inlined_call_operand.vmem [shape: bf16[2,16,8], index: 1, kind: input, shape index: {}]
  %s2 = inlined_call_operand.vmem [shape: bf16[2,128,256], index: 2, kind: input, shape index: {}]
  %s3 = inlined_call_operand.vmem [shape: bf16[2,16,256], index: 3, kind: input, shape index: {}]
  %s4 = inlined_call_operand.hbm [shape: f32[2,16,128], index: 4, kind: output, shape index: {}]
  %s5 = sld [smem:[#allocation0]]
  $region139: #{_matcher_cost_forward.1} parent=0
    _
  %s7 = ssub.s32 1, %s5
  %s8 = scalar_select 0, %s7, %s5
  $region1: #{_matcher_cost_forward.1} parent=0
    #allocation7 [shape = 'u8[65536]{0}', space=vmem, size = 0x10000, scoped, tag = 'input window, operand 2']
    #allocation8 [shape = 'u8[8192]{0}', space=vmem, size = 0x2000, scoped, tag = 'input window, operand 3']
    #allocation9 [shape = 'u8[16384]{0}', space=vmem, size = 0x4000, scoped, tag = 'output window, operand 0']
    #allocation10 [shape = 's32[2]{0}', space=sflag, size = 0x8, scoped, tag = 'scoped memory for _matcher_cost_forward.1']
    %9 = vsyncpa [#allocation10], 0
    %s10 = scalar_lea.sflag [#allocation10], 1
    %11 = vsyncpa %s10, 0
    loop: start=0, step=1, limit=6
    $region2: #{_matcher_cost_forward.1} parent=1 // loop_pre_header
      _
    $region3: #{_matcher_cost_forward.1} parent=1 // loop_header
      %s13 = sphi 0, %s17
      %p14 = scmp.ge.s32.totalorder %s13, 6
      %s20 = sphi 0, %s32
      %s21 = sphi 0, %s28
      %s22 = sphi 0, %s20
      %s23 = sphi 0, %s21
      %s24 = sphi 0, %s22
      %s25 = sphi 0, %s23
      %s35 = sphi 0, %s37
      %s38 = sphi 0, %s35
      %s39 = sphi 0, %s38
      %s55 = sphi 0, %s39
      %s61 = sphi 0, %s63
      %s64 = sphi 0, %s61
      %s65 = sphi 0, %s64
      %s81 = sphi 0, %s65
      %s89 = sphi 0, %s91
      %s92 = sphi 0, %s89
      %s93 = sphi 0, %s92
      %s109 = sphi 0, %s93
      %s117 = sphi 0, %s119
      %s120 = sphi 0, %s117
      %s121 = sphi 0, %s120
      %s137 = sphi 0, %s121
      %s143 = sphi 0, %s145
      %s146 = sphi 0, %s143
      %s147 = sphi 0, %s146
      %s163 = sphi 0, %s147
    $region4: #{_matcher_cost_forward.1} parent=1 // loop_header_branch
      %16 = sbr.rel (%p14) target = $region8
    $region5: #{_matcher_cost_forward.1} parent=1 // loop_body
      %s18 = ssub.s32 %s13, 1
      %s19 = ssub.s32 %s13, 2
      %s26 = sadd.s32 1, %s21
      %p27 = scmp.ge.s32.totalorder %s26, 2
      %s28 = scalar_select %p27, 0, %s26
      %s29 = sadd.s32 1, %s20
      %s30 = scalar_select %p27, %s29, %s20
      %p31 = scmp.ge.s32.totalorder %s30, 2
      %s32 = scalar_select %p31, 0, %s30
      %s33 = ssub.s32 %s20, %s32
      %p34 = scmp.eq.s32.totalorder %s33, 0
      %s36 = sadd.s32 %s35, 1
      %s37 = scalar_select %p34, %s35, %s36
      %p40 = pneg %p34
      %p41 = scmp.eq.s32.totalorder %s13, 3
      %p42 = por %p40, %p41
      %p43 = scmp.ne.s32.totalorder %s35, %s38
      %p44 = scmp.eq.s32.totalorder %s13, 0
      %p45 = por %p43, %p44
      %p46 = scmp.ne.s32.totalorder %s35, %s38
      %p47 = scmp.eq.s32.totalorder %s18, 3
      %p48 = por %p46, %p47
      %p49 = scmp.ne.s32.totalorder %s38, %s39
      %p50 = scmp.eq.s32.totalorder %s18, 0
      %p51 = por %p49, %p50
      %p52 = scmp.ne.s32.totalorder %s38, %s39
      %p53 = scmp.eq.s32.totalorder %s19, 3
      %p54 = por %p52, %p53
      %p56 = scmp.ne.s32.totalorder %s39, %s55
      %p57 = scmp.eq.s32.totalorder %s19, 0
      %p58 = por %p56, %p57
      %s59 = ssub.s32 %s20, %s32
      %p60 = scmp.eq.s32.totalorder %s59, 0
      %s62 = sadd.s32 %s61, 1
      %s63 = scalar_select %p60, %s61, %s62
      %p66 = pneg %p60
      %p67 = scmp.eq.s32.totalorder %s13, 3
      %p68 = por %p66, %p67
      %p69 = scmp.ne.s32.totalorder %s61, %s64
      %p70 = scmp.eq.s32.totalorder %s13, 0
      %p71 = por %p69, %p70
      %p72 = scmp.ne.s32.totalorder %s61, %s64
      %p73 = scmp.eq.s32.totalorder %s18, 3
      %p74 = por %p72, %p73
      %p75 = scmp.ne.s32.totalorder %s64, %s65
      %p76 = scmp.eq.s32.totalorder %s18, 0
      %p77 = por %p75, %p76
      %p78 = scmp.ne.s32.totalorder %s64, %s65
      %p79 = scmp.eq.s32.totalorder %s19, 3
      %p80 = por %p78, %p79
      %p82 = scmp.ne.s32.totalorder %s65, %s81
      %p83 = scmp.eq.s32.totalorder %s19, 0
      %p84 = por %p82, %p83
      %s85 = ssub.s32 %s20, %s32
      %s86 = ssub.s32 %s21, %s28
      %s87 = sor.u32 %s85, %s86
      %p88 = scmp.eq.s32.totalorder %s87, 0
      %s90 = sadd.s32 %s89, 1
      %s91 = scalar_select %p88, %s89, %s90
      %p94 = pneg %p88
      %p95 = scmp.eq.s32.totalorder %s13, 3
      %p96 = por %p94, %p95
      %p97 = scmp.ne.s32.totalorder %s89, %s92
      %p98 = scmp.eq.s32.totalorder %s13, 0
      %p99 = por %p97, %p98
      %p100 = scmp.ne.s32.totalorder %s89, %s92
      %p101 = scmp.eq.s32.totalorder %s18, 3
      %p102 = por %p100, %p101
      %p103 = scmp.ne.s32.totalorder %s92, %s93
      %p104 = scmp.eq.s32.totalorder %s18, 0
      %p105 = por %p103, %p104
      %p106 = scmp.ne.s32.totalorder %s92, %s93
      %p107 = scmp.eq.s32.totalorder %s19, 3
      %p108 = por %p106, %p107
      %p110 = scmp.ne.s32.totalorder %s93, %s109
      %p111 = scmp.eq.s32.totalorder %s19, 0
      %p112 = por %p110, %p111
      %s113 = ssub.s32 %s20, %s32
      %s114 = ssub.s32 %s21, %s28
      %s115 = sor.u32 %s113, %s114
      %p116 = scmp.eq.s32.totalorder %s115, 0
      %s118 = sadd.s32 %s117, 1
      %s119 = scalar_select %p116, %s117, %s118
      %p122 = pneg %p116
      %p123 = scmp.eq.s32.totalorder %s13, 3
      %p124 = por %p122, %p123
      %p125 = scmp.ne.s32.totalorder %s117, %s120
      %p126 = scmp.eq.s32.totalorder %s13, 0
      %p127 = por %p125, %p126
      %p128 = scmp.ne.s32.totalorder %s117, %s120
      %p129 = scmp.eq.s32.totalorder %s18, 3
      %p130 = por %p128, %p129
      %p131 = scmp.ne.s32.totalorder %s120, %s121
      %p132 = scmp.eq.s32.totalorder %s18, 0
      %p133 = por %p131, %p132
      %p134 = scmp.ne.s32.totalorder %s120, %s121
      %p135 = scmp.eq.s32.totalorder %s19, 3
      %p136 = por %p134, %p135
      %p138 = scmp.ne.s32.totalorder %s121, %s137
      %p139 = scmp.eq.s32.totalorder %s19, 0
      %p140 = por %p138, %p139
      %s141 = ssub.s32 %s20, %s32
      %p142 = scmp.eq.s32.totalorder %s141, 0
      %s144 = sadd.s32 %s143, 1
      %s145 = scalar_select %p142, %s143, %s144
      %p148 = pneg %p142
      %p149 = scmp.eq.s32.totalorder %s13, 3
      %p150 = por %p148, %p149
      %p151 = scmp.ne.s32.totalorder %s143, %s146
      %p152 = scmp.eq.s32.totalorder %s13, 0
      %p153 = por %p151, %p152
      %p154 = scmp.ne.s32.totalorder %s143, %s146
      %p155 = scmp.eq.s32.totalorder %s18, 3
      %p156 = por %p154, %p155
      %p157 = scmp.ne.s32.totalorder %s146, %s147
      %p158 = scmp.eq.s32.totalorder %s18, 0
      %p159 = por %p157, %p158
      %p160 = scmp.ne.s32.totalorder %s146, %s147
      %p161 = scmp.eq.s32.totalorder %s19, 3
      %p162 = por %p160, %p161
      %p164 = scmp.ne.s32.totalorder %s147, %s163
      %p165 = scmp.eq.s32.totalorder %s19, 0
      %p166 = por %p164, %p165
      %p167 = scmp.le.s32.totalorder 1, %s13
      %p168 = scmp.lt.s32.totalorder %s13, 5
      %p169 = pnand %p167, %p168
      %p170 = pneg %p169
      // Predicated region
      $region9: #{_matcher_cost_forward.1} parent=5 // pred_check
        _
      $region10: #{_matcher_cost_forward.1} parent=5 // pred_check_branch
        %172 = sbr.rel (%p169) target = $region12
      $region11: #{_matcher_cost_forward.1} parent=5 // pred_region
        %s173 = ssub.s32 %s13, 1
      $region12: #{_matcher_cost_forward.1} parent=5 // pred_fallthru
        _
      %p174 = scmp.lt.s32.totalorder %s13, 4
      // Predicated region
      $region13: #{_matcher_cost_forward.1} parent=5 // pred_check
        %p175 = pneg %p174
      $region14: #{_matcher_cost_forward.1} parent=5 // pred_check_branch
        %177 = sbr.rel (%p175) target = $region16
      $region15: #{_matcher_cost_forward.1} parent=5 // pred_region
        // Predicated region
        $region17: #{_matcher_cost_forward.1} parent=15 // pred_check
          %p178 = pneg %p45
        $region18: #{_matcher_cost_forward.1} parent=15 // pred_check_branch
          %180 = sbr.rel (%p178) target = $region20
        $region19: #{_matcher_cost_forward.1} parent=15 // pred_region
          %p181 = scmp.lt.s32.totalorder %s20, 1
          %s182 = scalar_select %p181, %s20, 1
          %s183 = smul.addr %s182, 16
          %s184 = smul.addr %s183, 8
          %s185 = scalar_lea.vmem %s0, %s184
        $region20: #{_matcher_cost_forward.1} parent=15 // pred_fallthru
          _
        // Predicated region
        $region21: #{_matcher_cost_forward.1} parent=15 // pred_check
          %p186 = pneg %p71
        $region22: #{_matcher_cost_forward.1} parent=15 // pred_check_branch
          %188 = sbr.rel (%p186) target = $region24
        $region23: #{_matcher_cost_forward.1} parent=15 // pred_region
          %p189 = scmp.lt.s32.totalorder %s20, 1
          %s190 = scalar_select %p189, %s20, 1
          %s191 = smul.addr %s190, 2
          %s192 = smul.addr %s191, 4
          %s193 = scalar_lea.vmem %s1, %s192
        $region24: #{_matcher_cost_forward.1} parent=15 // pred_fallthru
          _
        // Predicated region
        $region25: #{_matcher_cost_forward.1} parent=15 // pred_check
          %p194 = pneg %p99
        $region26: #{_matcher_cost_forward.1} parent=15 // pred_check_branch
          %196 = sbr.rel (%p194) target = $region28
        $region27: #{_matcher_cost_forward.1} parent=15 // pred_region
          %s197 = sand.u32 %s89, 1
          %s198 = sand.u32 %s89, 1
          %s199 = smul.addr %s198, 64
          %s200 = scalar_lea.vmem [#allocation7], %s199
          %s201 = smul.addr %s20, 32
          %s202 = sadd.s32 %s21, %s201
          %s203 = smul.addr %s202, 4
          %s204 = scalar_lea.vmem %s2, %s203
          // Predicated region
          $region29: #{_matcher_cost_forward.1} parent=27 // pred_check
            _
          $region30: #{_matcher_cost_forward.1} parent=27 // pred_check_branch
            %206 = sbr.rel (0) target = $region32
          $region31: #{_matcher_cost_forward.1} parent=27 // pred_region
            // Predicated region
            $region33: #{_matcher_cost_forward.1} parent=31 // pred_check
              _
            $region34: #{_matcher_cost_forward.1} parent=31 // pred_check_branch
              %208 = sbr.rel target = $region36
            $region35: #{_matcher_cost_forward.1} parent=31 // pred_region
              // Predicated region
              $region48: #{_matcher_cost_forward.1} parent=35 // pred_check
                _
              $region49: #{_matcher_cost_forward.1} parent=35 // pred_check_branch
                %253 = sbr.rel (0) target = $region51
              $region50: #{_matcher_cost_forward.1} parent=35 // pred_region
                loop: start=0, step=1, limit=1
                $region52: #{_matcher_cost_forward.1} parent=50 // loop_pre_header
                  _
                $region53: #{_matcher_cost_forward.1} parent=50 // loop_header
                  %s255 = sphi 0, %s259
                  %p256 = scmp.ge.s32.totalorder %s255, 1
                  %s260 = sphi %s204, %s204
                  %s261 = sphi %s200, %s200
                $region54: #{_matcher_cost_forward.1} parent=50 // loop_header_branch
                  %258 = sbr.rel (%p256) target = $region58
                $region55: #{_matcher_cost_forward.1} parent=50 // loop_body
                  _
                $region56: #{_matcher_cost_forward.1} parent=50 // loop_footer
                  %s259 = sadd.s32 1, %s255
                $region57: #{_matcher_cost_forward.1} parent=50 // loop_footer_branch
                  %254 = sbr.rel target = $region53
                $region58: #{_matcher_cost_forward.1} parent=50 // loop_exit
                  _
                loop: start=0, step=1, limit=1
                $region59: #{_matcher_cost_forward.1} parent=50 // loop_pre_header
                  _
                $region60: #{_matcher_cost_forward.1} parent=50 // loop_header
                  %s264 = sphi 0, %s268
                  %p265 = scmp.ge.s32.totalorder %s264, 1
                  %s269 = sphi %s204, %s204
                  %s270 = sphi %s200, %s200
                $region61: #{_matcher_cost_forward.1} parent=50 // loop_header_branch
                  %267 = sbr.rel (%p265) target = $region65
                $region62: #{_matcher_cost_forward.1} parent=50 // loop_body
                  %v271 = vld [vmem:[%s269] sm:$0xf]
                  %272 = vst [vmem:[%s270] sm:$0xf] %v271
                  %v273 = vld [vmem:[%s269 + $0x8] sm:$0xf]
                  %274 = vst [vmem:[%s270 + $0x4] sm:$0xf] %v273
                  %v275 = vld [vmem:[%s269 + $0x10] sm:$0xf]
                  %276 = vst [vmem:[%s270 + $0x8] sm:$0xf] %v275
                  %v277 = vld [vmem:[%s269 + $0x18] sm:$0xf]
                  %278 = vst [vmem:[%s270 + $0xc] sm:$0xf] %v277
                  %v279 = vld [vmem:[%s269 + $0x20] sm:$0xf]
                  %280 = vst [vmem:[%s270 + $0x10] sm:$0xf] %v279
                  %v281 = vld [vmem:[%s269 + $0x28] sm:$0xf]
                  %282 = vst [vmem:[%s270 + $0x14] sm:$0xf] %v281
                  %v283 = vld [vmem:[%s269 + $0x30] sm:$0xf]
                  %284 = vst [vmem:[%s270 + $0x18] sm:$0xf] %v283
                  %v285 = vld [vmem:[%s269 + $0x38] sm:$0xf]
                  %286 = vst [vmem:[%s270 + $0x1c] sm:$0xf] %v285
                  %v287 = vld [vmem:[%s269 + $0x40] sm:$0xf]
                  %288 = vst [vmem:[%s270 + $0x20] sm:$0xf] %v287
                  %v289 = vld [vmem:[%s269 + $0x48] sm:$0xf]
                  %290 = vst [vmem:[%s270 + $0x24] sm:$0xf] %v289
                  %v291 = vld [vmem:[%s269 + $0x50] sm:$0xf]
                  %292 = vst [vmem:[%s270 + $0x28] sm:$0xf] %v291
                  %v293 = vld [vmem:[%s269 + $0x58] sm:$0xf]
                  %294 = vst [vmem:[%s270 + $0x2c] sm:$0xf] %v293
                  %v295 = vld [vmem:[%s269 + $0x60] sm:$0xf]
                  %296 = vst [vmem:[%s270 + $0x30] sm:$0xf] %v295
                  %v297 = vld [vmem:[%s269 + $0x68] sm:$0xf]
                  %298 = vst [vmem:[%s270 + $0x34] sm:$0xf] %v297
                  %v299 = vld [vmem:[%s269 + $0x70] sm:$0xf]
                  %300 = vst [vmem:[%s270 + $0x38] sm:$0xf] %v299
                  %v301 = vld [vmem:[%s269 + $0x78] sm:$0xf]
                  %302 = vst [vmem:[%s270 + $0x3c] sm:$0xf] %v301
                $region63: #{_matcher_cost_forward.1} parent=50 // loop_footer
                  %s268 = sadd.s32 1, %s264
                $region64: #{_matcher_cost_forward.1} parent=50 // loop_footer_branch
                  %263 = sbr.rel target = $region60
                $region65: #{_matcher_cost_forward.1} parent=50 // loop_exit
                  _
              $region51: #{_matcher_cost_forward.1} parent=35 // pred_fallthru
                _
            $region36: #{_matcher_cost_forward.1} parent=31 // pred_fallthru
              _
            // Predicated region
            $region37: #{_matcher_cost_forward.1} parent=31 // pred_check
              _
            $region38: #{_matcher_cost_forward.1} parent=31 // pred_check_branch
              %210 = sbr.rel (0) target = $region40
            $region39: #{_matcher_cost_forward.1} parent=31 // pred_region
              loop: start=0, step=1, limit=1
              $region41: #{_matcher_cost_forward.1} parent=39 // loop_pre_header
                _
              $region42: #{_matcher_cost_forward.1} parent=39 // loop_header
                %s213 = sphi 0, %s217
                %p214 = scmp.ge.s32.totalorder %s213, 1
                %s218 = sphi %s204, %s204
                %s219 = sphi %s200, %s200
              $region43: #{_matcher_cost_forward.1} parent=39 // loop_header_branch
                %216 = sbr.rel (%p214) target = $region47
              $region44: #{_matcher_cost_forward.1} parent=39 // loop_body
                %v220 = vld [vmem:[%s218] sm:$0xf]
                %221 = vst [vmem:[%s219] sm:$0xf] %v220
                %v222 = vld [vmem:[%s218 + $0x8] sm:$0xf]
                %223 = vst [vmem:[%s219 + $0x4] sm:$0xf] %v222
                %v224 = vld [vmem:[%s218 + $0x10] sm:$0xf]
                %225 = vst [vmem:[%s219 + $0x8] sm:$0xf] %v224
                %v226 = vld [vmem:[%s218 + $0x18] sm:$0xf]
                %227 = vst [vmem:[%s219 + $0xc] sm:$0xf] %v226
                %v228 = vld [vmem:[%s218 + $0x20] sm:$0xf]
                %229 = vst [vmem:[%s219 + $0x10] sm:$0xf] %v228
                %v230 = vld [vmem:[%s218 + $0x28] sm:$0xf]
                %231 = vst [vmem:[%s219 + $0x14] sm:$0xf] %v230
                %v232 = vld [vmem:[%s218 + $0x30] sm:$0xf]
                %233 = vst [vmem:[%s219 + $0x18] sm:$0xf] %v232
                %v234 = vld [vmem:[%s218 + $0x38] sm:$0xf]
                %235 = vst [vmem:[%s219 + $0x1c] sm:$0xf] %v234
                %v236 = vld [vmem:[%s218 + $0x40] sm:$0xf]
                %237 = vst [vmem:[%s219 + $0x20] sm:$0xf] %v236
                %v238 = vld [vmem:[%s218 + $0x48] sm:$0xf]
                %239 = vst [vmem:[%s219 + $0x24] sm:$0xf] %v238
                %v240 = vld [vmem:[%s218 + $0x50] sm:$0xf]
                %241 = vst [vmem:[%s219 + $0x28] sm:$0xf] %v240
                %v242 = vld [vmem:[%s218 + $0x58] sm:$0xf]
                %243 = vst [vmem:[%s219 + $0x2c] sm:$0xf] %v242
                %v244 = vld [vmem:[%s218 + $0x60] sm:$0xf]
                %245 = vst [vmem:[%s219 + $0x30] sm:$0xf] %v244
                %v246 = vld [vmem:[%s218 + $0x68] sm:$0xf]
                %247 = vst [vmem:[%s219 + $0x34] sm:$0xf] %v246
                %v248 = vld [vmem:[%s218 + $0x70] sm:$0xf]
                %249 = vst [vmem:[%s219 + $0x38] sm:$0xf] %v248
                %v250 = vld [vmem:[%s218 + $0x78] sm:$0xf]
                %251 = vst [vmem:[%s219 + $0x3c] sm:$0xf] %v250
              $region45: #{_matcher_cost_forward.1} parent=39 // loop_footer
                %s217 = sadd.s32 1, %s213
              $region46: #{_matcher_cost_forward.1} parent=39 // loop_footer_branch
                %212 = sbr.rel target = $region42
              $region47: #{_matcher_cost_forward.1} parent=39 // loop_exit
                _
            $region40: #{_matcher_cost_forward.1} parent=31 // pred_fallthru
              _
          $region32: #{_matcher_cost_forward.1} parent=27 // pred_fallthru
            _
          %303 = vnop
        $region28: #{_matcher_cost_forward.1} parent=15 // pred_fallthru
          _
        // Predicated region
        $region66: #{_matcher_cost_forward.1} parent=15 // pred_check
          %p304 = pneg %p127
        $region67: #{_matcher_cost_forward.1} parent=15 // pred_check_branch
          %306 = sbr.rel (%p304) target = $region69
        $region68: #{_matcher_cost_forward.1} parent=15 // pred_region
          %s307 = sand.u32 %s117, 1
          %s308 = sand.u32 %s117, 1
          %s309 = smul.addr %s308, 8
          %s310 = scalar_lea.vmem [#allocation8], %s309
          %s311 = smul.addr %s20, 4
          %s312 = sadd.s32 %s21, %s311
          %s313 = smul.addr %s312, 4
          %s314 = scalar_lea.vmem %s3, %s313
          // Predicated region
          $region70: #{_matcher_cost_forward.1} parent=68 // pred_check
            _
          $region71: #{_matcher_cost_forward.1} parent=68 // pred_check_branch
            %316 = sbr.rel (0) target = $region73
          $region72: #{_matcher_cost_forward.1} parent=68 // pred_region
            // Predicated region
            $region74: #{_matcher_cost_forward.1} parent=72 // pred_check
              _
            $region75: #{_matcher_cost_forward.1} parent=72 // pred_check_branch
              %318 = sbr.rel target = $region77
            $region76: #{_matcher_cost_forward.1} parent=72 // pred_region
              // Predicated region
              $region89: #{_matcher_cost_forward.1} parent=76 // pred_check
                _
              $region90: #{_matcher_cost_forward.1} parent=76 // pred_check_branch
                %335 = sbr.rel (0) target = $region92
              $region91: #{_matcher_cost_forward.1} parent=76 // pred_region
                loop: start=0, step=1, limit=1
                $region93: #{_matcher_cost_forward.1} parent=91 // loop_pre_header
                  _
                $region94: #{_matcher_cost_forward.1} parent=91 // loop_header
                  %s337 = sphi 0, %s341
                  %p338 = scmp.ge.s32.totalorder %s337, 1
                  %s342 = sphi %s314, %s314
                  %s343 = sphi %s310, %s310
                $region95: #{_matcher_cost_forward.1} parent=91 // loop_header_branch
                  %340 = sbr.rel (%p338) target = $region99
                $region96: #{_matcher_cost_forward.1} parent=91 // loop_body
                  _
                $region97: #{_matcher_cost_forward.1} parent=91 // loop_footer
                  %s341 = sadd.s32 1, %s337
                $region98: #{_matcher_cost_forward.1} parent=91 // loop_footer_branch
                  %336 = sbr.rel target = $region94
                $region99: #{_matcher_cost_forward.1} parent=91 // loop_exit
                  _
                loop: start=0, step=1, limit=1
                $region100: #{_matcher_cost_forward.1} parent=91 // loop_pre_header
                  _
                $region101: #{_matcher_cost_forward.1} parent=91 // loop_header
                  %s346 = sphi 0, %s350
                  %p347 = scmp.ge.s32.totalorder %s346, 1
                  %s351 = sphi %s314, %s314
                  %s352 = sphi %s310, %s310
                $region102: #{_matcher_cost_forward.1} parent=91 // loop_header_branch
                  %349 = sbr.rel (%p347) target = $region106
                $region103: #{_matcher_cost_forward.1} parent=91 // loop_body
                  %v353 = vld [vmem:[%s351] sm:$0xf]
                  %354 = vst [vmem:[%s352] sm:$0xf] %v353
                  %v355 = vld [vmem:[%s351 + $0x8] sm:$0xf]
                  %356 = vst [vmem:[%s352 + $0x4] sm:$0xf] %v355
                $region104: #{_matcher_cost_forward.1} parent=91 // loop_footer
                  %s350 = sadd.s32 1, %s346
                $region105: #{_matcher_cost_forward.1} parent=91 // loop_footer_branch
                  %345 = sbr.rel target = $region101
                $region106: #{_matcher_cost_forward.1} parent=91 // loop_exit
                  _
              $region92: #{_matcher_cost_forward.1} parent=76 // pred_fallthru
                _
            $region77: #{_matcher_cost_forward.1} parent=72 // pred_fallthru
              _
            // Predicated region
            $region78: #{_matcher_cost_forward.1} parent=72 // pred_check
              _
            $region79: #{_matcher_cost_forward.1} parent=72 // pred_check_branch
              %320 = sbr.rel (0) target = $region81
            $region80: #{_matcher_cost_forward.1} parent=72 // pred_region
              loop: start=0, step=1, limit=1
              $region82: #{_matcher_cost_forward.1} parent=80 // loop_pre_header
                _
              $region83: #{_matcher_cost_forward.1} parent=80 // loop_header
                %s323 = sphi 0, %s327
                %p324 = scmp.ge.s32.totalorder %s323, 1
                %s328 = sphi %s314, %s314
                %s329 = sphi %s310, %s310
              $region84: #{_matcher_cost_forward.1} parent=80 // loop_header_branch
                %326 = sbr.rel (%p324) target = $region88
              $region85: #{_matcher_cost_forward.1} parent=80 // loop_body
                %v330 = vld [vmem:[%s328] sm:$0xf]
                %331 = vst [vmem:[%s329] sm:$0xf] %v330
                %v332 = vld [vmem:[%s328 + $0x8] sm:$0xf]
                %333 = vst [vmem:[%s329 + $0x4] sm:$0xf] %v332
              $region86: #{_matcher_cost_forward.1} parent=80 // loop_footer
                %s327 = sadd.s32 1, %s323
              $region87: #{_matcher_cost_forward.1} parent=80 // loop_footer_branch
                %322 = sbr.rel target = $region83
              $region88: #{_matcher_cost_forward.1} parent=80 // loop_exit
                _
            $region81: #{_matcher_cost_forward.1} parent=72 // pred_fallthru
              _
          $region73: #{_matcher_cost_forward.1} parent=68 // pred_fallthru
            _
          %357 = vnop
        $region69: #{_matcher_cost_forward.1} parent=15 // pred_fallthru
          _
      $region16: #{_matcher_cost_forward.1} parent=5 // pred_fallthru
        _
      %p358 = scmp.le.s32.totalorder 1, %s13
      %p359 = scmp.lt.s32.totalorder %s13, 5
      %p360 = pnand %p358, %p359
      %p361 = pneg %p360
      // Predicated region
      $region107: #{_matcher_cost_forward.1} parent=5 // pred_check
        _
      $region108: #{_matcher_cost_forward.1} parent=5 // pred_check_branch
        %363 = sbr.rel (%p360) target = $region110
      $region109: #{_matcher_cost_forward.1} parent=5 // pred_region
        %s364 = ssub.s32 %s13, 1
        %s365 = sand.u32 %s92, 1
        %s366 = sand.u32 %s92, 1
        %s367 = smul.addr %s366, 64
        %s368 = scalar_lea.vmem [#allocation7], %s367
        // Predicated region
        $region111: #{_matcher_cost_forward.1} parent=109 // pred_check
          %p369 = pneg %p105
        $region112: #{_matcher_cost_forward.1} parent=109 // pred_check_branch
          %371 = sbr.rel (%p369) target = $region114
        $region113: #{_matcher_cost_forward.1} parent=109 // pred_region
          _
        $region114: #{_matcher_cost_forward.1} parent=109 // pred_fallthru
          _
        %s372 = sand.u32 %s120, 1
        %s373 = sand.u32 %s120, 1
        %s374 = smul.addr %s373, 8
        %s375 = scalar_lea.vmem [#allocation8], %s374
        // Predicated region
        $region115: #{_matcher_cost_forward.1} parent=109 // pred_check
          %p376 = pneg %p133
        $region116: #{_matcher_cost_forward.1} parent=109 // pred_check_branch
          %378 = sbr.rel (%p376) target = $region118
        $region117: #{_matcher_cost_forward.1} parent=109 // pred_region
          _
        $region118: #{_matcher_cost_forward.1} parent=109 // pred_fallthru
          _
        %p379 = scmp.lt.s32.totalorder %s22, 1
        %s380 = scalar_select %p379, %s22, 1
        %s381 = smul.addr %s380, 16
        %s382 = smul.addr %s381, 8
        %s383 = scalar_lea.vmem %s0, %s382
        %p384 = pneg %p51
        %p385 = pneg %p48
        %p386 = scmp.lt.s32.totalorder %s22, 1
        %s387 = scalar_select %p386, %s22, 1
        %s388 = smul.addr %s387, 2
        %s389 = smul.addr %s388, 4
        %s390 = scalar_lea.vmem %s1, %s389
        %p391 = pneg %p77
        %p392 = pneg %p74
        %s393 = sand.u32 %s92, 1
        %s394 = sand.u32 %s92, 1
        %s395 = smul.addr %s394, 64
        %s396 = scalar_lea.vmem [#allocation7], %s395
        %p397 = pneg %p105
        %p398 = pneg %p102
        %s399 = sand.u32 %s120, 1
        %s400 = sand.u32 %s120, 1
        %s401 = smul.addr %s400, 8
        %s402 = scalar_lea.vmem [#allocation8], %s401
        %p403 = pneg %p133
        %p404 = pneg %p130
        %p405 = pneg %p159
        %p406 = pneg %p156
        %s407 = sand.u32 %s146, 1
        %s408 = scalar_lea.sflag [#allocation10], %s407
        %s409 = sand.u32 %s146, 1
        %s410 = smul.addr %s409, 16
        %s411 = scalar_lea.vmem [#allocation9], %s410
        %p412 = scmp.lt.s32.totalorder %s22, 1
        %s413 = scalar_select %p412, %s22, 1
        %s414 = smul.addr %s413, 16
        %s415 = smul.addr %s414, 8
        %s416 = scalar_lea.vmem %s0, %s415
        %p417 = scmp.lt.s32.totalorder %s22, 1
        %s418 = scalar_select %p417, %s22, 1
        %s419 = smul.addr %s418, 2
        %s420 = smul.addr %s419, 4
        %s421 = scalar_lea.vmem %s1, %s420
        %p423 = scmp.eq.s32.totalorder %s23, 0
        // Predicated region
        $region119: #{_matcher_cost_forward.1} parent=109 // pred_check
          %p424 = pneg %p423
        $region120: #{_matcher_cost_forward.1} parent=109 // pred_check_branch
          %426 = sbr.rel (%p424) target = $region122
        $region121: #{_matcher_cost_forward.1} parent=109 // pred_region
          %427 = vst [vmem:[#allocation2] sm:$0xff] 0.0
          %428 = vst [vmem:[#allocation2 + $0x8] sm:$0xff] 0.0
          %429 = vst [vmem:[#allocation3] sm:$0xff] 0.0
          %430 = vst [vmem:[#allocation3 + $0x8] sm:$0xff] 0.0
          %431 = vst [vmem:[#allocation4] sm:$0x1] 0.0
          %432 = vst [vmem:[#allocation5] sm:$0x1] 0.0
          %vm433 = vcmask 7168
          %434 = vst.msk [vmem:[#allocation6] sm:$0xff] %vm433, 0.0
          %435 = vst.msk [vmem:[#allocation6 + $0x8] sm:$0xff] %vm433, 0.0
        $region122: #{_matcher_cost_forward.1} parent=109 // pred_fallthru
          _
        %v436 = vld [vmem:[%s368] sm:$0xf]
        %v437 = vld [vmem:[%s368 + $0x4] sm:$0xf]
        %v438 = vld [vmem:[%s368 + $0x8] sm:$0xf]
        %v439 = vld [vmem:[%s368 + $0xc] sm:$0xf]
        %v440 = vld [vmem:[%s368 + $0x10] sm:$0xf]
        %v441 = vld [vmem:[%s368 + $0x14] sm:$0xf]
        %v442 = vld [vmem:[%s368 + $0x18] sm:$0xf]
        %v443 = vld [vmem:[%s368 + $0x1c] sm:$0xf]
        %v444 = vld [vmem:[%s368 + $0x20] sm:$0xf]
        %v445 = vld [vmem:[%s368 + $0x24] sm:$0xf]
        %v446 = vld [vmem:[%s368 + $0x28] sm:$0xf]
        %v447 = vld [vmem:[%s368 + $0x2c] sm:$0xf]
        %v448 = vld [vmem:[%s368 + $0x30] sm:$0xf]
        %v449 = vld [vmem:[%s368 + $0x34] sm:$0xf]
        %v450 = vld [vmem:[%s368 + $0x38] sm:$0xf]
        %v451 = vld [vmem:[%s368 + $0x3c] sm:$0xf]
        %v452 = vld [vmem:[%s375] sm:$0xf]
        %v453 = vld [vmem:[%s375 + $0x4] sm:$0xf]
        %v454 = vunpack.c.l.bf16 %v436
        %v455 = vunpack.c.l.bf16 %v437
        %v456 = vunpack.c.l.bf16 %v438
        %v457 = vunpack.c.l.bf16 %v439
        %v458 = vunpack.c.l.bf16 %v440
        %v459 = vunpack.c.l.bf16 %v441
        %v460 = vunpack.c.l.bf16 %v442
        %v461 = vunpack.c.l.bf16 %v443
        %v462 = vunpack.c.l.bf16 %v444
        %v463 = vunpack.c.l.bf16 %v445
        %v464 = vunpack.c.l.bf16 %v446
        %v465 = vunpack.c.l.bf16 %v447
        %v466 = vunpack.c.l.bf16 %v448
        %v467 = vunpack.c.l.bf16 %v449
        %v468 = vunpack.c.l.bf16 %v450
        %v469 = vunpack.c.l.bf16 %v451
        %v470 = vand.u32 2147483647, %v454
        %v471 = vand.u32 2147483647, %v455
        %v472 = vand.u32 2147483647, %v456
        %v473 = vand.u32 2147483647, %v457
        %v474 = vand.u32 2147483647, %v458
        %v475 = vand.u32 2147483647, %v459
        %v476 = vand.u32 2147483647, %v460
        %v477 = vand.u32 2147483647, %v461
        %v478 = vand.u32 2147483647, %v462
        %v479 = vand.u32 2147483647, %v463
        %v480 = vand.u32 2147483647, %v464
        %v481 = vand.u32 2147483647, %v465
        %v482 = vand.u32 2147483647, %v466
        %v483 = vand.u32 2147483647, %v467
        %v484 = vand.u32 2147483647, %v468
        %v485 = vand.u32 2147483647, %v469
        %v486 = vsub.f32 0.0, %v470
        %v487 = vsub.f32 0.0, %v471
        %v488 = vsub.f32 0.0, %v472
        %v489 = vsub.f32 0.0, %v473
        %v490 = vsub.f32 0.0, %v474
        %v491 = vsub.f32 0.0, %v475
        %v492 = vsub.f32 0.0, %v476
        %v493 = vsub.f32 0.0, %v477
        %v494 = vsub.f32 0.0, %v478
        %v495 = vsub.f32 0.0, %v479
        %v496 = vsub.f32 0.0, %v480
        %v497 = vsub.f32 0.0, %v481
        %v498 = vsub.f32 0.0, %v482
        %v499 = vsub.f32 0.0, %v483
        %v500 = vsub.f32 0.0, %v484
        %v501 = vsub.f32 0.0, %v485
        %v502 = vmul.f32 %v486, 1.442695
        %v503 = vpow.pop %v502
        %v504 = vmul.f32 %v487, 1.442695
        %v505 = vpow.pop %v504
        %v506 = vmul.f32 %v488, 1.442695
        %v507 = vpow.pop %v506
        %v508 = vmul.f32 %v489, 1.442695
        %v509 = vpow.pop %v508
        %v510 = vmul.f32 %v490, 1.442695
        %v511 = vpow.pop %v510
        %v512 = vmul.f32 %v491, 1.442695
        %v513 = vpow.pop %v512
        %v514 = vmul.f32 %v492, 1.442695
        %v515 = vpow.pop %v514
        %v516 = vmul.f32 %v493, 1.442695
        %v517 = vpow.pop %v516
        %v518 = vmul.f32 %v494, 1.442695
        %v519 = vpow.pop %v518
        %v520 = vmul.f32 %v495, 1.442695
        %v521 = vpow.pop %v520
        %v522 = vmul.f32 %v496, 1.442695
        %v523 = vpow.pop %v522
        %v524 = vmul.f32 %v497, 1.442695
        %v525 = vpow.pop %v524
        %v526 = vmul.f32 %v498, 1.442695
        %v527 = vpow.pop %v526
        %v528 = vmul.f32 %v499, 1.442695
        %v529 = vpow.pop %v528
        %v530 = vmul.f32 %v500, 1.442695
        %v531 = vpow.pop %v530
        %v532 = vmul.f32 %v501, 1.442695
        %v533 = vpow.pop %v532
        %v534 = vadd.f32 %v503, 1.0
        %v535 = vadd.f32 %v505, 1.0
        %v536 = vadd.f32 %v507, 1.0
        %v537 = vadd.f32 %v509, 1.0
        %v538 = vadd.f32 %v511, 1.0
        %v539 = vadd.f32 %v513, 1.0
        %v540 = vadd.f32 %v515, 1.0
        %v541 = vadd.f32 %v517, 1.0
        %v542 = vadd.f32 %v519, 1.0
        %v543 = vadd.f32 %v521, 1.0
        %v544 = vadd.f32 %v523, 1.0
        %v545 = vadd.f32 %v525, 1.0
        %v546 = vadd.f32 %v527, 1.0
        %v547 = vadd.f32 %v529, 1.0
        %v548 = vadd.f32 %v531, 1.0
        %v549 = vadd.f32 %v533, 1.0
        %v550 = vrcp.pop %v534
        %v551 = vrcp.pop %v535
        %v552 = vrcp.pop %v536
        %v553 = vrcp.pop %v537
        %v554 = vrcp.pop %v538
        %v555 = vrcp.pop %v539
        %v556 = vrcp.pop %v540
        %v557 = vrcp.pop %v541
        %v558 = vrcp.pop %v542
        %v559 = vrcp.pop %v543
        %v560 = vrcp.pop %v544
        %v561 = vrcp.pop %v545
        %v562 = vrcp.pop %v546
        %v563 = vrcp.pop %v547
        %v564 = vrcp.pop %v548
        %v565 = vrcp.pop %v549
        %vm566 = vcmp.ge.f32.partialorder %v454, 0.0
        %vm567 = vcmp.ge.f32.partialorder %v455, 0.0
        %vm568 = vcmp.ge.f32.partialorder %v456, 0.0
        %vm569 = vcmp.ge.f32.partialorder %v457, 0.0
        %vm570 = vcmp.ge.f32.partialorder %v458, 0.0
        %vm571 = vcmp.ge.f32.partialorder %v459, 0.0
        %vm572 = vcmp.ge.f32.partialorder %v460, 0.0
        %vm573 = vcmp.ge.f32.partialorder %v461, 0.0
        %vm574 = vcmp.ge.f32.partialorder %v462, 0.0
        %vm575 = vcmp.ge.f32.partialorder %v463, 0.0
        %vm576 = vcmp.ge.f32.partialorder %v464, 0.0
        %vm577 = vcmp.ge.f32.partialorder %v465, 0.0
        %vm578 = vcmp.ge.f32.partialorder %v466, 0.0
        %vm579 = vcmp.ge.f32.partialorder %v467, 0.0
        %vm580 = vcmp.ge.f32.partialorder %v468, 0.0
        %vm581 = vcmp.ge.f32.partialorder %v469, 0.0
        %v582 = vmul.f32 %v503, %v550
        %v583 = vmul.f32 %v505, %v551
        %v584 = vmul.f32 %v507, %v552
        %v585 = vmul.f32 %v509, %v553
        %v586 = vmul.f32 %v511, %v554
        %v587 = vmul.f32 %v513, %v555
        %v588 = vmul.f32 %v515, %v556
        %v589 = vmul.f32 %v517, %v557
        %v590 = vmul.f32 %v519, %v558
        %v591 = vmul.f32 %v521, %v559
        %v592 = vmul.f32 %v523, %v560
        %v593 = vmul.f32 %v525, %v561
        %v594 = vmul.f32 %v527, %v562
        %v595 = vmul.f32 %v529, %v563
        %v596 = vmul.f32 %v531, %v564
        %v597 = vmul.f32 %v533, %v565
        %v598 = vsel %vm566, %v550, %v582
        %v599 = vsel %vm567, %v551, %v583
        %v600 = vsel %vm568, %v552, %v584
        %v601 = vsel %vm569, %v553, %v585
        %v602 = vsel %vm570, %v554, %v586
        %v603 = vsel %vm571, %v555, %v587
        %v604 = vsel %vm572, %v556, %v588
        %v605 = vsel %vm573, %v557, %v589
        %v606 = vsel %vm574, %v558, %v590
        %v607 = vsel %vm575, %v559, %v591
        %v608 = vsel %vm576, %v560, %v592
        %v609 = vsel %vm577, %v561, %v593
        %v610 = vsel %vm578, %v562, %v594
        %v611 = vsel %vm579, %v563, %v595
        %v612 = vsel %vm580, %v564, %v596
        %v613 = vsel %vm581, %v565, %v597
        %v614 = vmax.f32 %v454, 0.0
        %v615 = vmax.f32 %v455, 0.0
        %v616 = vmax.f32 %v456, 0.0
        %v617 = vmax.f32 %v457, 0.0
        %v618 = vmax.f32 %v458, 0.0
        %v619 = vmax.f32 %v459, 0.0
        %v620 = vmax.f32 %v460, 0.0
        %v621 = vmax.f32 %v461, 0.0
        %v622 = vmax.f32 %v462, 0.0
        %v623 = vmax.f32 %v463, 0.0
        %v624 = vmax.f32 %v464, 0.0
        %v625 = vmax.f32 %v465, 0.0
        %v626 = vmax.f32 %v466, 0.0
        %v627 = vmax.f32 %v467, 0.0
        %v628 = vmax.f32 %v468, 0.0
        %v629 = vmax.f32 %v469, 0.0
        %v630 = vadd.f32 %v503, 1.0
        %v631 = vlog2.pop %v630
        %v632 = vmul.f32 %v631, 0.6931472
        %v633 = vmul.f32 -0.5, %v503
        %v634 = vadd.f32 %v633, 1.0
        %v635 = vmul.f32 %v634, %v503
        %v636 = vand.u32 2147483647, %v503
        %vm637 = vcmp.lt.f32.partialorder %v636, 0.0004427343
        %v638 = vsel %vm637, %v635, %v632
        %v639 = vadd.f32 %v505, 1.0
        %v640 = vlog2.pop %v639
        %v641 = vmul.f32 %v640, 0.6931472
        %v642 = vmul.f32 -0.5, %v505
        %v643 = vadd.f32 %v642, 1.0
        %v644 = vmul.f32 %v643, %v505
        %v645 = vand.u32 2147483647, %v505
        %vm646 = vcmp.lt.f32.partialorder %v645, 0.0004427343
        %v647 = vsel %vm646, %v644, %v641
        %v648 = vadd.f32 %v507, 1.0
        %v649 = vlog2.pop %v648
        %v650 = vmul.f32 %v649, 0.6931472
        %v651 = vmul.f32 -0.5, %v507
        %v652 = vadd.f32 %v651, 1.0
        %v653 = vmul.f32 %v652, %v507
        %v654 = vand.u32 2147483647, %v507
        %vm655 = vcmp.lt.f32.partialorder %v654, 0.0004427343
        %v656 = vsel %vm655, %v653, %v650
        %v657 = vadd.f32 %v509, 1.0
        %v658 = vlog2.pop %v657
        %v659 = vmul.f32 %v658, 0.6931472
        %v660 = vmul.f32 -0.5, %v509
        %v661 = vadd.f32 %v660, 1.0
        %v662 = vmul.f32 %v661, %v509
        %v663 = vand.u32 2147483647, %v509
        %vm664 = vcmp.lt.f32.partialorder %v663, 0.0004427343
        %v665 = vsel %vm664, %v662, %v659
        %v666 = vadd.f32 %v511, 1.0
        %v667 = vlog2.pop %v666
        %v668 = vmul.f32 %v667, 0.6931472
        %v669 = vmul.f32 -0.5, %v511
        %v670 = vadd.f32 %v669, 1.0
        %v671 = vmul.f32 %v670, %v511
        %v672 = vand.u32 2147483647, %v511
        %vm673 = vcmp.lt.f32.partialorder %v672, 0.0004427343
        %v674 = vsel %vm673, %v671, %v668
        %v675 = vadd.f32 %v513, 1.0
        %v676 = vlog2.pop %v675
        %v677 = vmul.f32 %v676, 0.6931472
        %v678 = vmul.f32 -0.5, %v513
        %v679 = vadd.f32 %v678, 1.0
        %v680 = vmul.f32 %v679, %v513
        %v681 = vand.u32 2147483647, %v513
        %vm682 = vcmp.lt.f32.partialorder %v681, 0.0004427343
        %v683 = vsel %vm682, %v680, %v677
        %v684 = vadd.f32 %v515, 1.0
        %v685 = vlog2.pop %v684
        %v686 = vmul.f32 %v685, 0.6931472
        %v687 = vmul.f32 -0.5, %v515
        %v688 = vadd.f32 %v687, 1.0
        %v689 = vmul.f32 %v688, %v515
        %v690 = vand.u32 2147483647, %v515
        %vm691 = vcmp.lt.f32.partialorder %v690, 0.0004427343
        %v692 = vsel %vm691, %v689, %v686
        %v693 = vadd.f32 %v517, 1.0
        %v694 = vlog2.pop %v693
        %v695 = vmul.f32 %v694, 0.6931472
        %v696 = vmul.f32 -0.5, %v517
        %v697 = vadd.f32 %v696, 1.0
        %v698 = vmul.f32 %v697, %v517
        %v699 = vand.u32 2147483647, %v517
        %vm700 = vcmp.lt.f32.partialorder %v699, 0.0004427343
        %v701 = vsel %vm700, %v698, %v695
        %v702 = vadd.f32 %v519, 1.0
        %v703 = vlog2.pop %v702
        %v704 = vmul.f32 %v703, 0.6931472
        %v705 = vmul.f32 -0.5, %v519
        %v706 = vadd.f32 %v705, 1.0
        %v707 = vmul.f32 %v706, %v519
        %v708 = vand.u32 2147483647, %v519
        %vm709 = vcmp.lt.f32.partialorder %v708, 0.0004427343
        %v710 = vsel %vm709, %v707, %v704
        %v711 = vadd.f32 %v521, 1.0
        %v712 = vlog2.pop %v711
        %v713 = vmul.f32 %v712, 0.6931472
        %v714 = vmul.f32 -0.5, %v521
        %v715 = vadd.f32 %v714, 1.0
        %v716 = vmul.f32 %v715, %v521
        %v717 = vand.u32 2147483647, %v521
        %vm718 = vcmp.lt.f32.partialorder %v717, 0.0004427343
        %v719 = vsel %vm718, %v716, %v713
        %v720 = vadd.f32 %v523, 1.0
        %v721 = vlog2.pop %v720
        %v722 = vmul.f32 %v721, 0.6931472
        %v723 = vmul.f32 -0.5, %v523
        %v724 = vadd.f32 %v723, 1.0
        %v725 = vmul.f32 %v724, %v523
        %v726 = vand.u32 2147483647, %v523
        %vm727 = vcmp.lt.f32.partialorder %v726, 0.0004427343
        %v728 = vsel %vm727, %v725, %v722
        %v729 = vadd.f32 %v525, 1.0
        %v730 = vlog2.pop %v729
        %v731 = vmul.f32 %v730, 0.6931472
        %v732 = vmul.f32 -0.5, %v525
        %v733 = vadd.f32 %v732, 1.0
        %v734 = vmul.f32 %v733, %v525
        %v735 = vand.u32 2147483647, %v525
        %vm736 = vcmp.lt.f32.partialorder %v735, 0.0004427343
        %v737 = vsel %vm736, %v734, %v731
        %v738 = vadd.f32 %v527, 1.0
        %v739 = vlog2.pop %v738
        %v740 = vmul.f32 %v739, 0.6931472
        %v741 = vmul.f32 -0.5, %v527
        %v742 = vadd.f32 %v741, 1.0
        %v743 = vmul.f32 %v742, %v527
        %v744 = vand.u32 2147483647, %v527
        %vm745 = vcmp.lt.f32.partialorder %v744, 0.0004427343
        %v746 = vsel %vm745, %v743, %v740
        %v747 = vadd.f32 %v529, 1.0
        %v748 = vlog2.pop %v747
        %v749 = vmul.f32 %v748, 0.6931472
        %v750 = vmul.f32 -0.5, %v529
        %v751 = vadd.f32 %v750, 1.0
        %v752 = vmul.f32 %v751, %v529
        %v753 = vand.u32 2147483647, %v529
        %vm754 = vcmp.lt.f32.partialorder %v753, 0.0004427343
        %v755 = vsel %vm754, %v752, %v749
        %v756 = vadd.f32 %v531, 1.0
        %v757 = vlog2.pop %v756
        %v758 = vmul.f32 %v757, 0.6931472
        %v759 = vmul.f32 -0.5, %v531
        %v760 = vadd.f32 %v759, 1.0
        %v761 = vmul.f32 %v760, %v531
        %v762 = vand.u32 2147483647, %v531
        %vm763 = vcmp.lt.f32.partialorder %v762, 0.0004427343
        %v764 = vsel %vm763, %v761, %v758
        %v765 = vadd.f32 %v533, 1.0
        %v766 = vlog2.pop %v765
        %v767 = vmul.f32 %v766, 0.6931472
        %v768 = vmul.f32 -0.5, %v533
        %v769 = vadd.f32 %v768, 1.0
        %v770 = vmul.f32 %v769, %v533
        %v771 = vand.u32 2147483647, %v533
        %vm772 = vcmp.lt.f32.partialorder %v771, 0.0004427343
        %v773 = vsel %vm772, %v770, %v767
        %v774 = vadd.f32 %v614, %v638
        %v775 = vadd.f32 %v615, %v647
        %v776 = vadd.f32 %v616, %v656
        %v777 = vadd.f32 %v617, %v665
        %v778 = vadd.f32 %v618, %v674
        %v779 = vadd.f32 %v619, %v683
        %v780 = vadd.f32 %v620, %v692
        %v781 = vadd.f32 %v621, %v701
        %v782 = vadd.f32 %v622, %v710
        %v783 = vadd.f32 %v623, %v719
        %v784 = vadd.f32 %v624, %v728
        %v785 = vadd.f32 %v625, %v737
        %v786 = vadd.f32 %v626, %v746
        %v787 = vadd.f32 %v627, %v755
        %v788 = vadd.f32 %v628, %v764
        %v789 = vadd.f32 %v629, %v773
        %v790 = vld [vmem:[#allocation2] sm:$0xff]
        %v791 = vld [vmem:[#allocation2 + $0x8] sm:$0xff]
        %v794 = vunpack.c.l.b16 %v452
        %v795 = vunpack.c.l.b16 %v453
        %v796 = vpack.c.b16 %v795, %v794
        %v814 = vunpack.c.l.b16 %v436
        %v815 = vunpack.c.l.b16 %v437
        %v816 = vunpack.c.l.b16 %v438
        %v817 = vunpack.c.l.b16 %v439
        %v818 = vunpack.c.l.b16 %v440
        %v819 = vunpack.c.l.b16 %v441
        %v820 = vunpack.c.l.b16 %v442
        %v821 = vunpack.c.l.b16 %v443
        %v822 = vunpack.c.l.b16 %v444
        %v823 = vunpack.c.l.b16 %v445
        %v824 = vunpack.c.l.b16 %v446
        %v825 = vunpack.c.l.b16 %v447
        %v826 = vunpack.c.l.b16 %v448
        %v827 = vunpack.c.l.b16 %v449
        %v828 = vunpack.c.l.b16 %v450
        %v829 = vunpack.c.l.b16 %v451
        %v830 = vpack.c.b16 %v815, %v814
        %v831 = vpack.c.b16 %v817, %v816
        %v832 = vpack.c.b16 %v819, %v818
        %v833 = vpack.c.b16 %v821, %v820
        %v834 = vpack.c.b16 %v823, %v822
        %v835 = vpack.c.b16 %v825, %v824
        %v836 = vpack.c.b16 %v827, %v826
        %v837 = vpack.c.b16 %v829, %v828
        %846 = vmatprep.subr.bf16.mxu0 0
        %847 = vmatpush1.bf16.xpose.msra.mxu0 %v830
        %848 = vmatprep.subr.bf16.mxu0 0
        %849 = vmatpush1.bf16.xpose.msra.mxu0 %v831
        %850 = vmatprep.subr.bf16.mxu0 0
        %851 = vmatpush1.bf16.xpose.msra.mxu0 %v832
        %852 = vmatprep.subr.bf16.mxu0 0
        %853 = vmatpush1.bf16.xpose.msra.mxu0 %v833
        %854 = vmatprep.subr.bf16.mxu0 0
        %855 = vmatpush1.bf16.xpose.msra.mxu0 %v834
        %856 = vmatprep.subr.bf16.mxu0 0
        %857 = vmatpush1.bf16.xpose.msra.mxu0 %v835
        %858 = vmatprep.subr.bf16.mxu0 0
        %859 = vmatpush1.bf16.xpose.msra.mxu0 %v836
        %860 = vmatprep.subr.bf16.mxu0 0
        %861 = vmatpush1.bf16.xpose.msra.mxu0 %v837
        %862 = vmatprep.subr.bf16.mxu0 0
        %863 = vmatpush1.bf16.xpose.msra.mxu0 0
        %864 = vmatprep.subr.bf16.mxu0 0
        %865 = vmatpush1.bf16.xpose.msra.mxu0 0
        %866 = vmatprep.subr.bf16.mxu0 0
        %867 = vmatpush1.bf16.xpose.msra.mxu0 0
        %868 = vmatprep.subr.bf16.mxu0 0
        %869 = vmatpush1.bf16.xpose.msra.mxu0 0
        %870 = vmatprep.subr.bf16.mxu0 0
        %871 = vmatpush1.bf16.xpose.msra.mxu0 0
        %872 = vmatprep.subr.bf16.mxu0 0
        %873 = vmatpush1.bf16.xpose.msra.mxu0 0
        %874 = vmatprep.subr.bf16.mxu0 0
        %875 = vmatpush1.bf16.xpose.msra.mxu0 0
        %876 = vmatprep.subr.bf16.mxu0 0
        %877 = vmatpush1.bf16.xpose.msra.mxu0 0
        %878 = vmatprep.mubr.bf16.mxu0 0
        %879 = vmatmul.mubr.bf16.gmra.mrb[0].mxu0 %v796
        %v880 = vpop.f32.mrb[0].mxu0
        %v881 = vadd.f32 0.0, %v880
        %v882 = vpop.f32.mrb[0].mxu0
        %v883 = vpop.f32.mrb[0].mxu0
        %v884 = vadd.f32 0.0, %v883
        %v885 = vpop.f32.mrb[0].mxu0
        %886 = vdwg.mxu0
        %v887 = vadd.f32 %v790, %v881
        %v888 = vadd.f32 %v791, %v884
        %889 = vst [vmem:[#allocation2] sm:$0xff] %v887
        %890 = vst [vmem:[#allocation2 + $0x8] sm:$0xff] %v888
        %v891 = vld [vmem:[#allocation3] sm:$0xff]
        %v892 = vld [vmem:[#allocation3 + $0x8] sm:$0xff]
        %v893 = vpack.c.bf16 %v599, %v598
        %v894 = vpack.c.bf16 %v601, %v600
        %v895 = vpack.c.bf16 %v603, %v602
        %v896 = vpack.c.bf16 %v605, %v604
        %v897 = vpack.c.bf16 %v607, %v606
        %v898 = vpack.c.bf16 %v609, %v608
        %v899 = vpack.c.bf16 %v611, %v610
        %v900 = vpack.c.bf16 %v613, %v612
        %901 = vmatprep.subr.bf16.mxu0 0
        %902 = vmatpush1.bf16.xpose.msra.mxu0 %v893
        %903 = vmatprep.subr.bf16.mxu0 0
        %904 = vmatpush1.bf16.xpose.msra.mxu0 %v894
        %905 = vmatprep.subr.bf16.mxu0 0
        %906 = vmatpush1.bf16.xpose.msra.mxu0 %v895
        %907 = vmatprep.subr.bf16.mxu0 0
        %908 = vmatpush1.bf16.xpose.msra.mxu0 %v896
        %909 = vmatprep.subr.bf16.mxu0 0
        %910 = vmatpush1.bf16.xpose.msra.mxu0 %v897
        %911 = vmatprep.subr.bf16.mxu0 0
        %912 = vmatpush1.bf16.xpose.msra.mxu0 %v898
        %913 = vmatprep.subr.bf16.mxu0 0
        %914 = vmatpush1.bf16.xpose.msra.mxu0 %v899
        %915 = vmatprep.subr.bf16.mxu0 0
        %916 = vmatpush1.bf16.xpose.msra.mxu0 %v900
        %917 = vmatprep.subr.bf16.mxu0 0
        %918 = vmatpush1.bf16.xpose.msra.mxu0 0
        %919 = vmatprep.subr.bf16.mxu0 0
        %920 = vmatpush1.bf16.xpose.msra.mxu0 0
        %921 = vmatprep.subr.bf16.mxu0 0
        %922 = vmatpush1.bf16.xpose.msra.mxu0 0
        %923 = vmatprep.subr.bf16.mxu0 0
        %924 = vmatpush1.bf16.xpose.msra.mxu0 0
        %925 = vmatprep.subr.bf16.mxu0 0
        %926 = vmatpush1.bf16.xpose.msra.mxu0 0
        %927 = vmatprep.subr.bf16.mxu0 0
        %928 = vmatpush1.bf16.xpose.msra.mxu0 0
        %929 = vmatprep.subr.bf16.mxu0 0
        %930 = vmatpush1.bf16.xpose.msra.mxu0 0
        %931 = vmatprep.subr.bf16.mxu0 0
        %932 = vmatpush1.bf16.xpose.msra.mxu0 0
        %933 = vmatprep.mubr.bf16.mxu0 0
        %934 = vmatmul.mubr.bf16.gmra.mrb[0].mxu0 %v796
        %v935 = vpop.f32.mrb[0].mxu0
        %v936 = vadd.f32 0.0, %v935
        %v937 = vpop.f32.mrb[0].mxu0
        %v938 = vpop.f32.mrb[0].mxu0
        %v939 = vadd.f32 0.0, %v938
        %v940 = vpop.f32.mrb[0].mxu0
        %941 = vdwg.mxu0
        %v942 = vadd.f32 %v891, %v936
        %v943 = vadd.f32 %v892, %v939
        %944 = vst [vmem:[#allocation3] sm:$0xff] %v942
        %945 = vst [vmem:[#allocation3 + $0x8] sm:$0xff] %v943
        %v946 = vld [vmem:[#allocation4] sm:$0x1]
        %947 = vadd.xlane.f32.xlu0 %v774
        %v948 = vpop.xlane.xlu0 %947
        %949 = vadd.xlane.f32.xlu0 %v775
        %v950 = vpop.xlane.xlu0 %949
        %951 = vadd.xlane.f32.xlu0 %v776
        %v952 = vpop.xlane.xlu0 %951
        %953 = vadd.xlane.f32.xlu0 %v777
        %v954 = vpop.xlane.xlu0 %953
        %955 = vadd.xlane.f32.xlu0 %v778
        %v956 = vpop.xlane.xlu0 %955
        %957 = vadd.xlane.f32.xlu0 %v779
        %v958 = vpop.xlane.xlu0 %957
        %959 = vadd.xlane.f32.xlu0 %v780
        %v960 = vpop.xlane.xlu0 %959
        %961 = vadd.xlane.f32.xlu0 %v781
        %v962 = vpop.xlane.xlu0 %961
        %963 = vadd.xlane.f32.xlu0 %v782
        %v964 = vpop.xlane.xlu0 %963
        %965 = vadd.xlane.f32.xlu0 %v783
        %v966 = vpop.xlane.xlu0 %965
        %967 = vadd.xlane.f32.xlu0 %v784
        %v968 = vpop.xlane.xlu0 %967
        %969 = vadd.xlane.f32.xlu0 %v785
        %v970 = vpop.xlane.xlu0 %969
        %971 = vadd.xlane.f32.xlu0 %v786
        %v972 = vpop.xlane.xlu0 %971
        %973 = vadd.xlane.f32.xlu0 %v787
        %v974 = vpop.xlane.xlu0 %973
        %975 = vadd.xlane.f32.xlu0 %v788
        %v976 = vpop.xlane.xlu0 %975
        %977 = vadd.xlane.f32.xlu0 %v789
        %v978 = vpop.xlane.xlu0 %977
        %v995 = vlaneseq
        %v996 = vshrl.u32 %v995, 7
        %v997 = vsub.s32 0, %v996
        %v998 = vrot.slane %v948, %v997
        %v999 = vlaneseq
        %v1000 = vshrl.u32 %v999, 7
        %v1001 = vsub.s32 1, %v1000
        %v1002 = vrot.slane %v948, %v1001
        %v1003 = vlaneseq
        %v1004 = vshrl.u32 %v1003, 7
        %v1005 = vsub.s32 2, %v1004
        %v1006 = vrot.slane %v948, %v1005
        %v1007 = vlaneseq
        %v1008 = vshrl.u32 %v1007, 7
        %v1009 = vsub.s32 3, %v1008
        %v1010 = vrot.slane %v948, %v1009
        %v1011 = vlaneseq
        %v1012 = vshrl.u32 %v1011, 7
        %v1013 = vsub.s32 4, %v1012
        %v1014 = vrot.slane %v948, %v1013
        %v1015 = vlaneseq
        %v1016 = vshrl.u32 %v1015, 7
        %v1017 = vsub.s32 5, %v1016
        %v1018 = vrot.slane %v948, %v1017
        %v1019 = vlaneseq
        %v1020 = vshrl.u32 %v1019, 7
        %v1021 = vsub.s32 6, %v1020
        %v1022 = vrot.slane %v948, %v1021
        %v1023 = vlaneseq
        %v1024 = vshrl.u32 %v1023, 7
        %v1025 = vsub.s32 7, %v1024
        %v1026 = vrot.slane %v948, %v1025
        %v1027 = vlaneseq
        %v1028 = vshrl.u32 %v1027, 7
        %v1029 = vsub.s32 0, %v1028
        %v1030 = vrot.slane %v950, %v1029
        %v1031 = vlaneseq
        %v1032 = vshrl.u32 %v1031, 7
        %v1033 = vsub.s32 1, %v1032
        %v1034 = vrot.slane %v950, %v1033
        %v1035 = vlaneseq
        %v1036 = vshrl.u32 %v1035, 7
        %v1037 = vsub.s32 2, %v1036
        %v1038 = vrot.slane %v950, %v1037
        %v1039 = vlaneseq
        %v1040 = vshrl.u32 %v1039, 7
        %v1041 = vsub.s32 3, %v1040
        %v1042 = vrot.slane %v950, %v1041
        %v1043 = vlaneseq
        %v1044 = vshrl.u32 %v1043, 7
        %v1045 = vsub.s32 4, %v1044
        %v1046 = vrot.slane %v950, %v1045
        %v1047 = vlaneseq
        %v1048 = vshrl.u32 %v1047, 7
        %v1049 = vsub.s32 5, %v1048
        %v1050 = vrot.slane %v950, %v1049
        %v1051 = vlaneseq
        %v1052 = vshrl.u32 %v1051, 7
        %v1053 = vsub.s32 6, %v1052
        %v1054 = vrot.slane %v950, %v1053
        %v1055 = vlaneseq
        %v1056 = vshrl.u32 %v1055, 7
        %v1057 = vsub.s32 7, %v1056
        %v1058 = vrot.slane %v950, %v1057
        %v1059 = vlaneseq
        %v1060 = vshrl.u32 %v1059, 7
        %v1061 = vsub.s32 0, %v1060
        %v1062 = vrot.slane %v952, %v1061
        %v1063 = vlaneseq
        %v1064 = vshrl.u32 %v1063, 7
        %v1065 = vsub.s32 1, %v1064
        %v1066 = vrot.slane %v952, %v1065
        %v1067 = vlaneseq
        %v1068 = vshrl.u32 %v1067, 7
        %v1069 = vsub.s32 2, %v1068
        %v1070 = vrot.slane %v952, %v1069
        %v1071 = vlaneseq
        %v1072 = vshrl.u32 %v1071, 7
        %v1073 = vsub.s32 3, %v1072
        %v1074 = vrot.slane %v952, %v1073
        %v1075 = vlaneseq
        %v1076 = vshrl.u32 %v1075, 7
        %v1077 = vsub.s32 4, %v1076
        %v1078 = vrot.slane %v952, %v1077
        %v1079 = vlaneseq
        %v1080 = vshrl.u32 %v1079, 7
        %v1081 = vsub.s32 5, %v1080
        %v1082 = vrot.slane %v952, %v1081
        %v1083 = vlaneseq
        %v1084 = vshrl.u32 %v1083, 7
        %v1085 = vsub.s32 6, %v1084
        %v1086 = vrot.slane %v952, %v1085
        %v1087 = vlaneseq
        %v1088 = vshrl.u32 %v1087, 7
        %v1089 = vsub.s32 7, %v1088
        %v1090 = vrot.slane %v952, %v1089
        %v1091 = vlaneseq
        %v1092 = vshrl.u32 %v1091, 7
        %v1093 = vsub.s32 0, %v1092
        %v1094 = vrot.slane %v954, %v1093
        %v1095 = vlaneseq
        %v1096 = vshrl.u32 %v1095, 7
        %v1097 = vsub.s32 1, %v1096
        %v1098 = vrot.slane %v954, %v1097
        %v1099 = vlaneseq
        %v1100 = vshrl.u32 %v1099, 7
        %v1101 = vsub.s32 2, %v1100
        %v1102 = vrot.slane %v954, %v1101
        %v1103 = vlaneseq
        %v1104 = vshrl.u32 %v1103, 7
        %v1105 = vsub.s32 3, %v1104
        %v1106 = vrot.slane %v954, %v1105
        %v1107 = vlaneseq
        %v1108 = vshrl.u32 %v1107, 7
        %v1109 = vsub.s32 4, %v1108
        %v1110 = vrot.slane %v954, %v1109
        %v1111 = vlaneseq
        %v1112 = vshrl.u32 %v1111, 7
        %v1113 = vsub.s32 5, %v1112
        %v1114 = vrot.slane %v954, %v1113
        %v1115 = vlaneseq
        %v1116 = vshrl.u32 %v1115, 7
        %v1117 = vsub.s32 6, %v1116
        %v1118 = vrot.slane %v954, %v1117
        %v1119 = vlaneseq
        %v1120 = vshrl.u32 %v1119, 7
        %v1121 = vsub.s32 7, %v1120
        %v1122 = vrot.slane %v954, %v1121
        %v1123 = vlaneseq
        %v1124 = vshrl.u32 %v1123, 7
        %v1125 = vsub.s32 0, %v1124
        %v1126 = vrot.slane %v956, %v1125
        %v1127 = vlaneseq
        %v1128 = vshrl.u32 %v1127, 7
        %v1129 = vsub.s32 1, %v1128
        %v1130 = vrot.slane %v956, %v1129
        %v1131 = vlaneseq
        %v1132 = vshrl.u32 %v1131, 7
        %v1133 = vsub.s32 2, %v1132
        %v1134 = vrot.slane %v956, %v1133
        %v1135 = vlaneseq
        %v1136 = vshrl.u32 %v1135, 7
        %v1137 = vsub.s32 3, %v1136
        %v1138 = vrot.slane %v956, %v1137
        %v1139 = vlaneseq
        %v1140 = vshrl.u32 %v1139, 7
        %v1141 = vsub.s32 4, %v1140
        %v1142 = vrot.slane %v956, %v1141
        %v1143 = vlaneseq
        %v1144 = vshrl.u32 %v1143, 7
        %v1145 = vsub.s32 5, %v1144
        %v1146 = vrot.slane %v956, %v1145
        %v1147 = vlaneseq
        %v1148 = vshrl.u32 %v1147, 7
        %v1149 = vsub.s32 6, %v1148
        %v1150 = vrot.slane %v956, %v1149
        %v1151 = vlaneseq
        %v1152 = vshrl.u32 %v1151, 7
        %v1153 = vsub.s32 7, %v1152
        %v1154 = vrot.slane %v956, %v1153
        %v1155 = vlaneseq
        %v1156 = vshrl.u32 %v1155, 7
        %v1157 = vsub.s32 0, %v1156
        %v1158 = vrot.slane %v958, %v1157
        %v1159 = vlaneseq
        %v1160 = vshrl.u32 %v1159, 7
        %v1161 = vsub.s32 1, %v1160
        %v1162 = vrot.slane %v958, %v1161
        %v1163 = vlaneseq
        %v1164 = vshrl.u32 %v1163, 7
        %v1165 = vsub.s32 2, %v1164
        %v1166 = vrot.slane %v958, %v1165
        %v1167 = vlaneseq
        %v1168 = vshrl.u32 %v1167, 7
        %v1169 = vsub.s32 3, %v1168
        %v1170 = vrot.slane %v958, %v1169
        %v1171 = vlaneseq
        %v1172 = vshrl.u32 %v1171, 7
        %v1173 = vsub.s32 4, %v1172
        %v1174 = vrot.slane %v958, %v1173
        %v1175 = vlaneseq
        %v1176 = vshrl.u32 %v1175, 7
        %v1177 = vsub.s32 5, %v1176
        %v1178 = vrot.slane %v958, %v1177
        %v1179 = vlaneseq
        %v1180 = vshrl.u32 %v1179, 7
        %v1181 = vsub.s32 6, %v1180
        %v1182 = vrot.slane %v958, %v1181
        %v1183 = vlaneseq
        %v1184 = vshrl.u32 %v1183, 7
        %v1185 = vsub.s32 7, %v1184
        %v1186 = vrot.slane %v958, %v1185
        %v1187 = vlaneseq
        %v1188 = vshrl.u32 %v1187, 7
        %v1189 = vsub.s32 0, %v1188
        %v1190 = vrot.slane %v960, %v1189
        %v1191 = vlaneseq
        %v1192 = vshrl.u32 %v1191, 7
        %v1193 = vsub.s32 1, %v1192
        %v1194 = vrot.slane %v960, %v1193
        %v1195 = vlaneseq
        %v1196 = vshrl.u32 %v1195, 7
        %v1197 = vsub.s32 2, %v1196
        %v1198 = vrot.slane %v960, %v1197
        %v1199 = vlaneseq
        %v1200 = vshrl.u32 %v1199, 7
        %v1201 = vsub.s32 3, %v1200
        %v1202 = vrot.slane %v960, %v1201
        %v1203 = vlaneseq
        %v1204 = vshrl.u32 %v1203, 7
        %v1205 = vsub.s32 4, %v1204
        %v1206 = vrot.slane %v960, %v1205
        %v1207 = vlaneseq
        %v1208 = vshrl.u32 %v1207, 7
        %v1209 = vsub.s32 5, %v1208
        %v1210 = vrot.slane %v960, %v1209
        %v1211 = vlaneseq
        %v1212 = vshrl.u32 %v1211, 7
        %v1213 = vsub.s32 6, %v1212
        %v1214 = vrot.slane %v960, %v1213
        %v1215 = vlaneseq
        %v1216 = vshrl.u32 %v1215, 7
        %v1217 = vsub.s32 7, %v1216
        %v1218 = vrot.slane %v960, %v1217
        %v1219 = vlaneseq
        %v1220 = vshrl.u32 %v1219, 7
        %v1221 = vsub.s32 0, %v1220
        %v1222 = vrot.slane %v962, %v1221
        %v1223 = vlaneseq
        %v1224 = vshrl.u32 %v1223, 7
        %v1225 = vsub.s32 1, %v1224
        %v1226 = vrot.slane %v962, %v1225
        %v1227 = vlaneseq
        %v1228 = vshrl.u32 %v1227, 7
        %v1229 = vsub.s32 2, %v1228
        %v1230 = vrot.slane %v962, %v1229
        %v1231 = vlaneseq
        %v1232 = vshrl.u32 %v1231, 7
        %v1233 = vsub.s32 3, %v1232
        %v1234 = vrot.slane %v962, %v1233
        %v1235 = vlaneseq
        %v1236 = vshrl.u32 %v1235, 7
        %v1237 = vsub.s32 4, %v1236
        %v1238 = vrot.slane %v962, %v1237
        %v1239 = vlaneseq
        %v1240 = vshrl.u32 %v1239, 7
        %v1241 = vsub.s32 5, %v1240
        %v1242 = vrot.slane %v962, %v1241
        %v1243 = vlaneseq
        %v1244 = vshrl.u32 %v1243, 7
        %v1245 = vsub.s32 6, %v1244
        %v1246 = vrot.slane %v962, %v1245
        %v1247 = vlaneseq
        %v1248 = vshrl.u32 %v1247, 7
        %v1249 = vsub.s32 7, %v1248
        %v1250 = vrot.slane %v962, %v1249
        %v1251 = vlaneseq
        %v1252 = vshrl.u32 %v1251, 7
        %v1253 = vsub.s32 0, %v1252
        %v1254 = vrot.slane %v964, %v1253
        %v1255 = vlaneseq
        %v1256 = vshrl.u32 %v1255, 7
        %v1257 = vsub.s32 1, %v1256
        %v1258 = vrot.slane %v964, %v1257
        %v1259 = vlaneseq
        %v1260 = vshrl.u32 %v1259, 7
        %v1261 = vsub.s32 2, %v1260
        %v1262 = vrot.slane %v964, %v1261
        %v1263 = vlaneseq
        %v1264 = vshrl.u32 %v1263, 7
        %v1265 = vsub.s32 3, %v1264
        %v1266 = vrot.slane %v964, %v1265
        %v1267 = vlaneseq
        %v1268 = vshrl.u32 %v1267, 7
        %v1269 = vsub.s32 4, %v1268
        %v1270 = vrot.slane %v964, %v1269
        %v1271 = vlaneseq
        %v1272 = vshrl.u32 %v1271, 7
        %v1273 = vsub.s32 5, %v1272
        %v1274 = vrot.slane %v964, %v1273
        %v1275 = vlaneseq
        %v1276 = vshrl.u32 %v1275, 7
        %v1277 = vsub.s32 6, %v1276
        %v1278 = vrot.slane %v964, %v1277
        %v1279 = vlaneseq
        %v1280 = vshrl.u32 %v1279, 7
        %v1281 = vsub.s32 7, %v1280
        %v1282 = vrot.slane %v964, %v1281
        %v1283 = vlaneseq
        %v1284 = vshrl.u32 %v1283, 7
        %v1285 = vsub.s32 0, %v1284
        %v1286 = vrot.slane %v966, %v1285
        %v1287 = vlaneseq
        %v1288 = vshrl.u32 %v1287, 7
        %v1289 = vsub.s32 1, %v1288
        %v1290 = vrot.slane %v966, %v1289
        %v1291 = vlaneseq
        %v1292 = vshrl.u32 %v1291, 7
        %v1293 = vsub.s32 2, %v1292
        %v1294 = vrot.slane %v966, %v1293
        %v1295 = vlaneseq
        %v1296 = vshrl.u32 %v1295, 7
        %v1297 = vsub.s32 3, %v1296
        %v1298 = vrot.slane %v966, %v1297
        %v1299 = vlaneseq
        %v1300 = vshrl.u32 %v1299, 7
        %v1301 = vsub.s32 4, %v1300
        %v1302 = vrot.slane %v966, %v1301
        %v1303 = vlaneseq
        %v1304 = vshrl.u32 %v1303, 7
        %v1305 = vsub.s32 5, %v1304
        %v1306 = vrot.slane %v966, %v1305
        %v1307 = vlaneseq
        %v1308 = vshrl.u32 %v1307, 7
        %v1309 = vsub.s32 6, %v1308
        %v1310 = vrot.slane %v966, %v1309
        %v1311 = vlaneseq
        %v1312 = vshrl.u32 %v1311, 7
        %v1313 = vsub.s32 7, %v1312
        %v1314 = vrot.slane %v966, %v1313
        %v1315 = vlaneseq
        %v1316 = vshrl.u32 %v1315, 7
        %v1317 = vsub.s32 0, %v1316
        %v1318 = vrot.slane %v968, %v1317
        %v1319 = vlaneseq
        %v1320 = vshrl.u32 %v1319, 7
        %v1321 = vsub.s32 1, %v1320
        %v1322 = vrot.slane %v968, %v1321
        %v1323 = vlaneseq
        %v1324 = vshrl.u32 %v1323, 7
        %v1325 = vsub.s32 2, %v1324
        %v1326 = vrot.slane %v968, %v1325
        %v1327 = vlaneseq
        %v1328 = vshrl.u32 %v1327, 7
        %v1329 = vsub.s32 3, %v1328
        %v1330 = vrot.slane %v968, %v1329
        %v1331 = vlaneseq
        %v1332 = vshrl.u32 %v1331, 7
        %v1333 = vsub.s32 4, %v1332
        %v1334 = vrot.slane %v968, %v1333
        %v1335 = vlaneseq
        %v1336 = vshrl.u32 %v1335, 7
        %v1337 = vsub.s32 5, %v1336
        %v1338 = vrot.slane %v968, %v1337
        %v1339 = vlaneseq
        %v1340 = vshrl.u32 %v1339, 7
        %v1341 = vsub.s32 6, %v1340
        %v1342 = vrot.slane %v968, %v1341
        %v1343 = vlaneseq
        %v1344 = vshrl.u32 %v1343, 7
        %v1345 = vsub.s32 7, %v1344
        %v1346 = vrot.slane %v968, %v1345
        %v1347 = vlaneseq
        %v1348 = vshrl.u32 %v1347, 7
        %v1349 = vsub.s32 0, %v1348
        %v1350 = vrot.slane %v970, %v1349
        %v1351 = vlaneseq
        %v1352 = vshrl.u32 %v1351, 7
        %v1353 = vsub.s32 1, %v1352
        %v1354 = vrot.slane %v970, %v1353
        %v1355 = vlaneseq
        %v1356 = vshrl.u32 %v1355, 7
        %v1357 = vsub.s32 2, %v1356
        %v1358 = vrot.slane %v970, %v1357
        %v1359 = vlaneseq
        %v1360 = vshrl.u32 %v1359, 7
        %v1361 = vsub.s32 3, %v1360
        %v1362 = vrot.slane %v970, %v1361
        %v1363 = vlaneseq
        %v1364 = vshrl.u32 %v1363, 7
        %v1365 = vsub.s32 4, %v1364
        %v1366 = vrot.slane %v970, %v1365
        %v1367 = vlaneseq
        %v1368 = vshrl.u32 %v1367, 7
        %v1369 = vsub.s32 5, %v1368
        %v1370 = vrot.slane %v970, %v1369
        %v1371 = vlaneseq
        %v1372 = vshrl.u32 %v1371, 7
        %v1373 = vsub.s32 6, %v1372
        %v1374 = vrot.slane %v970, %v1373
        %v1375 = vlaneseq
        %v1376 = vshrl.u32 %v1375, 7
        %v1377 = vsub.s32 7, %v1376
        %v1378 = vrot.slane %v970, %v1377
        %v1379 = vlaneseq
        %v1380 = vshrl.u32 %v1379, 7
        %v1381 = vsub.s32 0, %v1380
        %v1382 = vrot.slane %v972, %v1381
        %v1383 = vlaneseq
        %v1384 = vshrl.u32 %v1383, 7
        %v1385 = vsub.s32 1, %v1384
        %v1386 = vrot.slane %v972, %v1385
        %v1387 = vlaneseq
        %v1388 = vshrl.u32 %v1387, 7
        %v1389 = vsub.s32 2, %v1388
        %v1390 = vrot.slane %v972, %v1389
        %v1391 = vlaneseq
        %v1392 = vshrl.u32 %v1391, 7
        %v1393 = vsub.s32 3, %v1392
        %v1394 = vrot.slane %v972, %v1393
        %v1395 = vlaneseq
        %v1396 = vshrl.u32 %v1395, 7
        %v1397 = vsub.s32 4, %v1396
        %v1398 = vrot.slane %v972, %v1397
        %v1399 = vlaneseq
        %v1400 = vshrl.u32 %v1399, 7
        %v1401 = vsub.s32 5, %v1400
        %v1402 = vrot.slane %v972, %v1401
        %v1403 = vlaneseq
        %v1404 = vshrl.u32 %v1403, 7
        %v1405 = vsub.s32 6, %v1404
        %v1406 = vrot.slane %v972, %v1405
        %v1407 = vlaneseq
        %v1408 = vshrl.u32 %v1407, 7
        %v1409 = vsub.s32 7, %v1408
        %v1410 = vrot.slane %v972, %v1409
        %v1411 = vlaneseq
        %v1412 = vshrl.u32 %v1411, 7
        %v1413 = vsub.s32 0, %v1412
        %v1414 = vrot.slane %v974, %v1413
        %v1415 = vlaneseq
        %v1416 = vshrl.u32 %v1415, 7
        %v1417 = vsub.s32 1, %v1416
        %v1418 = vrot.slane %v974, %v1417
        %v1419 = vlaneseq
        %v1420 = vshrl.u32 %v1419, 7
        %v1421 = vsub.s32 2, %v1420
        %v1422 = vrot.slane %v974, %v1421
        %v1423 = vlaneseq
        %v1424 = vshrl.u32 %v1423, 7
        %v1425 = vsub.s32 3, %v1424
        %v1426 = vrot.slane %v974, %v1425
        %v1427 = vlaneseq
        %v1428 = vshrl.u32 %v1427, 7
        %v1429 = vsub.s32 4, %v1428
        %v1430 = vrot.slane %v974, %v1429
        %v1431 = vlaneseq
        %v1432 = vshrl.u32 %v1431, 7
        %v1433 = vsub.s32 5, %v1432
        %v1434 = vrot.slane %v974, %v1433
        %v1435 = vlaneseq
        %v1436 = vshrl.u32 %v1435, 7
        %v1437 = vsub.s32 6, %v1436
        %v1438 = vrot.slane %v974, %v1437
        %v1439 = vlaneseq
        %v1440 = vshrl.u32 %v1439, 7
        %v1441 = vsub.s32 7, %v1440
        %v1442 = vrot.slane %v974, %v1441
        %v1443 = vlaneseq
        %v1444 = vshrl.u32 %v1443, 7
        %v1445 = vsub.s32 0, %v1444
        %v1446 = vrot.slane %v976, %v1445
        %v1447 = vlaneseq
        %v1448 = vshrl.u32 %v1447, 7
        %v1449 = vsub.s32 1, %v1448
        %v1450 = vrot.slane %v976, %v1449
        %v1451 = vlaneseq
        %v1452 = vshrl.u32 %v1451, 7
        %v1453 = vsub.s32 2, %v1452
        %v1454 = vrot.slane %v976, %v1453
        %v1455 = vlaneseq
        %v1456 = vshrl.u32 %v1455, 7
        %v1457 = vsub.s32 3, %v1456
        %v1458 = vrot.slane %v976, %v1457
        %v1459 = vlaneseq
        %v1460 = vshrl.u32 %v1459, 7
        %v1461 = vsub.s32 4, %v1460
        %v1462 = vrot.slane %v976, %v1461
        %v1463 = vlaneseq
        %v1464 = vshrl.u32 %v1463, 7
        %v1465 = vsub.s32 5, %v1464
        %v1466 = vrot.slane %v976, %v1465
        %v1467 = vlaneseq
        %v1468 = vshrl.u32 %v1467, 7
        %v1469 = vsub.s32 6, %v1468
        %v1470 = vrot.slane %v976, %v1469
        %v1471 = vlaneseq
        %v1472 = vshrl.u32 %v1471, 7
        %v1473 = vsub.s32 7, %v1472
        %v1474 = vrot.slane %v976, %v1473
        %v1475 = vlaneseq
        %v1476 = vshrl.u32 %v1475, 7
        %v1477 = vsub.s32 0, %v1476
        %v1478 = vrot.slane %v978, %v1477
        %v1479 = vlaneseq
        %v1480 = vshrl.u32 %v1479, 7
        %v1481 = vsub.s32 1, %v1480
        %v1482 = vrot.slane %v978, %v1481
        %v1483 = vlaneseq
        %v1484 = vshrl.u32 %v1483, 7
        %v1485 = vsub.s32 2, %v1484
        %v1486 = vrot.slane %v978, %v1485
        %v1487 = vlaneseq
        %v1488 = vshrl.u32 %v1487, 7
        %v1489 = vsub.s32 3, %v1488
        %v1490 = vrot.slane %v978, %v1489
        %v1491 = vlaneseq
        %v1492 = vshrl.u32 %v1491, 7
        %v1493 = vsub.s32 4, %v1492
        %v1494 = vrot.slane %v978, %v1493
        %v1495 = vlaneseq
        %v1496 = vshrl.u32 %v1495, 7
        %v1497 = vsub.s32 5, %v1496
        %v1498 = vrot.slane %v978, %v1497
        %v1499 = vlaneseq
        %v1500 = vshrl.u32 %v1499, 7
        %v1501 = vsub.s32 6, %v1500
        %v1502 = vrot.slane %v978, %v1501
        %v1503 = vlaneseq
        %v1504 = vshrl.u32 %v1503, 7
        %v1505 = vsub.s32 7, %v1504
        %v1506 = vrot.slane %v978, %v1505
        %v1507 = vcombine.low %v998, %v1002
        %v1508 = vcombine.low %v1006, %v1010
        %v1509 = vcombine.low %v1014, %v1018
        %v1510 = vcombine.low %v1022, %v1026
        %v1512 = vunpack.c.l.s4 1966171168
        %v1513 = vunpack.c.0.s8 %v1512
        %v1514 = vlaneseq
        %v1515 = vshrl.u32 %v1514, 7
        %v1516 = vsub.s32 %v1513, %v1515
        %v1517 = vrot.slane %v1507, %v1516
        %v1519 = vunpack.c.l.s4 1966171168
        %v1520 = vunpack.c.0.s8 %v1519
        %v1521 = vlaneseq
        %v1522 = vshrl.u32 %v1521, 7
        %v1523 = vsub.s32 %v1520, %v1522
        %v1524 = vrot.slane %v1508, %v1523
        %v1526 = vunpack.c.l.s4 1966171168
        %v1527 = vunpack.c.0.s8 %v1526
        %v1528 = vlaneseq
        %v1529 = vshrl.u32 %v1528, 7
        %v1530 = vsub.s32 %v1527, %v1529
        %v1531 = vrot.slane %v1509, %v1530
        %v1533 = vunpack.c.l.s4 1966171168
        %v1534 = vunpack.c.0.s8 %v1533
        %v1535 = vlaneseq
        %v1536 = vshrl.u32 %v1535, 7
        %v1537 = vsub.s32 %v1534, %v1536
        %v1538 = vrot.slane %v1510, %v1537
        %v1539 = vcombine.low %v1517, %v1524
        %v1540 = vcombine.low %v1531, %v1538
        %v1542 = vunpack.c.l.s4 1966171168
        %v1543 = vunpack.c.0.s8 %v1542
        %v1544 = vlaneseq
        %v1545 = vshrl.u32 %v1544, 7
        %v1546 = vsub.s32 %v1543, %v1545
        %v1547 = vrot.slane %v1539, %v1546
        %v1549 = vunpack.c.l.s4 1966171168
        %v1550 = vunpack.c.0.s8 %v1549
        %v1551 = vlaneseq
        %v1552 = vshrl.u32 %v1551, 7
        %v1553 = vsub.s32 %v1550, %v1552
        %v1554 = vrot.slane %v1540, %v1553
        %v1555 = vcombine.low %v1547, %v1554
        %v1556 = vcombine.low %v1030, %v1034
        %v1557 = vcombine.low %v1038, %v1042
        %v1558 = vcombine.low %v1046, %v1050
        %v1559 = vcombine.low %v1054, %v1058
        %v1561 = vunpack.c.l.s4 1966171168
        %v1562 = vunpack.c.0.s8 %v1561
        %v1563 = vlaneseq
        %v1564 = vshrl.u32 %v1563, 7
        %v1565 = vsub.s32 %v1562, %v1564
        %v1566 = vrot.slane %v1556, %v1565
        %v1568 = vunpack.c.l.s4 1966171168
        %v1569 = vunpack.c.0.s8 %v1568
        %v1570 = vlaneseq
        %v1571 = vshrl.u32 %v1570, 7
        %v1572 = vsub.s32 %v1569, %v1571
        %v1573 = vrot.slane %v1557, %v1572
        %v1575 = vunpack.c.l.s4 1966171168
        %v1576 = vunpack.c.0.s8 %v1575
        %v1577 = vlaneseq
        %v1578 = vshrl.u32 %v1577, 7
        %v1579 = vsub.s32 %v1576, %v1578
        %v1580 = vrot.slane %v1558, %v1579
        %v1582 = vunpack.c.l.s4 1966171168
        %v1583 = vunpack.c.0.s8 %v1582
        %v1584 = vlaneseq
        %v1585 = vshrl.u32 %v1584, 7
        %v1586 = vsub.s32 %v1583, %v1585
        %v1587 = vrot.slane %v1559, %v1586
        %v1588 = vcombine.low %v1566, %v1573
        %v1589 = vcombine.low %v1580, %v1587
        %v1591 = vunpack.c.l.s4 1966171168
        %v1592 = vunpack.c.0.s8 %v1591
        %v1593 = vlaneseq
        %v1594 = vshrl.u32 %v1593, 7
        %v1595 = vsub.s32 %v1592, %v1594
        %v1596 = vrot.slane %v1588, %v1595
        %v1598 = vunpack.c.l.s4 1966171168
        %v1599 = vunpack.c.0.s8 %v1598
        %v1600 = vlaneseq
        %v1601 = vshrl.u32 %v1600, 7
        %v1602 = vsub.s32 %v1599, %v1601
        %v1603 = vrot.slane %v1589, %v1602
        %v1604 = vcombine.low %v1596, %v1603
        %v1605 = vcombine.low %v1062, %v1066
        %v1606 = vcombine.low %v1070, %v1074
        %v1607 = vcombine.low %v1078, %v1082
        %v1608 = vcombine.low %v1086, %v1090
        %v1610 = vunpack.c.l.s4 1966171168
        %v1611 = vunpack.c.0.s8 %v1610
        %v1612 = vlaneseq
        %v1613 = vshrl.u32 %v1612, 7
        %v1614 = vsub.s32 %v1611, %v1613
        %v1615 = vrot.slane %v1605, %v1614
        %v1617 = vunpack.c.l.s4 1966171168
        %v1618 = vunpack.c.0.s8 %v1617
        %v1619 = vlaneseq
        %v1620 = vshrl.u32 %v1619, 7
        %v1621 = vsub.s32 %v1618, %v1620
        %v1622 = vrot.slane %v1606, %v1621
        %v1624 = vunpack.c.l.s4 1966171168
        %v1625 = vunpack.c.0.s8 %v1624
        %v1626 = vlaneseq
        %v1627 = vshrl.u32 %v1626, 7
        %v1628 = vsub.s32 %v1625, %v1627
        %v1629 = vrot.slane %v1607, %v1628
        %v1631 = vunpack.c.l.s4 1966171168
        %v1632 = vunpack.c.0.s8 %v1631
        %v1633 = vlaneseq
        %v1634 = vshrl.u32 %v1633, 7
        %v1635 = vsub.s32 %v1632, %v1634
        %v1636 = vrot.slane %v1608, %v1635
        %v1637 = vcombine.low %v1615, %v1622
        %v1638 = vcombine.low %v1629, %v1636
        %v1640 = vunpack.c.l.s4 1966171168
        %v1641 = vunpack.c.0.s8 %v1640
        %v1642 = vlaneseq
        %v1643 = vshrl.u32 %v1642, 7
        %v1644 = vsub.s32 %v1641, %v1643
        %v1645 = vrot.slane %v1637, %v1644
        %v1647 = vunpack.c.l.s4 1966171168
        %v1648 = vunpack.c.0.s8 %v1647
        %v1649 = vlaneseq
        %v1650 = vshrl.u32 %v1649, 7
        %v1651 = vsub.s32 %v1648, %v1650
        %v1652 = vrot.slane %v1638, %v1651
        %v1653 = vcombine.low %v1645, %v1652
        %v1654 = vcombine.low %v1094, %v1098
        %v1655 = vcombine.low %v1102, %v1106
        %v1656 = vcombine.low %v1110, %v1114
        %v1657 = vcombine.low %v1118, %v1122
        %v1659 = vunpack.c.l.s4 1966171168
        %v1660 = vunpack.c.0.s8 %v1659
        %v1661 = vlaneseq
        %v1662 = vshrl.u32 %v1661, 7
        %v1663 = vsub.s32 %v1660, %v1662
        %v1664 = vrot.slane %v1654, %v1663
        %v1666 = vunpack.c.l.s4 1966171168
        %v1667 = vunpack.c.0.s8 %v1666
        %v1668 = vlaneseq
        %v1669 = vshrl.u32 %v1668, 7
        %v1670 = vsub.s32 %v1667, %v1669
        %v1671 = vrot.slane %v1655, %v1670
        %v1673 = vunpack.c.l.s4 1966171168
        %v1674 = vunpack.c.0.s8 %v1673
        %v1675 = vlaneseq
        %v1676 = vshrl.u32 %v1675, 7
        %v1677 = vsub.s32 %v1674, %v1676
        %v1678 = vrot.slane %v1656, %v1677
        %v1680 = vunpack.c.l.s4 1966171168
        %v1681 = vunpack.c.0.s8 %v1680
        %v1682 = vlaneseq
        %v1683 = vshrl.u32 %v1682, 7
        %v1684 = vsub.s32 %v1681, %v1683
        %v1685 = vrot.slane %v1657, %v1684
        %v1686 = vcombine.low %v1664, %v1671
        %v1687 = vcombine.low %v1678, %v1685
        %v1689 = vunpack.c.l.s4 1966171168
        %v1690 = vunpack.c.0.s8 %v1689
        %v1691 = vlaneseq
        %v1692 = vshrl.u32 %v1691, 7
        %v1693 = vsub.s32 %v1690, %v1692
        %v1694 = vrot.slane %v1686, %v1693
        %v1696 = vunpack.c.l.s4 1966171168
        %v1697 = vunpack.c.0.s8 %v1696
        %v1698 = vlaneseq
        %v1699 = vshrl.u32 %v1698, 7
        %v1700 = vsub.s32 %v1697, %v1699
        %v1701 = vrot.slane %v1687, %v1700
        %v1702 = vcombine.low %v1694, %v1701
        %v1703 = vcombine.low %v1126, %v1130
        %v1704 = vcombine.low %v1134, %v1138
        %v1705 = vcombine.low %v1142, %v1146
        %v1706 = vcombine.low %v1150, %v1154
        %v1708 = vunpack.c.l.s4 1966171168
        %v1709 = vunpack.c.0.s8 %v1708
        %v1710 = vlaneseq
        %v1711 = vshrl.u32 %v1710, 7
        %v1712 = vsub.s32 %v1709, %v1711
        %v1713 = vrot.slane %v1703, %v1712
        %v1715 = vunpack.c.l.s4 1966171168
        %v1716 = vunpack.c.0.s8 %v1715
        %v1717 = vlaneseq
        %v1718 = vshrl.u32 %v1717, 7
        %v1719 = vsub.s32 %v1716, %v1718
        %v1720 = vrot.slane %v1704, %v1719
        %v1722 = vunpack.c.l.s4 1966171168
        %v1723 = vunpack.c.0.s8 %v1722
        %v1724 = vlaneseq
        %v1725 = vshrl.u32 %v1724, 7
        %v1726 = vsub.s32 %v1723, %v1725
        %v1727 = vrot.slane %v1705, %v1726
        %v1729 = vunpack.c.l.s4 1966171168
        %v1730 = vunpack.c.0.s8 %v1729
        %v1731 = vlaneseq
        %v1732 = vshrl.u32 %v1731, 7
        %v1733 = vsub.s32 %v1730, %v1732
        %v1734 = vrot.slane %v1706, %v1733
        %v1735 = vcombine.low %v1713, %v1720
        %v1736 = vcombine.low %v1727, %v1734
        %v1738 = vunpack.c.l.s4 1966171168
        %v1739 = vunpack.c.0.s8 %v1738
        %v1740 = vlaneseq
        %v1741 = vshrl.u32 %v1740, 7
        %v1742 = vsub.s32 %v1739, %v1741
        %v1743 = vrot.slane %v1735, %v1742
        %v1745 = vunpack.c.l.s4 1966171168
        %v1746 = vunpack.c.0.s8 %v1745
        %v1747 = vlaneseq
        %v1748 = vshrl.u32 %v1747, 7
        %v1749 = vsub.s32 %v1746, %v1748
        %v1750 = vrot.slane %v1736, %v1749
        %v1751 = vcombine.low %v1743, %v1750
        %v1752 = vcombine.low %v1158, %v1162
        %v1753 = vcombine.low %v1166, %v1170
        %v1754 = vcombine.low %v1174, %v1178
        %v1755 = vcombine.low %v1182, %v1186
        %v1757 = vunpack.c.l.s4 1966171168
        %v1758 = vunpack.c.0.s8 %v1757
        %v1759 = vlaneseq
        %v1760 = vshrl.u32 %v1759, 7
        %v1761 = vsub.s32 %v1758, %v1760
        %v1762 = vrot.slane %v1752, %v1761
        %v1764 = vunpack.c.l.s4 1966171168
        %v1765 = vunpack.c.0.s8 %v1764
        %v1766 = vlaneseq
        %v1767 = vshrl.u32 %v1766, 7
        %v1768 = vsub.s32 %v1765, %v1767
        %v1769 = vrot.slane %v1753, %v1768
        %v1771 = vunpack.c.l.s4 1966171168
        %v1772 = vunpack.c.0.s8 %v1771
        %v1773 = vlaneseq
        %v1774 = vshrl.u32 %v1773, 7
        %v1775 = vsub.s32 %v1772, %v1774
        %v1776 = vrot.slane %v1754, %v1775
        %v1778 = vunpack.c.l.s4 1966171168
        %v1779 = vunpack.c.0.s8 %v1778
        %v1780 = vlaneseq
        %v1781 = vshrl.u32 %v1780, 7
        %v1782 = vsub.s32 %v1779, %v1781
        %v1783 = vrot.slane %v1755, %v1782
        %v1784 = vcombine.low %v1762, %v1769
        %v1785 = vcombine.low %v1776, %v1783
        %v1787 = vunpack.c.l.s4 1966171168
        %v1788 = vunpack.c.0.s8 %v1787
        %v1789 = vlaneseq
        %v1790 = vshrl.u32 %v1789, 7
        %v1791 = vsub.s32 %v1788, %v1790
        %v1792 = vrot.slane %v1784, %v1791
        %v1794 = vunpack.c.l.s4 1966171168
        %v1795 = vunpack.c.0.s8 %v1794
        %v1796 = vlaneseq
        %v1797 = vshrl.u32 %v1796, 7
        %v1798 = vsub.s32 %v1795, %v1797
        %v1799 = vrot.slane %v1785, %v1798
        %v1800 = vcombine.low %v1792, %v1799
        %v1801 = vcombine.low %v1190, %v1194
        %v1802 = vcombine.low %v1198, %v1202
        %v1803 = vcombine.low %v1206, %v1210
        %v1804 = vcombine.low %v1214, %v1218
        %v1806 = vunpack.c.l.s4 1966171168
        %v1807 = vunpack.c.0.s8 %v1806
        %v1808 = vlaneseq
        %v1809 = vshrl.u32 %v1808, 7
        %v1810 = vsub.s32 %v1807, %v1809
        %v1811 = vrot.slane %v1801, %v1810
        %v1813 = vunpack.c.l.s4 1966171168
        %v1814 = vunpack.c.0.s8 %v1813
        %v1815 = vlaneseq
        %v1816 = vshrl.u32 %v1815, 7
        %v1817 = vsub.s32 %v1814, %v1816
        %v1818 = vrot.slane %v1802, %v1817
        %v1820 = vunpack.c.l.s4 1966171168
        %v1821 = vunpack.c.0.s8 %v1820
        %v1822 = vlaneseq
        %v1823 = vshrl.u32 %v1822, 7
        %v1824 = vsub.s32 %v1821, %v1823
        %v1825 = vrot.slane %v1803, %v1824
        %v1827 = vunpack.c.l.s4 1966171168
        %v1828 = vunpack.c.0.s8 %v1827
        %v1829 = vlaneseq
        %v1830 = vshrl.u32 %v1829, 7
        %v1831 = vsub.s32 %v1828, %v1830
        %v1832 = vrot.slane %v1804, %v1831
        %v1833 = vcombine.low %v1811, %v1818
        %v1834 = vcombine.low %v1825, %v1832
        %v1836 = vunpack.c.l.s4 1966171168
        %v1837 = vunpack.c.0.s8 %v1836
        %v1838 = vlaneseq
        %v1839 = vshrl.u32 %v1838, 7
        %v1840 = vsub.s32 %v1837, %v1839
        %v1841 = vrot.slane %v1833, %v1840
        %v1843 = vunpack.c.l.s4 1966171168
        %v1844 = vunpack.c.0.s8 %v1843
        %v1845 = vlaneseq
        %v1846 = vshrl.u32 %v1845, 7
        %v1847 = vsub.s32 %v1844, %v1846
        %v1848 = vrot.slane %v1834, %v1847
        %v1849 = vcombine.low %v1841, %v1848
        %v1850 = vcombine.low %v1222, %v1226
        %v1851 = vcombine.low %v1230, %v1234
        %v1852 = vcombine.low %v1238, %v1242
        %v1853 = vcombine.low %v1246, %v1250
        %v1855 = vunpack.c.l.s4 1966171168
        %v1856 = vunpack.c.0.s8 %v1855
        %v1857 = vlaneseq
        %v1858 = vshrl.u32 %v1857, 7
        %v1859 = vsub.s32 %v1856, %v1858
        %v1860 = vrot.slane %v1850, %v1859
        %v1862 = vunpack.c.l.s4 1966171168
        %v1863 = vunpack.c.0.s8 %v1862
        %v1864 = vlaneseq
        %v1865 = vshrl.u32 %v1864, 7
        %v1866 = vsub.s32 %v1863, %v1865
        %v1867 = vrot.slane %v1851, %v1866
        %v1869 = vunpack.c.l.s4 1966171168
        %v1870 = vunpack.c.0.s8 %v1869
        %v1871 = vlaneseq
        %v1872 = vshrl.u32 %v1871, 7
        %v1873 = vsub.s32 %v1870, %v1872
        %v1874 = vrot.slane %v1852, %v1873
        %v1876 = vunpack.c.l.s4 1966171168
        %v1877 = vunpack.c.0.s8 %v1876
        %v1878 = vlaneseq
        %v1879 = vshrl.u32 %v1878, 7
        %v1880 = vsub.s32 %v1877, %v1879
        %v1881 = vrot.slane %v1853, %v1880
        %v1882 = vcombine.low %v1860, %v1867
        %v1883 = vcombine.low %v1874, %v1881
        %v1885 = vunpack.c.l.s4 1966171168
        %v1886 = vunpack.c.0.s8 %v1885
        %v1887 = vlaneseq
        %v1888 = vshrl.u32 %v1887, 7
        %v1889 = vsub.s32 %v1886, %v1888
        %v1890 = vrot.slane %v1882, %v1889
        %v1892 = vunpack.c.l.s4 1966171168
        %v1893 = vunpack.c.0.s8 %v1892
        %v1894 = vlaneseq
        %v1895 = vshrl.u32 %v1894, 7
        %v1896 = vsub.s32 %v1893, %v1895
        %v1897 = vrot.slane %v1883, %v1896
        %v1898 = vcombine.low %v1890, %v1897
        %v1899 = vcombine.low %v1254, %v1258
        %v1900 = vcombine.low %v1262, %v1266
        %v1901 = vcombine.low %v1270, %v1274
        %v1902 = vcombine.low %v1278, %v1282
        %v1904 = vunpack.c.l.s4 1966171168
        %v1905 = vunpack.c.0.s8 %v1904
        %v1906 = vlaneseq
        %v1907 = vshrl.u32 %v1906, 7
        %v1908 = vsub.s32 %v1905, %v1907
        %v1909 = vrot.slane %v1899, %v1908
        %v1911 = vunpack.c.l.s4 1966171168
        %v1912 = vunpack.c.0.s8 %v1911
        %v1913 = vlaneseq
        %v1914 = vshrl.u32 %v1913, 7
        %v1915 = vsub.s32 %v1912, %v1914
        %v1916 = vrot.slane %v1900, %v1915
        %v1918 = vunpack.c.l.s4 1966171168
        %v1919 = vunpack.c.0.s8 %v1918
        %v1920 = vlaneseq
        %v1921 = vshrl.u32 %v1920, 7
        %v1922 = vsub.s32 %v1919, %v1921
        %v1923 = vrot.slane %v1901, %v1922
        %v1925 = vunpack.c.l.s4 1966171168
        %v1926 = vunpack.c.0.s8 %v1925
        %v1927 = vlaneseq
        %v1928 = vshrl.u32 %v1927, 7
        %v1929 = vsub.s32 %v1926, %v1928
        %v1930 = vrot.slane %v1902, %v1929
        %v1931 = vcombine.low %v1909, %v1916
        %v1932 = vcombine.low %v1923, %v1930
        %v1934 = vunpack.c.l.s4 1966171168
        %v1935 = vunpack.c.0.s8 %v1934
        %v1936 = vlaneseq
        %v1937 = vshrl.u32 %v1936, 7
        %v1938 = vsub.s32 %v1935, %v1937
        %v1939 = vrot.slane %v1931, %v1938
        %v1941 = vunpack.c.l.s4 1966171168
        %v1942 = vunpack.c.0.s8 %v1941
        %v1943 = vlaneseq
        %v1944 = vshrl.u32 %v1943, 7
        %v1945 = vsub.s32 %v1942, %v1944
        %v1946 = vrot.slane %v1932, %v1945
        %v1947 = vcombine.low %v1939, %v1946
        %v1948 = vcombine.low %v1286, %v1290
        %v1949 = vcombine.low %v1294, %v1298
        %v1950 = vcombine.low %v1302, %v1306
        %v1951 = vcombine.low %v1310, %v1314
        %v1953 = vunpack.c.l.s4 1966171168
        %v1954 = vunpack.c.0.s8 %v1953
        %v1955 = vlaneseq
        %v1956 = vshrl.u32 %v1955, 7
        %v1957 = vsub.s32 %v1954, %v1956
        %v1958 = vrot.slane %v1948, %v1957
        %v1960 = vunpack.c.l.s4 1966171168
        %v1961 = vunpack.c.0.s8 %v1960
        %v1962 = vlaneseq
        %v1963 = vshrl.u32 %v1962, 7
        %v1964 = vsub.s32 %v1961, %v1963
        %v1965 = vrot.slane %v1949, %v1964
        %v1967 = vunpack.c.l.s4 1966171168
        %v1968 = vunpack.c.0.s8 %v1967
        %v1969 = vlaneseq
        %v1970 = vshrl.u32 %v1969, 7
        %v1971 = vsub.s32 %v1968, %v1970
        %v1972 = vrot.slane %v1950, %v1971
        %v1974 = vunpack.c.l.s4 1966171168
        %v1975 = vunpack.c.0.s8 %v1974
        %v1976 = vlaneseq
        %v1977 = vshrl.u32 %v1976, 7
        %v1978 = vsub.s32 %v1975, %v1977
        %v1979 = vrot.slane %v1951, %v1978
        %v1980 = vcombine.low %v1958, %v1965
        %v1981 = vcombine.low %v1972, %v1979
        %v1983 = vunpack.c.l.s4 1966171168
        %v1984 = vunpack.c.0.s8 %v1983
        %v1985 = vlaneseq
        %v1986 = vshrl.u32 %v1985, 7
        %v1987 = vsub.s32 %v1984, %v1986
        %v1988 = vrot.slane %v1980, %v1987
        %v1990 = vunpack.c.l.s4 1966171168
        %v1991 = vunpack.c.0.s8 %v1990
        %v1992 = vlaneseq
        %v1993 = vshrl.u32 %v1992, 7
        %v1994 = vsub.s32 %v1991, %v1993
        %v1995 = vrot.slane %v1981, %v1994
        %v1996 = vcombine.low %v1988, %v1995
        %v1997 = vcombine.low %v1318, %v1322
        %v1998 = vcombine.low %v1326, %v1330
        %v1999 = vcombine.low %v1334, %v1338
        %v2000 = vcombine.low %v1342, %v1346
        %v2002 = vunpack.c.l.s4 1966171168
        %v2003 = vunpack.c.0.s8 %v2002
        %v2004 = vlaneseq
        %v2005 = vshrl.u32 %v2004, 7
        %v2006 = vsub.s32 %v2003, %v2005
        %v2007 = vrot.slane %v1997, %v2006
        %v2009 = vunpack.c.l.s4 1966171168
        %v2010 = vunpack.c.0.s8 %v2009
        %v2011 = vlaneseq
        %v2012 = vshrl.u32 %v2011, 7
        %v2013 = vsub.s32 %v2010, %v2012
        %v2014 = vrot.slane %v1998, %v2013
        %v2016 = vunpack.c.l.s4 1966171168
        %v2017 = vunpack.c.0.s8 %v2016
        %v2018 = vlaneseq
        %v2019 = vshrl.u32 %v2018, 7
        %v2020 = vsub.s32 %v2017, %v2019
        %v2021 = vrot.slane %v1999, %v2020
        %v2023 = vunpack.c.l.s4 1966171168
        %v2024 = vunpack.c.0.s8 %v2023
        %v2025 = vlaneseq
        %v2026 = vshrl.u32 %v2025, 7
        %v2027 = vsub.s32 %v2024, %v2026
        %v2028 = vrot.slane %v2000, %v2027
        %v2029 = vcombine.low %v2007, %v2014
        %v2030 = vcombine.low %v2021, %v2028
        %v2032 = vunpack.c.l.s4 1966171168
        %v2033 = vunpack.c.0.s8 %v2032
        %v2034 = vlaneseq
        %v2035 = vshrl.u32 %v2034, 7
        %v2036 = vsub.s32 %v2033, %v2035
        %v2037 = vrot.slane %v2029, %v2036
        %v2039 = vunpack.c.l.s4 1966171168
        %v2040 = vunpack.c.0.s8 %v2039
        %v2041 = vlaneseq
        %v2042 = vshrl.u32 %v2041, 7
        %v2043 = vsub.s32 %v2040, %v2042
        %v2044 = vrot.slane %v2030, %v2043
        %v2045 = vcombine.low %v2037, %v2044
        %v2046 = vcombine.low %v1350, %v1354
        %v2047 = vcombine.low %v1358, %v1362
        %v2048 = vcombine.low %v1366, %v1370
        %v2049 = vcombine.low %v1374, %v1378
        %v2051 = vunpack.c.l.s4 1966171168
        %v2052 = vunpack.c.0.s8 %v2051
        %v2053 = vlaneseq
        %v2054 = vshrl.u32 %v2053, 7
        %v2055 = vsub.s32 %v2052, %v2054
        %v2056 = vrot.slane %v2046, %v2055
        %v2058 = vunpack.c.l.s4 1966171168
        %v2059 = vunpack.c.0.s8 %v2058
        %v2060 = vlaneseq
        %v2061 = vshrl.u32 %v2060, 7
        %v2062 = vsub.s32 %v2059, %v2061
        %v2063 = vrot.slane %v2047, %v2062
        %v2065 = vunpack.c.l.s4 1966171168
        %v2066 = vunpack.c.0.s8 %v2065
        %v2067 = vlaneseq
        %v2068 = vshrl.u32 %v2067, 7
        %v2069 = vsub.s32 %v2066, %v2068
        %v2070 = vrot.slane %v2048, %v2069
        %v2072 = vunpack.c.l.s4 1966171168
        %v2073 = vunpack.c.0.s8 %v2072
        %v2074 = vlaneseq
        %v2075 = vshrl.u32 %v2074, 7
        %v2076 = vsub.s32 %v2073, %v2075
        %v2077 = vrot.slane %v2049, %v2076
        %v2078 = vcombine.low %v2056, %v2063
        %v2079 = vcombine.low %v2070, %v2077
        %v2081 = vunpack.c.l.s4 1966171168
        %v2082 = vunpack.c.0.s8 %v2081
        %v2083 = vlaneseq
        %v2084 = vshrl.u32 %v2083, 7
        %v2085 = vsub.s32 %v2082, %v2084
        %v2086 = vrot.slane %v2078, %v2085
        %v2088 = vunpack.c.l.s4 1966171168
        %v2089 = vunpack.c.0.s8 %v2088
        %v2090 = vlaneseq
        %v2091 = vshrl.u32 %v2090, 7
        %v2092 = vsub.s32 %v2089, %v2091
        %v2093 = vrot.slane %v2079, %v2092
        %v2094 = vcombine.low %v2086, %v2093
        %v2095 = vcombine.low %v1382, %v1386
        %v2096 = vcombine.low %v1390, %v1394
        %v2097 = vcombine.low %v1398, %v1402
        %v2098 = vcombine.low %v1406, %v1410
        %v2100 = vunpack.c.l.s4 1966171168
        %v2101 = vunpack.c.0.s8 %v2100
        %v2102 = vlaneseq
        %v2103 = vshrl.u32 %v2102, 7
        %v2104 = vsub.s32 %v2101, %v2103
        %v2105 = vrot.slane %v2095, %v2104
        %v2107 = vunpack.c.l.s4 1966171168
        %v2108 = vunpack.c.0.s8 %v2107
        %v2109 = vlaneseq
        %v2110 = vshrl.u32 %v2109, 7
        %v2111 = vsub.s32 %v2108, %v2110
        %v2112 = vrot.slane %v2096, %v2111
        %v2114 = vunpack.c.l.s4 1966171168
        %v2115 = vunpack.c.0.s8 %v2114
        %v2116 = vlaneseq
        %v2117 = vshrl.u32 %v2116, 7
        %v2118 = vsub.s32 %v2115, %v2117
        %v2119 = vrot.slane %v2097, %v2118
        %v2121 = vunpack.c.l.s4 1966171168
        %v2122 = vunpack.c.0.s8 %v2121
        %v2123 = vlaneseq
        %v2124 = vshrl.u32 %v2123, 7
        %v2125 = vsub.s32 %v2122, %v2124
        %v2126 = vrot.slane %v2098, %v2125
        %v2127 = vcombine.low %v2105, %v2112
        %v2128 = vcombine.low %v2119, %v2126
        %v2130 = vunpack.c.l.s4 1966171168
        %v2131 = vunpack.c.0.s8 %v2130
        %v2132 = vlaneseq
        %v2133 = vshrl.u32 %v2132, 7
        %v2134 = vsub.s32 %v2131, %v2133
        %v2135 = vrot.slane %v2127, %v2134
        %v2137 = vunpack.c.l.s4 1966171168
        %v2138 = vunpack.c.0.s8 %v2137
        %v2139 = vlaneseq
        %v2140 = vshrl.u32 %v2139, 7
        %v2141 = vsub.s32 %v2138, %v2140
        %v2142 = vrot.slane %v2128, %v2141
        %v2143 = vcombine.low %v2135, %v2142
        %v2144 = vcombine.low %v1414, %v1418
        %v2145 = vcombine.low %v1422, %v1426
        %v2146 = vcombine.low %v1430, %v1434
        %v2147 = vcombine.low %v1438, %v1442
        %v2149 = vunpack.c.l.s4 1966171168
        %v2150 = vunpack.c.0.s8 %v2149
        %v2151 = vlaneseq
        %v2152 = vshrl.u32 %v2151, 7
        %v2153 = vsub.s32 %v2150, %v2152
        %v2154 = vrot.slane %v2144, %v2153
        %v2156 = vunpack.c.l.s4 1966171168
        %v2157 = vunpack.c.0.s8 %v2156
        %v2158 = vlaneseq
        %v2159 = vshrl.u32 %v2158, 7
        %v2160 = vsub.s32 %v2157, %v2159
        %v2161 = vrot.slane %v2145, %v2160
        %v2163 = vunpack.c.l.s4 1966171168
        %v2164 = vunpack.c.0.s8 %v2163
        %v2165 = vlaneseq
        %v2166 = vshrl.u32 %v2165, 7
        %v2167 = vsub.s32 %v2164, %v2166
        %v2168 = vrot.slane %v2146, %v2167
        %v2170 = vunpack.c.l.s4 1966171168
        %v2171 = vunpack.c.0.s8 %v2170
        %v2172 = vlaneseq
        %v2173 = vshrl.u32 %v2172, 7
        %v2174 = vsub.s32 %v2171, %v2173
        %v2175 = vrot.slane %v2147, %v2174
        %v2176 = vcombine.low %v2154, %v2161
        %v2177 = vcombine.low %v2168, %v2175
        %v2179 = vunpack.c.l.s4 1966171168
        %v2180 = vunpack.c.0.s8 %v2179
        %v2181 = vlaneseq
        %v2182 = vshrl.u32 %v2181, 7
        %v2183 = vsub.s32 %v2180, %v2182
        %v2184 = vrot.slane %v2176, %v2183
        %v2186 = vunpack.c.l.s4 1966171168
        %v2187 = vunpack.c.0.s8 %v2186
        %v2188 = vlaneseq
        %v2189 = vshrl.u32 %v2188, 7
        %v2190 = vsub.s32 %v2187, %v2189
        %v2191 = vrot.slane %v2177, %v2190
        %v2192 = vcombine.low %v2184, %v2191
        %v2193 = vcombine.low %v1446, %v1450
        %v2194 = vcombine.low %v1454, %v1458
        %v2195 = vcombine.low %v1462, %v1466
        %v2196 = vcombine.low %v1470, %v1474
        %v2198 = vunpack.c.l.s4 1966171168
        %v2199 = vunpack.c.0.s8 %v2198
        %v2200 = vlaneseq
        %v2201 = vshrl.u32 %v2200, 7
        %v2202 = vsub.s32 %v2199, %v2201
        %v2203 = vrot.slane %v2193, %v2202
        %v2205 = vunpack.c.l.s4 1966171168
        %v2206 = vunpack.c.0.s8 %v2205
        %v2207 = vlaneseq
        %v2208 = vshrl.u32 %v2207, 7
        %v2209 = vsub.s32 %v2206, %v2208
        %v2210 = vrot.slane %v2194, %v2209
        %v2212 = vunpack.c.l.s4 1966171168
        %v2213 = vunpack.c.0.s8 %v2212
        %v2214 = vlaneseq
        %v2215 = vshrl.u32 %v2214, 7
        %v2216 = vsub.s32 %v2213, %v2215
        %v2217 = vrot.slane %v2195, %v2216
        %v2219 = vunpack.c.l.s4 1966171168
        %v2220 = vunpack.c.0.s8 %v2219
        %v2221 = vlaneseq
        %v2222 = vshrl.u32 %v2221, 7
        %v2223 = vsub.s32 %v2220, %v2222
        %v2224 = vrot.slane %v2196, %v2223
        %v2225 = vcombine.low %v2203, %v2210
        %v2226 = vcombine.low %v2217, %v2224
        %v2228 = vunpack.c.l.s4 1966171168
        %v2229 = vunpack.c.0.s8 %v2228
        %v2230 = vlaneseq
        %v2231 = vshrl.u32 %v2230, 7
        %v2232 = vsub.s32 %v2229, %v2231
        %v2233 = vrot.slane %v2225, %v2232
        %v2235 = vunpack.c.l.s4 1966171168
        %v2236 = vunpack.c.0.s8 %v2235
        %v2237 = vlaneseq
        %v2238 = vshrl.u32 %v2237, 7
        %v2239 = vsub.s32 %v2236, %v2238
        %v2240 = vrot.slane %v2226, %v2239
        %v2241 = vcombine.low %v2233, %v2240
        %v2242 = vcombine.low %v1478, %v1482
        %v2243 = vcombine.low %v1486, %v1490
        %v2244 = vcombine.low %v1494, %v1498
        %v2245 = vcombine.low %v1502, %v1506
        %v2247 = vunpack.c.l.s4 1966171168
        %v2248 = vunpack.c.0.s8 %v2247
        %v2249 = vlaneseq
        %v2250 = vshrl.u32 %v2249, 7
        %v2251 = vsub.s32 %v2248, %v2250
        %v2252 = vrot.slane %v2242, %v2251
        %v2254 = vunpack.c.l.s4 1966171168
        %v2255 = vunpack.c.0.s8 %v2254
        %v2256 = vlaneseq
        %v2257 = vshrl.u32 %v2256, 7
        %v2258 = vsub.s32 %v2255, %v2257
        %v2259 = vrot.slane %v2243, %v2258
        %v2261 = vunpack.c.l.s4 1966171168
        %v2262 = vunpack.c.0.s8 %v2261
        %v2263 = vlaneseq
        %v2264 = vshrl.u32 %v2263, 7
        %v2265 = vsub.s32 %v2262, %v2264
        %v2266 = vrot.slane %v2244, %v2265
        %v2268 = vunpack.c.l.s4 1966171168
        %v2269 = vunpack.c.0.s8 %v2268
        %v2270 = vlaneseq
        %v2271 = vshrl.u32 %v2270, 7
        %v2272 = vsub.s32 %v2269, %v2271
        %v2273 = vrot.slane %v2245, %v2272
        %v2274 = vcombine.low %v2252, %v2259
        %v2275 = vcombine.low %v2266, %v2273
        %v2277 = vunpack.c.l.s4 1966171168
        %v2278 = vunpack.c.0.s8 %v2277
        %v2279 = vlaneseq
        %v2280 = vshrl.u32 %v2279, 7
        %v2281 = vsub.s32 %v2278, %v2280
        %v2282 = vrot.slane %v2274, %v2281
        %v2284 = vunpack.c.l.s4 1966171168
        %v2285 = vunpack.c.0.s8 %v2284
        %v2286 = vlaneseq
        %v2287 = vshrl.u32 %v2286, 7
        %v2288 = vsub.s32 %v2285, %v2287
        %v2289 = vrot.slane %v2275, %v2288
        %v2290 = vcombine.low %v2282, %v2289
        %2291 = vset.pattern.permute.xlu0 0
        %2292 = vperm.xlu0 %2291, %v1555
        %v2293 = vpop.permute.xlu0 %2292
        %2294 = vset.pattern.permute.xlu0 0
        %2295 = vperm.xlu0 %2294, %v1604
        %v2296 = vpop.permute.xlu0 %2295
        %2297 = vset.pattern.permute.xlu0 0
        %2298 = vperm.xlu0 %2297, %v1653
        %v2299 = vpop.permute.xlu0 %2298
        %2300 = vset.pattern.permute.xlu0 0
        %2301 = vperm.xlu0 %2300, %v1702
        %v2302 = vpop.permute.xlu0 %2301
        %2303 = vset.pattern.permute.xlu0 0
        %2304 = vperm.xlu0 %2303, %v1751
        %v2305 = vpop.permute.xlu0 %2304
        %2306 = vset.pattern.permute.xlu0 0
        %2307 = vperm.xlu0 %2306, %v1800
        %v2308 = vpop.permute.xlu0 %2307
        %2309 = vset.pattern.permute.xlu0 0
        %2310 = vperm.xlu0 %2309, %v1849
        %v2311 = vpop.permute.xlu0 %2310
        %2312 = vset.pattern.permute.xlu0 0
        %2313 = vperm.xlu0 %2312, %v1898
        %v2314 = vpop.permute.xlu0 %2313
        %2315 = vset.pattern.permute.xlu0 0
        %2316 = vperm.xlu0 %2315, %v1947
        %v2317 = vpop.permute.xlu0 %2316
        %2318 = vset.pattern.permute.xlu0 0
        %2319 = vperm.xlu0 %2318, %v1996
        %v2320 = vpop.permute.xlu0 %2319
        %2321 = vset.pattern.permute.xlu0 0
        %2322 = vperm.xlu0 %2321, %v2045
        %v2323 = vpop.permute.xlu0 %2322
        %2324 = vset.pattern.permute.xlu0 0
        %2325 = vperm.xlu0 %2324, %v2094
        %v2326 = vpop.permute.xlu0 %2325
        %2327 = vset.pattern.permute.xlu0 0
        %2328 = vperm.xlu0 %2327, %v2143
        %v2329 = vpop.permute.xlu0 %2328
        %2330 = vset.pattern.permute.xlu0 0
        %2331 = vperm.xlu0 %2330, %v2192
        %v2332 = vpop.permute.xlu0 %2331
        %2333 = vset.pattern.permute.xlu0 0
        %2334 = vperm.xlu0 %2333, %v2241
        %v2335 = vpop.permute.xlu0 %2334
        %2336 = vset.pattern.permute.xlu0 0
        %2337 = vperm.xlu0 %2336, %v2290
        %v2338 = vpop.permute.xlu0 %2337
        %v2339 = vlaneseq
        %v2340 = vand.u32 %v2339, 127
        %v2341 = vlaneseq
        %v2342 = vshrl.u32 %v2341, 7
        %v2343 = vsub.s32 %v2340, %v2342
        %v2344 = vrot.slane %v2293, %v2343
        %v2345 = vadd.s32 %v2340, 4294967288
        %v2346 = vlaneseq
        %v2347 = vshrl.u32 %v2346, 7
        %v2348 = vsub.s32 %v2345, %v2347
        %v2349 = vrot.slane %v2296, %v2348
        %vm2350 = vcmask 130112
        %v2351 = vsel %vm2350, %v2349, %v2344
        %v2352 = vadd.s32 %v2340, 4294967280
        %v2353 = vlaneseq
        %v2354 = vshrl.u32 %v2353, 7
        %v2355 = vsub.s32 %v2352, %v2354
        %v2356 = vrot.slane %v2299, %v2355
        %vm2357 = vcmask 195712
        %v2358 = vsel %vm2357, %v2356, %v2351
        %v2359 = vadd.s32 %v2340, 4294967272
        %v2360 = vlaneseq
        %v2361 = vshrl.u32 %v2360, 7
        %v2362 = vsub.s32 %v2359, %v2361
        %v2363 = vrot.slane %v2302, %v2362
        %vm2364 = vcmask 261312
        %v2365 = vsel %vm2364, %v2363, %v2358
        %v2366 = vadd.s32 %v2340, 4294967264
        %v2367 = vlaneseq
        %v2368 = vshrl.u32 %v2367, 7
        %v2369 = vsub.s32 %v2366, %v2368
        %v2370 = vrot.slane %v2305, %v2369
        %vm2371 = vcmask 326912
        %v2372 = vsel %vm2371, %v2370, %v2365
        %v2373 = vadd.s32 %v2340, 4294967256
        %v2374 = vlaneseq
        %v2375 = vshrl.u32 %v2374, 7
        %v2376 = vsub.s32 %v2373, %v2375
        %v2377 = vrot.slane %v2308, %v2376
        %vm2378 = vcmask 392512
        %v2379 = vsel %vm2378, %v2377, %v2372
        %v2380 = vadd.s32 %v2340, 4294967248
        %v2381 = vlaneseq
        %v2382 = vshrl.u32 %v2381, 7
        %v2383 = vsub.s32 %v2380, %v2382
        %v2384 = vrot.slane %v2311, %v2383
        %vm2385 = vcmask 458112
        %v2386 = vsel %vm2385, %v2384, %v2379
        %v2387 = vadd.s32 %v2340, 4294967240
        %v2388 = vlaneseq
        %v2389 = vshrl.u32 %v2388, 7
        %v2390 = vsub.s32 %v2387, %v2389
        %v2391 = vrot.slane %v2314, %v2390
        %vm2392 = vcmask 523712
        %v2393 = vsel %vm2392, %v2391, %v2386
        %v2394 = vadd.s32 %v2340, 4294967232
        %v2395 = vlaneseq
        %v2396 = vshrl.u32 %v2395, 7
        %v2397 = vsub.s32 %v2394, %v2396
        %v2398 = vrot.slane %v2317, %v2397
        %vm2399 = vcmask 589312
        %v2400 = vsel %vm2399, %v2398, %v2393
        %v2401 = vadd.s32 %v2340, 4294967224
        %v2402 = vlaneseq
        %v2403 = vshrl.u32 %v2402, 7
        %v2404 = vsub.s32 %v2401, %v2403
        %v2405 = vrot.slane %v2320, %v2404
        %vm2406 = vcmask 654912
        %v2407 = vsel %vm2406, %v2405, %v2400
        %v2408 = vadd.s32 %v2340, 4294967216
        %v2409 = vlaneseq
        %v2410 = vshrl.u32 %v2409, 7
        %v2411 = vsub.s32 %v2408, %v2410
        %v2412 = vrot.slane %v2323, %v2411
        %vm2413 = vcmask 720512
        %v2414 = vsel %vm2413, %v2412, %v2407
        %v2415 = vadd.s32 %v2340, 4294967208
        %v2416 = vlaneseq
        %v2417 = vshrl.u32 %v2416, 7
        %v2418 = vsub.s32 %v2415, %v2417
        %v2419 = vrot.slane %v2326, %v2418
        %vm2420 = vcmask 786112
        %v2421 = vsel %vm2420, %v2419, %v2414
        %v2422 = vadd.s32 %v2340, 4294967200
        %v2423 = vlaneseq
        %v2424 = vshrl.u32 %v2423, 7
        %v2425 = vsub.s32 %v2422, %v2424
        %v2426 = vrot.slane %v2329, %v2425
        %vm2427 = vcmask 851712
        %v2428 = vsel %vm2427, %v2426, %v2421
        %v2429 = vadd.s32 %v2340, 4294967192
        %v2430 = vlaneseq
        %v2431 = vshrl.u32 %v2430, 7
        %v2432 = vsub.s32 %v2429, %v2431
        %v2433 = vrot.slane %v2332, %v2432
        %vm2434 = vcmask 917312
        %v2435 = vsel %vm2434, %v2433, %v2428
        %v2436 = vadd.s32 %v2340, 4294967184
        %v2437 = vlaneseq
        %v2438 = vshrl.u32 %v2437, 7
        %v2439 = vsub.s32 %v2436, %v2438
        %v2440 = vrot.slane %v2335, %v2439
        %vm2441 = vcmask 982912
        %v2442 = vsel %vm2441, %v2440, %v2435
        %v2443 = vadd.s32 %v2340, 4294967176
        %v2444 = vlaneseq
        %v2445 = vshrl.u32 %v2444, 7
        %v2446 = vsub.s32 %v2443, %v2445
        %v2447 = vrot.slane %v2338, %v2446
        %vm2448 = vcmask 1048512
        %v2449 = vsel %vm2448, %v2447, %v2442
        %v2451 = vunpack.c.l.s4 1966171168
        %v2452 = vunpack.c.0.s8 %v2451
        %v2453 = vlaneseq
        %v2454 = vshrl.u32 %v2453, 7
        %v2455 = vsub.s32 %v2452, %v2454
        %v2456 = vrot.slane %v2449, %v2455
        %v2458 = vunpack.c.l.s4 1966171168
        %v2459 = vunpack.c.0.s8 %v2458
        %v2460 = vlaneseq
        %v2461 = vshrl.u32 %v2460, 7
        %v2462 = vsub.s32 %v2459, %v2461
        %v2463 = vrot.slane %v2456, %v2462
        %v2465 = vadd.f32 %v946, %v2463
        %2466 = vst [vmem:[#allocation4] sm:$0x1] %v2465
        %v2467 = vld [vmem:[#allocation5] sm:$0x1]
        %2468 = vadd.xlane.f32.xlu0 %v598
        %v2469 = vpop.xlane.xlu0 %2468
        %2470 = vadd.xlane.f32.xlu0 %v599
        %v2471 = vpop.xlane.xlu0 %2470
        %2472 = vadd.xlane.f32.xlu0 %v600
        %v2473 = vpop.xlane.xlu0 %2472
        %2474 = vadd.xlane.f32.xlu0 %v601
        %v2475 = vpop.xlane.xlu0 %2474
        %2476 = vadd.xlane.f32.xlu0 %v602
        %v2477 = vpop.xlane.xlu0 %2476
        %2478 = vadd.xlane.f32.xlu0 %v603
        %v2479 = vpop.xlane.xlu0 %2478
        %2480 = vadd.xlane.f32.xlu0 %v604
        %v2481 = vpop.xlane.xlu0 %2480
        %2482 = vadd.xlane.f32.xlu0 %v605
        %v2483 = vpop.xlane.xlu0 %2482
        %2484 = vadd.xlane.f32.xlu0 %v606
        %v2485 = vpop.xlane.xlu0 %2484
        %2486 = vadd.xlane.f32.xlu0 %v607
        %v2487 = vpop.xlane.xlu0 %2486
        %2488 = vadd.xlane.f32.xlu0 %v608
        %v2489 = vpop.xlane.xlu0 %2488
        %2490 = vadd.xlane.f32.xlu0 %v609
        %v2491 = vpop.xlane.xlu0 %2490
        %2492 = vadd.xlane.f32.xlu0 %v610
        %v2493 = vpop.xlane.xlu0 %2492
        %2494 = vadd.xlane.f32.xlu0 %v611
        %v2495 = vpop.xlane.xlu0 %2494
        %2496 = vadd.xlane.f32.xlu0 %v612
        %v2497 = vpop.xlane.xlu0 %2496
        %2498 = vadd.xlane.f32.xlu0 %v613
        %v2499 = vpop.xlane.xlu0 %2498
        %v2516 = vlaneseq
        %v2517 = vshrl.u32 %v2516, 7
        %v2518 = vsub.s32 0, %v2517
        %v2519 = vrot.slane %v2469, %v2518
        %v2520 = vlaneseq
        %v2521 = vshrl.u32 %v2520, 7
        %v2522 = vsub.s32 1, %v2521
        %v2523 = vrot.slane %v2469, %v2522
        %v2524 = vlaneseq
        %v2525 = vshrl.u32 %v2524, 7
        %v2526 = vsub.s32 2, %v2525
        %v2527 = vrot.slane %v2469, %v2526
        %v2528 = vlaneseq
        %v2529 = vshrl.u32 %v2528, 7
        %v2530 = vsub.s32 3, %v2529
        %v2531 = vrot.slane %v2469, %v2530
        %v2532 = vlaneseq
        %v2533 = vshrl.u32 %v2532, 7
        %v2534 = vsub.s32 4, %v2533
        %v2535 = vrot.slane %v2469, %v2534
        %v2536 = vlaneseq
        %v2537 = vshrl.u32 %v2536, 7
        %v2538 = vsub.s32 5, %v2537
        %v2539 = vrot.slane %v2469, %v2538
        %v2540 = vlaneseq
        %v2541 = vshrl.u32 %v2540, 7
        %v2542 = vsub.s32 6, %v2541
        %v2543 = vrot.slane %v2469, %v2542
        %v2544 = vlaneseq
        %v2545 = vshrl.u32 %v2544, 7
        %v2546 = vsub.s32 7, %v2545
        %v2547 = vrot.slane %v2469, %v2546
        %v2548 = vlaneseq
        %v2549 = vshrl.u32 %v2548, 7
        %v2550 = vsub.s32 0, %v2549
        %v2551 = vrot.slane %v2471, %v2550
        %v2552 = vlaneseq
        %v2553 = vshrl.u32 %v2552, 7
        %v2554 = vsub.s32 1, %v2553
        %v2555 = vrot.slane %v2471, %v2554
        %v2556 = vlaneseq
        %v2557 = vshrl.u32 %v2556, 7
        %v2558 = vsub.s32 2, %v2557
        %v2559 = vrot.slane %v2471, %v2558
        %v2560 = vlaneseq
        %v2561 = vshrl.u32 %v2560, 7
        %v2562 = vsub.s32 3, %v2561
        %v2563 = vrot.slane %v2471, %v2562
        %v2564 = vlaneseq
        %v2565 = vshrl.u32 %v2564, 7
        %v2566 = vsub.s32 4, %v2565
        %v2567 = vrot.slane %v2471, %v2566
        %v2568 = vlaneseq
        %v2569 = vshrl.u32 %v2568, 7
        %v2570 = vsub.s32 5, %v2569
        %v2571 = vrot.slane %v2471, %v2570
        %v2572 = vlaneseq
        %v2573 = vshrl.u32 %v2572, 7
        %v2574 = vsub.s32 6, %v2573
        %v2575 = vrot.slane %v2471, %v2574
        %v2576 = vlaneseq
        %v2577 = vshrl.u32 %v2576, 7
        %v2578 = vsub.s32 7, %v2577
        %v2579 = vrot.slane %v2471, %v2578
        %v2580 = vlaneseq
        %v2581 = vshrl.u32 %v2580, 7
        %v2582 = vsub.s32 0, %v2581
        %v2583 = vrot.slane %v2473, %v2582
        %v2584 = vlaneseq
        %v2585 = vshrl.u32 %v2584, 7
        %v2586 = vsub.s32 1, %v2585
        %v2587 = vrot.slane %v2473, %v2586
        %v2588 = vlaneseq
        %v2589 = vshrl.u32 %v2588, 7
        %v2590 = vsub.s32 2, %v2589
        %v2591 = vrot.slane %v2473, %v2590
        %v2592 = vlaneseq
        %v2593 = vshrl.u32 %v2592, 7
        %v2594 = vsub.s32 3, %v2593
        %v2595 = vrot.slane %v2473, %v2594
        %v2596 = vlaneseq
        %v2597 = vshrl.u32 %v2596, 7
        %v2598 = vsub.s32 4, %v2597
        %v2599 = vrot.slane %v2473, %v2598
        %v2600 = vlaneseq
        %v2601 = vshrl.u32 %v2600, 7
        %v2602 = vsub.s32 5, %v2601
        %v2603 = vrot.slane %v2473, %v2602
        %v2604 = vlaneseq
        %v2605 = vshrl.u32 %v2604, 7
        %v2606 = vsub.s32 6, %v2605
        %v2607 = vrot.slane %v2473, %v2606
        %v2608 = vlaneseq
        %v2609 = vshrl.u32 %v2608, 7
        %v2610 = vsub.s32 7, %v2609
        %v2611 = vrot.slane %v2473, %v2610
        %v2612 = vlaneseq
        %v2613 = vshrl.u32 %v2612, 7
        %v2614 = vsub.s32 0, %v2613
        %v2615 = vrot.slane %v2475, %v2614
        %v2616 = vlaneseq
        %v2617 = vshrl.u32 %v2616, 7
        %v2618 = vsub.s32 1, %v2617
        %v2619 = vrot.slane %v2475, %v2618
        %v2620 = vlaneseq
        %v2621 = vshrl.u32 %v2620, 7
        %v2622 = vsub.s32 2, %v2621
        %v2623 = vrot.slane %v2475, %v2622
        %v2624 = vlaneseq
        %v2625 = vshrl.u32 %v2624, 7
        %v2626 = vsub.s32 3, %v2625
        %v2627 = vrot.slane %v2475, %v2626
        %v2628 = vlaneseq
        %v2629 = vshrl.u32 %v2628, 7
        %v2630 = vsub.s32 4, %v2629
        %v2631 = vrot.slane %v2475, %v2630
        %v2632 = vlaneseq
        %v2633 = vshrl.u32 %v2632, 7
        %v2634 = vsub.s32 5, %v2633
        %v2635 = vrot.slane %v2475, %v2634
        %v2636 = vlaneseq
        %v2637 = vshrl.u32 %v2636, 7
        %v2638 = vsub.s32 6, %v2637
        %v2639 = vrot.slane %v2475, %v2638
        %v2640 = vlaneseq
        %v2641 = vshrl.u32 %v2640, 7
        %v2642 = vsub.s32 7, %v2641
        %v2643 = vrot.slane %v2475, %v2642
        %v2644 = vlaneseq
        %v2645 = vshrl.u32 %v2644, 7
        %v2646 = vsub.s32 0, %v2645
        %v2647 = vrot.slane %v2477, %v2646
        %v2648 = vlaneseq
        %v2649 = vshrl.u32 %v2648, 7
        %v2650 = vsub.s32 1, %v2649
        %v2651 = vrot.slane %v2477, %v2650
        %v2652 = vlaneseq
        %v2653 = vshrl.u32 %v2652, 7
        %v2654 = vsub.s32 2, %v2653
        %v2655 = vrot.slane %v2477, %v2654
        %v2656 = vlaneseq
        %v2657 = vshrl.u32 %v2656, 7
        %v2658 = vsub.s32 3, %v2657
        %v2659 = vrot.slane %v2477, %v2658
        %v2660 = vlaneseq
        %v2661 = vshrl.u32 %v2660, 7
        %v2662 = vsub.s32 4, %v2661
        %v2663 = vrot.slane %v2477, %v2662
        %v2664 = vlaneseq
        %v2665 = vshrl.u32 %v2664, 7
        %v2666 = vsub.s32 5, %v2665
        %v2667 = vrot.slane %v2477, %v2666
        %v2668 = vlaneseq
        %v2669 = vshrl.u32 %v2668, 7
        %v2670 = vsub.s32 6, %v2669
        %v2671 = vrot.slane %v2477, %v2670
        %v2672 = vlaneseq
        %v2673 = vshrl.u32 %v2672, 7
        %v2674 = vsub.s32 7, %v2673
        %v2675 = vrot.slane %v2477, %v2674
        %v2676 = vlaneseq
        %v2677 = vshrl.u32 %v2676, 7
        %v2678 = vsub.s32 0, %v2677
        %v2679 = vrot.slane %v2479, %v2678
        %v2680 = vlaneseq
        %v2681 = vshrl.u32 %v2680, 7
        %v2682 = vsub.s32 1, %v2681
        %v2683 = vrot.slane %v2479, %v2682
        %v2684 = vlaneseq
        %v2685 = vshrl.u32 %v2684, 7
        %v2686 = vsub.s32 2, %v2685
        %v2687 = vrot.slane %v2479, %v2686
        %v2688 = vlaneseq
        %v2689 = vshrl.u32 %v2688, 7
        %v2690 = vsub.s32 3, %v2689
        %v2691 = vrot.slane %v2479, %v2690
        %v2692 = vlaneseq
        %v2693 = vshrl.u32 %v2692, 7
        %v2694 = vsub.s32 4, %v2693
        %v2695 = vrot.slane %v2479, %v2694
        %v2696 = vlaneseq
        %v2697 = vshrl.u32 %v2696, 7
        %v2698 = vsub.s32 5, %v2697
        %v2699 = vrot.slane %v2479, %v2698
        %v2700 = vlaneseq
        %v2701 = vshrl.u32 %v2700, 7
        %v2702 = vsub.s32 6, %v2701
        %v2703 = vrot.slane %v2479, %v2702
        %v2704 = vlaneseq
        %v2705 = vshrl.u32 %v2704, 7
        %v2706 = vsub.s32 7, %v2705
        %v2707 = vrot.slane %v2479, %v2706
        %v2708 = vlaneseq
        %v2709 = vshrl.u32 %v2708, 7
        %v2710 = vsub.s32 0, %v2709
        %v2711 = vrot.slane %v2481, %v2710
        %v2712 = vlaneseq
        %v2713 = vshrl.u32 %v2712, 7
        %v2714 = vsub.s32 1, %v2713
        %v2715 = vrot.slane %v2481, %v2714
        %v2716 = vlaneseq
        %v2717 = vshrl.u32 %v2716, 7
        %v2718 = vsub.s32 2, %v2717
        %v2719 = vrot.slane %v2481, %v2718
        %v2720 = vlaneseq
        %v2721 = vshrl.u32 %v2720, 7
        %v2722 = vsub.s32 3, %v2721
        %v2723 = vrot.slane %v2481, %v2722
        %v2724 = vlaneseq
        %v2725 = vshrl.u32 %v2724, 7
        %v2726 = vsub.s32 4, %v2725
        %v2727 = vrot.slane %v2481, %v2726
        %v2728 = vlaneseq
        %v2729 = vshrl.u32 %v2728, 7
        %v2730 = vsub.s32 5, %v2729
        %v2731 = vrot.slane %v2481, %v2730
        %v2732 = vlaneseq
        %v2733 = vshrl.u32 %v2732, 7
        %v2734 = vsub.s32 6, %v2733
        %v2735 = vrot.slane %v2481, %v2734
        %v2736 = vlaneseq
        %v2737 = vshrl.u32 %v2736, 7
        %v2738 = vsub.s32 7, %v2737
        %v2739 = vrot.slane %v2481, %v2738
        %v2740 = vlaneseq
        %v2741 = vshrl.u32 %v2740, 7
        %v2742 = vsub.s32 0, %v2741
        %v2743 = vrot.slane %v2483, %v2742
        %v2744 = vlaneseq
        %v2745 = vshrl.u32 %v2744, 7
        %v2746 = vsub.s32 1, %v2745
        %v2747 = vrot.slane %v2483, %v2746
        %v2748 = vlaneseq
        %v2749 = vshrl.u32 %v2748, 7
        %v2750 = vsub.s32 2, %v2749
        %v2751 = vrot.slane %v2483, %v2750
        %v2752 = vlaneseq
        %v2753 = vshrl.u32 %v2752, 7
        %v2754 = vsub.s32 3, %v2753
        %v2755 = vrot.slane %v2483, %v2754
        %v2756 = vlaneseq
        %v2757 = vshrl.u32 %v2756, 7
        %v2758 = vsub.s32 4, %v2757
        %v2759 = vrot.slane %v2483, %v2758
        %v2760 = vlaneseq
        %v2761 = vshrl.u32 %v2760, 7
        %v2762 = vsub.s32 5, %v2761
        %v2763 = vrot.slane %v2483, %v2762
        %v2764 = vlaneseq
        %v2765 = vshrl.u32 %v2764, 7
        %v2766 = vsub.s32 6, %v2765
        %v2767 = vrot.slane %v2483, %v2766
        %v2768 = vlaneseq
        %v2769 = vshrl.u32 %v2768, 7
        %v2770 = vsub.s32 7, %v2769
        %v2771 = vrot.slane %v2483, %v2770
        %v2772 = vlaneseq
        %v2773 = vshrl.u32 %v2772, 7
        %v2774 = vsub.s32 0, %v2773
        %v2775 = vrot.slane %v2485, %v2774
        %v2776 = vlaneseq
        %v2777 = vshrl.u32 %v2776, 7
        %v2778 = vsub.s32 1, %v2777
        %v2779 = vrot.slane %v2485, %v2778
        %v2780 = vlaneseq
        %v2781 = vshrl.u32 %v2780, 7
        %v2782 = vsub.s32 2, %v2781
        %v2783 = vrot.slane %v2485, %v2782
        %v2784 = vlaneseq
        %v2785 = vshrl.u32 %v2784, 7
        %v2786 = vsub.s32 3, %v2785
        %v2787 = vrot.slane %v2485, %v2786
        %v2788 = vlaneseq
        %v2789 = vshrl.u32 %v2788, 7
        %v2790 = vsub.s32 4, %v2789
        %v2791 = vrot.slane %v2485, %v2790
        %v2792 = vlaneseq
        %v2793 = vshrl.u32 %v2792, 7
        %v2794 = vsub.s32 5, %v2793
        %v2795 = vrot.slane %v2485, %v2794
        %v2796 = vlaneseq
        %v2797 = vshrl.u32 %v2796, 7
        %v2798 = vsub.s32 6, %v2797
        %v2799 = vrot.slane %v2485, %v2798
        %v2800 = vlaneseq
        %v2801 = vshrl.u32 %v2800, 7
        %v2802 = vsub.s32 7, %v2801
        %v2803 = vrot.slane %v2485, %v2802
        %v2804 = vlaneseq
        %v2805 = vshrl.u32 %v2804, 7
        %v2806 = vsub.s32 0, %v2805
        %v2807 = vrot.slane %v2487, %v2806
        %v2808 = vlaneseq
        %v2809 = vshrl.u32 %v2808, 7
        %v2810 = vsub.s32 1, %v2809
        %v2811 = vrot.slane %v2487, %v2810
        %v2812 = vlaneseq
        %v2813 = vshrl.u32 %v2812, 7
        %v2814 = vsub.s32 2, %v2813
        %v2815 = vrot.slane %v2487, %v2814
        %v2816 = vlaneseq
        %v2817 = vshrl.u32 %v2816, 7
        %v2818 = vsub.s32 3, %v2817
        %v2819 = vrot.slane %v2487, %v2818
        %v2820 = vlaneseq
        %v2821 = vshrl.u32 %v2820, 7
        %v2822 = vsub.s32 4, %v2821
        %v2823 = vrot.slane %v2487, %v2822
        %v2824 = vlaneseq
        %v2825 = vshrl.u32 %v2824, 7
        %v2826 = vsub.s32 5, %v2825
        %v2827 = vrot.slane %v2487, %v2826
        %v2828 = vlaneseq
        %v2829 = vshrl.u32 %v2828, 7
        %v2830 = vsub.s32 6, %v2829
        %v2831 = vrot.slane %v2487, %v2830
        %v2832 = vlaneseq
        %v2833 = vshrl.u32 %v2832, 7
        %v2834 = vsub.s32 7, %v2833
        %v2835 = vrot.slane %v2487, %v2834
        %v2836 = vlaneseq
        %v2837 = vshrl.u32 %v2836, 7
        %v2838 = vsub.s32 0, %v2837
        %v2839 = vrot.slane %v2489, %v2838
        %v2840 = vlaneseq
        %v2841 = vshrl.u32 %v2840, 7
        %v2842 = vsub.s32 1, %v2841
        %v2843 = vrot.slane %v2489, %v2842
        %v2844 = vlaneseq
        %v2845 = vshrl.u32 %v2844, 7
        %v2846 = vsub.s32 2, %v2845
        %v2847 = vrot.slane %v2489, %v2846
        %v2848 = vlaneseq
        %v2849 = vshrl.u32 %v2848, 7
        %v2850 = vsub.s32 3, %v2849
        %v2851 = vrot.slane %v2489, %v2850
        %v2852 = vlaneseq
        %v2853 = vshrl.u32 %v2852, 7
        %v2854 = vsub.s32 4, %v2853
        %v2855 = vrot.slane %v2489, %v2854
        %v2856 = vlaneseq
        %v2857 = vshrl.u32 %v2856, 7
        %v2858 = vsub.s32 5, %v2857
        %v2859 = vrot.slane %v2489, %v2858
        %v2860 = vlaneseq
        %v2861 = vshrl.u32 %v2860, 7
        %v2862 = vsub.s32 6, %v2861
        %v2863 = vrot.slane %v2489, %v2862
        %v2864 = vlaneseq
        %v2865 = vshrl.u32 %v2864, 7
        %v2866 = vsub.s32 7, %v2865
        %v2867 = vrot.slane %v2489, %v2866
        %v2868 = vlaneseq
        %v2869 = vshrl.u32 %v2868, 7
        %v2870 = vsub.s32 0, %v2869
        %v2871 = vrot.slane %v2491, %v2870
        %v2872 = vlaneseq
        %v2873 = vshrl.u32 %v2872, 7
        %v2874 = vsub.s32 1, %v2873
        %v2875 = vrot.slane %v2491, %v2874
        %v2876 = vlaneseq
        %v2877 = vshrl.u32 %v2876, 7
        %v2878 = vsub.s32 2, %v2877
        %v2879 = vrot.slane %v2491, %v2878
        %v2880 = vlaneseq
        %v2881 = vshrl.u32 %v2880, 7
        %v2882 = vsub.s32 3, %v2881
        %v2883 = vrot.slane %v2491, %v2882
        %v2884 = vlaneseq
        %v2885 = vshrl.u32 %v2884, 7
        %v2886 = vsub.s32 4, %v2885
        %v2887 = vrot.slane %v2491, %v2886
        %v2888 = vlaneseq
        %v2889 = vshrl.u32 %v2888, 7
        %v2890 = vsub.s32 5, %v2889
        %v2891 = vrot.slane %v2491, %v2890
        %v2892 = vlaneseq
        %v2893 = vshrl.u32 %v2892, 7
        %v2894 = vsub.s32 6, %v2893
        %v2895 = vrot.slane %v2491, %v2894
        %v2896 = vlaneseq
        %v2897 = vshrl.u32 %v2896, 7
        %v2898 = vsub.s32 7, %v2897
        %v2899 = vrot.slane %v2491, %v2898
        %v2900 = vlaneseq
        %v2901 = vshrl.u32 %v2900, 7
        %v2902 = vsub.s32 0, %v2901
        %v2903 = vrot.slane %v2493, %v2902
        %v2904 = vlaneseq
        %v2905 = vshrl.u32 %v2904, 7
        %v2906 = vsub.s32 1, %v2905
        %v2907 = vrot.slane %v2493, %v2906
        %v2908 = vlaneseq
        %v2909 = vshrl.u32 %v2908, 7
        %v2910 = vsub.s32 2, %v2909
        %v2911 = vrot.slane %v2493, %v2910
        %v2912 = vlaneseq
        %v2913 = vshrl.u32 %v2912, 7
        %v2914 = vsub.s32 3, %v2913
        %v2915 = vrot.slane %v2493, %v2914
        %v2916 = vlaneseq
        %v2917 = vshrl.u32 %v2916, 7
        %v2918 = vsub.s32 4, %v2917
        %v2919 = vrot.slane %v2493, %v2918
        %v2920 = vlaneseq
        %v2921 = vshrl.u32 %v2920, 7
        %v2922 = vsub.s32 5, %v2921
        %v2923 = vrot.slane %v2493, %v2922
        %v2924 = vlaneseq
        %v2925 = vshrl.u32 %v2924, 7
        %v2926 = vsub.s32 6, %v2925
        %v2927 = vrot.slane %v2493, %v2926
        %v2928 = vlaneseq
        %v2929 = vshrl.u32 %v2928, 7
        %v2930 = vsub.s32 7, %v2929
        %v2931 = vrot.slane %v2493, %v2930
        %v2932 = vlaneseq
        %v2933 = vshrl.u32 %v2932, 7
        %v2934 = vsub.s32 0, %v2933
        %v2935 = vrot.slane %v2495, %v2934
        %v2936 = vlaneseq
        %v2937 = vshrl.u32 %v2936, 7
        %v2938 = vsub.s32 1, %v2937
        %v2939 = vrot.slane %v2495, %v2938
        %v2940 = vlaneseq
        %v2941 = vshrl.u32 %v2940, 7
        %v2942 = vsub.s32 2, %v2941
        %v2943 = vrot.slane %v2495, %v2942
        %v2944 = vlaneseq
        %v2945 = vshrl.u32 %v2944, 7
        %v2946 = vsub.s32 3, %v2945
        %v2947 = vrot.slane %v2495, %v2946
        %v2948 = vlaneseq
        %v2949 = vshrl.u32 %v2948, 7
        %v2950 = vsub.s32 4, %v2949
        %v2951 = vrot.slane %v2495, %v2950
        %v2952 = vlaneseq
        %v2953 = vshrl.u32 %v2952, 7
        %v2954 = vsub.s32 5, %v2953
        %v2955 = vrot.slane %v2495, %v2954
        %v2956 = vlaneseq
        %v2957 = vshrl.u32 %v2956, 7
        %v2958 = vsub.s32 6, %v2957
        %v2959 = vrot.slane %v2495, %v2958
        %v2960 = vlaneseq
        %v2961 = vshrl.u32 %v2960, 7
        %v2962 = vsub.s32 7, %v2961
        %v2963 = vrot.slane %v2495, %v2962
        %v2964 = vlaneseq
        %v2965 = vshrl.u32 %v2964, 7
        %v2966 = vsub.s32 0, %v2965
        %v2967 = vrot.slane %v2497, %v2966
        %v2968 = vlaneseq
        %v2969 = vshrl.u32 %v2968, 7
        %v2970 = vsub.s32 1, %v2969
        %v2971 = vrot.slane %v2497, %v2970
        %v2972 = vlaneseq
        %v2973 = vshrl.u32 %v2972, 7
        %v2974 = vsub.s32 2, %v2973
        %v2975 = vrot.slane %v2497, %v2974
        %v2976 = vlaneseq
        %v2977 = vshrl.u32 %v2976, 7
        %v2978 = vsub.s32 3, %v2977
        %v2979 = vrot.slane %v2497, %v2978
        %v2980 = vlaneseq
        %v2981 = vshrl.u32 %v2980, 7
        %v2982 = vsub.s32 4, %v2981
        %v2983 = vrot.slane %v2497, %v2982
        %v2984 = vlaneseq
        %v2985 = vshrl.u32 %v2984, 7
        %v2986 = vsub.s32 5, %v2985
        %v2987 = vrot.slane %v2497, %v2986
        %v2988 = vlaneseq
        %v2989 = vshrl.u32 %v2988, 7
        %v2990 = vsub.s32 6, %v2989
        %v2991 = vrot.slane %v2497, %v2990
        %v2992 = vlaneseq
        %v2993 = vshrl.u32 %v2992, 7
        %v2994 = vsub.s32 7, %v2993
        %v2995 = vrot.slane %v2497, %v2994
        %v2996 = vlaneseq
        %v2997 = vshrl.u32 %v2996, 7
        %v2998 = vsub.s32 0, %v2997
        %v2999 = vrot.slane %v2499, %v2998
        %v3000 = vlaneseq
        %v3001 = vshrl.u32 %v3000, 7
        %v3002 = vsub.s32 1, %v3001
        %v3003 = vrot.slane %v2499, %v3002
        %v3004 = vlaneseq
        %v3005 = vshrl.u32 %v3004, 7
        %v3006 = vsub.s32 2, %v3005
        %v3007 = vrot.slane %v2499, %v3006
        %v3008 = vlaneseq
        %v3009 = vshrl.u32 %v3008, 7
        %v3010 = vsub.s32 3, %v3009
        %v3011 = vrot.slane %v2499, %v3010
        %v3012 = vlaneseq
        %v3013 = vshrl.u32 %v3012, 7
        %v3014 = vsub.s32 4, %v3013
        %v3015 = vrot.slane %v2499, %v3014
        %v3016 = vlaneseq
        %v3017 = vshrl.u32 %v3016, 7
        %v3018 = vsub.s32 5, %v3017
        %v3019 = vrot.slane %v2499, %v3018
        %v3020 = vlaneseq
        %v3021 = vshrl.u32 %v3020, 7
        %v3022 = vsub.s32 6, %v3021
        %v3023 = vrot.slane %v2499, %v3022
        %v3024 = vlaneseq
        %v3025 = vshrl.u32 %v3024, 7
        %v3026 = vsub.s32 7, %v3025
        %v3027 = vrot.slane %v2499, %v3026
        %v3028 = vcombine.low %v2519, %v2523
        %v3029 = vcombine.low %v2527, %v2531
        %v3030 = vcombine.low %v2535, %v2539
        %v3031 = vcombine.low %v2543, %v2547
        %v3033 = vunpack.c.l.s4 1966171168
        %v3034 = vunpack.c.0.s8 %v3033
        %v3035 = vlaneseq
        %v3036 = vshrl.u32 %v3035, 7
        %v3037 = vsub.s32 %v3034, %v3036
        %v3038 = vrot.slane %v3028, %v3037
        %v3040 = vunpack.c.l.s4 1966171168
        %v3041 = vunpack.c.0.s8 %v3040
        %v3042 = vlaneseq
        %v3043 = vshrl.u32 %v3042, 7
        %v3044 = vsub.s32 %v3041, %v3043
        %v3045 = vrot.slane %v3029, %v3044
        %v3047 = vunpack.c.l.s4 1966171168
        %v3048 = vunpack.c.0.s8 %v3047
        %v3049 = vlaneseq
        %v3050 = vshrl.u32 %v3049, 7
        %v3051 = vsub.s32 %v3048, %v3050
        %v3052 = vrot.slane %v3030, %v3051
        %v3054 = vunpack.c.l.s4 1966171168
        %v3055 = vunpack.c.0.s8 %v3054
        %v3056 = vlaneseq
        %v3057 = vshrl.u32 %v3056, 7
        %v3058 = vsub.s32 %v3055, %v3057
        %v3059 = vrot.slane %v3031, %v3058
        %v3060 = vcombine.low %v3038, %v3045
        %v3061 = vcombine.low %v3052, %v3059
        %v3063 = vunpack.c.l.s4 1966171168
        %v3064 = vunpack.c.0.s8 %v3063
        %v3065 = vlaneseq
        %v3066 = vshrl.u32 %v3065, 7
        %v3067 = vsub.s32 %v3064, %v3066
        %v3068 = vrot.slane %v3060, %v3067
        %v3070 = vunpack.c.l.s4 1966171168
        %v3071 = vunpack.c.0.s8 %v3070
        %v3072 = vlaneseq
        %v3073 = vshrl.u32 %v3072, 7
        %v3074 = vsub.s32 %v3071, %v3073
        %v3075 = vrot.slane %v3061, %v3074
        %v3076 = vcombine.low %v3068, %v3075
        %v3077 = vcombine.low %v2551, %v2555
        %v3078 = vcombine.low %v2559, %v2563
        %v3079 = vcombine.low %v2567, %v2571
        %v3080 = vcombine.low %v2575, %v2579
        %v3082 = vunpack.c.l.s4 1966171168
        %v3083 = vunpack.c.0.s8 %v3082
        %v3084 = vlaneseq
        %v3085 = vshrl.u32 %v3084, 7
        %v3086 = vsub.s32 %v3083, %v3085
        %v3087 = vrot.slane %v3077, %v3086
        %v3089 = vunpack.c.l.s4 1966171168
        %v3090 = vunpack.c.0.s8 %v3089
        %v3091 = vlaneseq
        %v3092 = vshrl.u32 %v3091, 7
        %v3093 = vsub.s32 %v3090, %v3092
        %v3094 = vrot.slane %v3078, %v3093
        %v3096 = vunpack.c.l.s4 1966171168
        %v3097 = vunpack.c.0.s8 %v3096
        %v3098 = vlaneseq
        %v3099 = vshrl.u32 %v3098, 7
        %v3100 = vsub.s32 %v3097, %v3099
        %v3101 = vrot.slane %v3079, %v3100
        %v3103 = vunpack.c.l.s4 1966171168
        %v3104 = vunpack.c.0.s8 %v3103
        %v3105 = vlaneseq
        %v3106 = vshrl.u32 %v3105, 7
        %v3107 = vsub.s32 %v3104, %v3106
        %v3108 = vrot.slane %v3080, %v3107
        %v3109 = vcombine.low %v3087, %v3094
        %v3110 = vcombine.low %v3101, %v3108
        %v3112 = vunpack.c.l.s4 1966171168
        %v3113 = vunpack.c.0.s8 %v3112
        %v3114 = vlaneseq
        %v3115 = vshrl.u32 %v3114, 7
        %v3116 = vsub.s32 %v3113, %v3115
        %v3117 = vrot.slane %v3109, %v3116
        %v3119 = vunpack.c.l.s4 1966171168
        %v3120 = vunpack.c.0.s8 %v3119
        %v3121 = vlaneseq
        %v3122 = vshrl.u32 %v3121, 7
        %v3123 = vsub.s32 %v3120, %v3122
        %v3124 = vrot.slane %v3110, %v3123
        %v3125 = vcombine.low %v3117, %v3124
        %v3126 = vcombine.low %v2583, %v2587
        %v3127 = vcombine.low %v2591, %v2595
        %v3128 = vcombine.low %v2599, %v2603
        %v3129 = vcombine.low %v2607, %v2611
        %v3131 = vunpack.c.l.s4 1966171168
        %v3132 = vunpack.c.0.s8 %v3131
        %v3133 = vlaneseq
        %v3134 = vshrl.u32 %v3133, 7
        %v3135 = vsub.s32 %v3132, %v3134
        %v3136 = vrot.slane %v3126, %v3135
        %v3138 = vunpack.c.l.s4 1966171168
        %v3139 = vunpack.c.0.s8 %v3138
        %v3140 = vlaneseq
        %v3141 = vshrl.u32 %v3140, 7
        %v3142 = vsub.s32 %v3139, %v3141
        %v3143 = vrot.slane %v3127, %v3142
        %v3145 = vunpack.c.l.s4 1966171168
        %v3146 = vunpack.c.0.s8 %v3145
        %v3147 = vlaneseq
        %v3148 = vshrl.u32 %v3147, 7
        %v3149 = vsub.s32 %v3146, %v3148
        %v3150 = vrot.slane %v3128, %v3149
        %v3152 = vunpack.c.l.s4 1966171168
        %v3153 = vunpack.c.0.s8 %v3152
        %v3154 = vlaneseq
        %v3155 = vshrl.u32 %v3154, 7
        %v3156 = vsub.s32 %v3153, %v3155
        %v3157 = vrot.slane %v3129, %v3156
        %v3158 = vcombine.low %v3136, %v3143
        %v3159 = vcombine.low %v3150, %v3157
        %v3161 = vunpack.c.l.s4 1966171168
        %v3162 = vunpack.c.0.s8 %v3161
        %v3163 = vlaneseq
        %v3164 = vshrl.u32 %v3163, 7
        %v3165 = vsub.s32 %v3162, %v3164
        %v3166 = vrot.slane %v3158, %v3165
        %v3168 = vunpack.c.l.s4 1966171168
        %v3169 = vunpack.c.0.s8 %v3168
        %v3170 = vlaneseq
        %v3171 = vshrl.u32 %v3170, 7
        %v3172 = vsub.s32 %v3169, %v3171
        %v3173 = vrot.slane %v3159, %v3172
        %v3174 = vcombine.low %v3166, %v3173
        %v3175 = vcombine.low %v2615, %v2619
        %v3176 = vcombine.low %v2623, %v2627
        %v3177 = vcombine.low %v2631, %v2635
        %v3178 = vcombine.low %v2639, %v2643
        %v3180 = vunpack.c.l.s4 1966171168
        %v3181 = vunpack.c.0.s8 %v3180
        %v3182 = vlaneseq
        %v3183 = vshrl.u32 %v3182, 7
        %v3184 = vsub.s32 %v3181, %v3183
        %v3185 = vrot.slane %v3175, %v3184
        %v3187 = vunpack.c.l.s4 1966171168
        %v3188 = vunpack.c.0.s8 %v3187
        %v3189 = vlaneseq
        %v3190 = vshrl.u32 %v3189, 7
        %v3191 = vsub.s32 %v3188, %v3190
        %v3192 = vrot.slane %v3176, %v3191
        %v3194 = vunpack.c.l.s4 1966171168
        %v3195 = vunpack.c.0.s8 %v3194
        %v3196 = vlaneseq
        %v3197 = vshrl.u32 %v3196, 7
        %v3198 = vsub.s32 %v3195, %v3197
        %v3199 = vrot.slane %v3177, %v3198
        %v3201 = vunpack.c.l.s4 1966171168
        %v3202 = vunpack.c.0.s8 %v3201
        %v3203 = vlaneseq
        %v3204 = vshrl.u32 %v3203, 7
        %v3205 = vsub.s32 %v3202, %v3204
        %v3206 = vrot.slane %v3178, %v3205
        %v3207 = vcombine.low %v3185, %v3192
        %v3208 = vcombine.low %v3199, %v3206
        %v3210 = vunpack.c.l.s4 1966171168
        %v3211 = vunpack.c.0.s8 %v3210
        %v3212 = vlaneseq
        %v3213 = vshrl.u32 %v3212, 7
        %v3214 = vsub.s32 %v3211, %v3213
        %v3215 = vrot.slane %v3207, %v3214
        %v3217 = vunpack.c.l.s4 1966171168
        %v3218 = vunpack.c.0.s8 %v3217
        %v3219 = vlaneseq
        %v3220 = vshrl.u32 %v3219, 7
        %v3221 = vsub.s32 %v3218, %v3220
        %v3222 = vrot.slane %v3208, %v3221
        %v3223 = vcombine.low %v3215, %v3222
        %v3224 = vcombine.low %v2647, %v2651
        %v3225 = vcombine.low %v2655, %v2659
        %v3226 = vcombine.low %v2663, %v2667
        %v3227 = vcombine.low %v2671, %v2675
        %v3229 = vunpack.c.l.s4 1966171168
        %v3230 = vunpack.c.0.s8 %v3229
        %v3231 = vlaneseq
        %v3232 = vshrl.u32 %v3231, 7
        %v3233 = vsub.s32 %v3230, %v3232
        %v3234 = vrot.slane %v3224, %v3233
        %v3236 = vunpack.c.l.s4 1966171168
        %v3237 = vunpack.c.0.s8 %v3236
        %v3238 = vlaneseq
        %v3239 = vshrl.u32 %v3238, 7
        %v3240 = vsub.s32 %v3237, %v3239
        %v3241 = vrot.slane %v3225, %v3240
        %v3243 = vunpack.c.l.s4 1966171168
        %v3244 = vunpack.c.0.s8 %v3243
        %v3245 = vlaneseq
        %v3246 = vshrl.u32 %v3245, 7
        %v3247 = vsub.s32 %v3244, %v3246
        %v3248 = vrot.slane %v3226, %v3247
        %v3250 = vunpack.c.l.s4 1966171168
        %v3251 = vunpack.c.0.s8 %v3250
        %v3252 = vlaneseq
        %v3253 = vshrl.u32 %v3252, 7
        %v3254 = vsub.s32 %v3251, %v3253
        %v3255 = vrot.slane %v3227, %v3254
        %v3256 = vcombine.low %v3234, %v3241
        %v3257 = vcombine.low %v3248, %v3255
        %v3259 = vunpack.c.l.s4 1966171168
        %v3260 = vunpack.c.0.s8 %v3259
        %v3261 = vlaneseq
        %v3262 = vshrl.u32 %v3261, 7
        %v3263 = vsub.s32 %v3260, %v3262
        %v3264 = vrot.slane %v3256, %v3263
        %v3266 = vunpack.c.l.s4 1966171168
        %v3267 = vunpack.c.0.s8 %v3266
        %v3268 = vlaneseq
        %v3269 = vshrl.u32 %v3268, 7
        %v3270 = vsub.s32 %v3267, %v3269
        %v3271 = vrot.slane %v3257, %v3270
        %v3272 = vcombine.low %v3264, %v3271
        %v3273 = vcombine.low %v2679, %v2683
        %v3274 = vcombine.low %v2687, %v2691
        %v3275 = vcombine.low %v2695, %v2699
        %v3276 = vcombine.low %v2703, %v2707
        %v3278 = vunpack.c.l.s4 1966171168
        %v3279 = vunpack.c.0.s8 %v3278
        %v3280 = vlaneseq
        %v3281 = vshrl.u32 %v3280, 7
        %v3282 = vsub.s32 %v3279, %v3281
        %v3283 = vrot.slane %v3273, %v3282
        %v3285 = vunpack.c.l.s4 1966171168
        %v3286 = vunpack.c.0.s8 %v3285
        %v3287 = vlaneseq
        %v3288 = vshrl.u32 %v3287, 7
        %v3289 = vsub.s32 %v3286, %v3288
        %v3290 = vrot.slane %v3274, %v3289
        %v3292 = vunpack.c.l.s4 1966171168
        %v3293 = vunpack.c.0.s8 %v3292
        %v3294 = vlaneseq
        %v3295 = vshrl.u32 %v3294, 7
        %v3296 = vsub.s32 %v3293, %v3295
        %v3297 = vrot.slane %v3275, %v3296
        %v3299 = vunpack.c.l.s4 1966171168
        %v3300 = vunpack.c.0.s8 %v3299
        %v3301 = vlaneseq
        %v3302 = vshrl.u32 %v3301, 7
        %v3303 = vsub.s32 %v3300, %v3302
        %v3304 = vrot.slane %v3276, %v3303
        %v3305 = vcombine.low %v3283, %v3290
        %v3306 = vcombine.low %v3297, %v3304
        %v3308 = vunpack.c.l.s4 1966171168
        %v3309 = vunpack.c.0.s8 %v3308
        %v3310 = vlaneseq
        %v3311 = vshrl.u32 %v3310, 7
        %v3312 = vsub.s32 %v3309, %v3311
        %v3313 = vrot.slane %v3305, %v3312
        %v3315 = vunpack.c.l.s4 1966171168
        %v3316 = vunpack.c.0.s8 %v3315
        %v3317 = vlaneseq
        %v3318 = vshrl.u32 %v3317, 7
        %v3319 = vsub.s32 %v3316, %v3318
        %v3320 = vrot.slane %v3306, %v3319
        %v3321 = vcombine.low %v3313, %v3320
        %v3322 = vcombine.low %v2711, %v2715
        %v3323 = vcombine.low %v2719, %v2723
        %v3324 = vcombine.low %v2727, %v2731
        %v3325 = vcombine.low %v2735, %v2739
        %v3327 = vunpack.c.l.s4 1966171168
        %v3328 = vunpack.c.0.s8 %v3327
        %v3329 = vlaneseq
        %v3330 = vshrl.u32 %v3329, 7
        %v3331 = vsub.s32 %v3328, %v3330
        %v3332 = vrot.slane %v3322, %v3331
        %v3334 = vunpack.c.l.s4 1966171168
        %v3335 = vunpack.c.0.s8 %v3334
        %v3336 = vlaneseq
        %v3337 = vshrl.u32 %v3336, 7
        %v3338 = vsub.s32 %v3335, %v3337
        %v3339 = vrot.slane %v3323, %v3338
        %v3341 = vunpack.c.l.s4 1966171168
        %v3342 = vunpack.c.0.s8 %v3341
        %v3343 = vlaneseq
        %v3344 = vshrl.u32 %v3343, 7
        %v3345 = vsub.s32 %v3342, %v3344
        %v3346 = vrot.slane %v3324, %v3345
        %v3348 = vunpack.c.l.s4 1966171168
        %v3349 = vunpack.c.0.s8 %v3348
        %v3350 = vlaneseq
        %v3351 = vshrl.u32 %v3350, 7
        %v3352 = vsub.s32 %v3349, %v3351
        %v3353 = vrot.slane %v3325, %v3352
        %v3354 = vcombine.low %v3332, %v3339
        %v3355 = vcombine.low %v3346, %v3353
        %v3357 = vunpack.c.l.s4 1966171168
        %v3358 = vunpack.c.0.s8 %v3357
        %v3359 = vlaneseq
        %v3360 = vshrl.u32 %v3359, 7
        %v3361 = vsub.s32 %v3358, %v3360
        %v3362 = vrot.slane %v3354, %v3361
        %v3364 = vunpack.c.l.s4 1966171168
        %v3365 = vunpack.c.0.s8 %v3364
        %v3366 = vlaneseq
        %v3367 = vshrl.u32 %v3366, 7
        %v3368 = vsub.s32 %v3365, %v3367
        %v3369 = vrot.slane %v3355, %v3368
        %v3370 = vcombine.low %v3362, %v3369
        %v3371 = vcombine.low %v2743, %v2747
        %v3372 = vcombine.low %v2751, %v2755
        %v3373 = vcombine.low %v2759, %v2763
        %v3374 = vcombine.low %v2767, %v2771
        %v3376 = vunpack.c.l.s4 1966171168
        %v3377 = vunpack.c.0.s8 %v3376
        %v3378 = vlaneseq
        %v3379 = vshrl.u32 %v3378, 7
        %v3380 = vsub.s32 %v3377, %v3379
        %v3381 = vrot.slane %v3371, %v3380
        %v3383 = vunpack.c.l.s4 1966171168
        %v3384 = vunpack.c.0.s8 %v3383
        %v3385 = vlaneseq
        %v3386 = vshrl.u32 %v3385, 7
        %v3387 = vsub.s32 %v3384, %v3386
        %v3388 = vrot.slane %v3372, %v3387
        %v3390 = vunpack.c.l.s4 1966171168
        %v3391 = vunpack.c.0.s8 %v3390
        %v3392 = vlaneseq
        %v3393 = vshrl.u32 %v3392, 7
        %v3394 = vsub.s32 %v3391, %v3393
        %v3395 = vrot.slane %v3373, %v3394
        %v3397 = vunpack.c.l.s4 1966171168
        %v3398 = vunpack.c.0.s8 %v3397
        %v3399 = vlaneseq
        %v3400 = vshrl.u32 %v3399, 7
        %v3401 = vsub.s32 %v3398, %v3400
        %v3402 = vrot.slane %v3374, %v3401
        %v3403 = vcombine.low %v3381, %v3388
        %v3404 = vcombine.low %v3395, %v3402
        %v3406 = vunpack.c.l.s4 1966171168
        %v3407 = vunpack.c.0.s8 %v3406
        %v3408 = vlaneseq
        %v3409 = vshrl.u32 %v3408, 7
        %v3410 = vsub.s32 %v3407, %v3409
        %v3411 = vrot.slane %v3403, %v3410
        %v3413 = vunpack.c.l.s4 1966171168
        %v3414 = vunpack.c.0.s8 %v3413
        %v3415 = vlaneseq
        %v3416 = vshrl.u32 %v3415, 7
        %v3417 = vsub.s32 %v3414, %v3416
        %v3418 = vrot.slane %v3404, %v3417
        %v3419 = vcombine.low %v3411, %v3418
        %v3420 = vcombine.low %v2775, %v2779
        %v3421 = vcombine.low %v2783, %v2787
        %v3422 = vcombine.low %v2791, %v2795
        %v3423 = vcombine.low %v2799, %v2803
        %v3425 = vunpack.c.l.s4 1966171168
        %v3426 = vunpack.c.0.s8 %v3425
        %v3427 = vlaneseq
        %v3428 = vshrl.u32 %v3427, 7
        %v3429 = vsub.s32 %v3426, %v3428
        %v3430 = vrot.slane %v3420, %v3429
        %v3432 = vunpack.c.l.s4 1966171168
        %v3433 = vunpack.c.0.s8 %v3432
        %v3434 = vlaneseq
        %v3435 = vshrl.u32 %v3434, 7
        %v3436 = vsub.s32 %v3433, %v3435
        %v3437 = vrot.slane %v3421, %v3436
        %v3439 = vunpack.c.l.s4 1966171168
        %v3440 = vunpack.c.0.s8 %v3439
        %v3441 = vlaneseq
        %v3442 = vshrl.u32 %v3441, 7
        %v3443 = vsub.s32 %v3440, %v3442
        %v3444 = vrot.slane %v3422, %v3443
        %v3446 = vunpack.c.l.s4 1966171168
        %v3447 = vunpack.c.0.s8 %v3446
        %v3448 = vlaneseq
        %v3449 = vshrl.u32 %v3448, 7
        %v3450 = vsub.s32 %v3447, %v3449
        %v3451 = vrot.slane %v3423, %v3450
        %v3452 = vcombine.low %v3430, %v3437
        %v3453 = vcombine.low %v3444, %v3451
        %v3455 = vunpack.c.l.s4 1966171168
        %v3456 = vunpack.c.0.s8 %v3455
        %v3457 = vlaneseq
        %v3458 = vshrl.u32 %v3457, 7
        %v3459 = vsub.s32 %v3456, %v3458
        %v3460 = vrot.slane %v3452, %v3459
        %v3462 = vunpack.c.l.s4 1966171168
        %v3463 = vunpack.c.0.s8 %v3462
        %v3464 = vlaneseq
        %v3465 = vshrl.u32 %v3464, 7
        %v3466 = vsub.s32 %v3463, %v3465
        %v3467 = vrot.slane %v3453, %v3466
        %v3468 = vcombine.low %v3460, %v3467
        %v3469 = vcombine.low %v2807, %v2811
        %v3470 = vcombine.low %v2815, %v2819
        %v3471 = vcombine.low %v2823, %v2827
        %v3472 = vcombine.low %v2831, %v2835
        %v3474 = vunpack.c.l.s4 1966171168
        %v3475 = vunpack.c.0.s8 %v3474
        %v3476 = vlaneseq
        %v3477 = vshrl.u32 %v3476, 7
        %v3478 = vsub.s32 %v3475, %v3477
        %v3479 = vrot.slane %v3469, %v3478
        %v3481 = vunpack.c.l.s4 1966171168
        %v3482 = vunpack.c.0.s8 %v3481
        %v3483 = vlaneseq
        %v3484 = vshrl.u32 %v3483, 7
        %v3485 = vsub.s32 %v3482, %v3484
        %v3486 = vrot.slane %v3470, %v3485
        %v3488 = vunpack.c.l.s4 1966171168
        %v3489 = vunpack.c.0.s8 %v3488
        %v3490 = vlaneseq
        %v3491 = vshrl.u32 %v3490, 7
        %v3492 = vsub.s32 %v3489, %v3491
        %v3493 = vrot.slane %v3471, %v3492
        %v3495 = vunpack.c.l.s4 1966171168
        %v3496 = vunpack.c.0.s8 %v3495
        %v3497 = vlaneseq
        %v3498 = vshrl.u32 %v3497, 7
        %v3499 = vsub.s32 %v3496, %v3498
        %v3500 = vrot.slane %v3472, %v3499
        %v3501 = vcombine.low %v3479, %v3486
        %v3502 = vcombine.low %v3493, %v3500
        %v3504 = vunpack.c.l.s4 1966171168
        %v3505 = vunpack.c.0.s8 %v3504
        %v3506 = vlaneseq
        %v3507 = vshrl.u32 %v3506, 7
        %v3508 = vsub.s32 %v3505, %v3507
        %v3509 = vrot.slane %v3501, %v3508
        %v3511 = vunpack.c.l.s4 1966171168
        %v3512 = vunpack.c.0.s8 %v3511
        %v3513 = vlaneseq
        %v3514 = vshrl.u32 %v3513, 7
        %v3515 = vsub.s32 %v3512, %v3514
        %v3516 = vrot.slane %v3502, %v3515
        %v3517 = vcombine.low %v3509, %v3516
        %v3518 = vcombine.low %v2839, %v2843
        %v3519 = vcombine.low %v2847, %v2851
        %v3520 = vcombine.low %v2855, %v2859
        %v3521 = vcombine.low %v2863, %v2867
        %v3523 = vunpack.c.l.s4 1966171168
        %v3524 = vunpack.c.0.s8 %v3523
        %v3525 = vlaneseq
        %v3526 = vshrl.u32 %v3525, 7
        %v3527 = vsub.s32 %v3524, %v3526
        %v3528 = vrot.slane %v3518, %v3527
        %v3530 = vunpack.c.l.s4 1966171168
        %v3531 = vunpack.c.0.s8 %v3530
        %v3532 = vlaneseq
        %v3533 = vshrl.u32 %v3532, 7
        %v3534 = vsub.s32 %v3531, %v3533
        %v3535 = vrot.slane %v3519, %v3534
        %v3537 = vunpack.c.l.s4 1966171168
        %v3538 = vunpack.c.0.s8 %v3537
        %v3539 = vlaneseq
        %v3540 = vshrl.u32 %v3539, 7
        %v3541 = vsub.s32 %v3538, %v3540
        %v3542 = vrot.slane %v3520, %v3541
        %v3544 = vunpack.c.l.s4 1966171168
        %v3545 = vunpack.c.0.s8 %v3544
        %v3546 = vlaneseq
        %v3547 = vshrl.u32 %v3546, 7
        %v3548 = vsub.s32 %v3545, %v3547
        %v3549 = vrot.slane %v3521, %v3548
        %v3550 = vcombine.low %v3528, %v3535
        %v3551 = vcombine.low %v3542, %v3549
        %v3553 = vunpack.c.l.s4 1966171168
        %v3554 = vunpack.c.0.s8 %v3553
        %v3555 = vlaneseq
        %v3556 = vshrl.u32 %v3555, 7
        %v3557 = vsub.s32 %v3554, %v3556
        %v3558 = vrot.slane %v3550, %v3557
        %v3560 = vunpack.c.l.s4 1966171168
        %v3561 = vunpack.c.0.s8 %v3560
        %v3562 = vlaneseq
        %v3563 = vshrl.u32 %v3562, 7
        %v3564 = vsub.s32 %v3561, %v3563
        %v3565 = vrot.slane %v3551, %v3564
        %v3566 = vcombine.low %v3558, %v3565
        %v3567 = vcombine.low %v2871, %v2875
        %v3568 = vcombine.low %v2879, %v2883
        %v3569 = vcombine.low %v2887, %v2891
        %v3570 = vcombine.low %v2895, %v2899
        %v3572 = vunpack.c.l.s4 1966171168
        %v3573 = vunpack.c.0.s8 %v3572
        %v3574 = vlaneseq
        %v3575 = vshrl.u32 %v3574, 7
        %v3576 = vsub.s32 %v3573, %v3575
        %v3577 = vrot.slane %v3567, %v3576
        %v3579 = vunpack.c.l.s4 1966171168
        %v3580 = vunpack.c.0.s8 %v3579
        %v3581 = vlaneseq
        %v3582 = vshrl.u32 %v3581, 7
        %v3583 = vsub.s32 %v3580, %v3582
        %v3584 = vrot.slane %v3568, %v3583
        %v3586 = vunpack.c.l.s4 1966171168
        %v3587 = vunpack.c.0.s8 %v3586
        %v3588 = vlaneseq
        %v3589 = vshrl.u32 %v3588, 7
        %v3590 = vsub.s32 %v3587, %v3589
        %v3591 = vrot.slane %v3569, %v3590
        %v3593 = vunpack.c.l.s4 1966171168
        %v3594 = vunpack.c.0.s8 %v3593
        %v3595 = vlaneseq
        %v3596 = vshrl.u32 %v3595, 7
        %v3597 = vsub.s32 %v3594, %v3596
        %v3598 = vrot.slane %v3570, %v3597
        %v3599 = vcombine.low %v3577, %v3584
        %v3600 = vcombine.low %v3591, %v3598
        %v3602 = vunpack.c.l.s4 1966171168
        %v3603 = vunpack.c.0.s8 %v3602
        %v3604 = vlaneseq
        %v3605 = vshrl.u32 %v3604, 7
        %v3606 = vsub.s32 %v3603, %v3605
        %v3607 = vrot.slane %v3599, %v3606
        %v3609 = vunpack.c.l.s4 1966171168
        %v3610 = vunpack.c.0.s8 %v3609
        %v3611 = vlaneseq
        %v3612 = vshrl.u32 %v3611, 7
        %v3613 = vsub.s32 %v3610, %v3612
        %v3614 = vrot.slane %v3600, %v3613
        %v3615 = vcombine.low %v3607, %v3614
        %v3616 = vcombine.low %v2903, %v2907
        %v3617 = vcombine.low %v2911, %v2915
        %v3618 = vcombine.low %v2919, %v2923
        %v3619 = vcombine.low %v2927, %v2931
        %v3621 = vunpack.c.l.s4 1966171168
        %v3622 = vunpack.c.0.s8 %v3621
        %v3623 = vlaneseq
        %v3624 = vshrl.u32 %v3623, 7
        %v3625 = vsub.s32 %v3622, %v3624
        %v3626 = vrot.slane %v3616, %v3625
        %v3628 = vunpack.c.l.s4 1966171168
        %v3629 = vunpack.c.0.s8 %v3628
        %v3630 = vlaneseq
        %v3631 = vshrl.u32 %v3630, 7
        %v3632 = vsub.s32 %v3629, %v3631
        %v3633 = vrot.slane %v3617, %v3632
        %v3635 = vunpack.c.l.s4 1966171168
        %v3636 = vunpack.c.0.s8 %v3635
        %v3637 = vlaneseq
        %v3638 = vshrl.u32 %v3637, 7
        %v3639 = vsub.s32 %v3636, %v3638
        %v3640 = vrot.slane %v3618, %v3639
        %v3642 = vunpack.c.l.s4 1966171168
        %v3643 = vunpack.c.0.s8 %v3642
        %v3644 = vlaneseq
        %v3645 = vshrl.u32 %v3644, 7
        %v3646 = vsub.s32 %v3643, %v3645
        %v3647 = vrot.slane %v3619, %v3646
        %v3648 = vcombine.low %v3626, %v3633
        %v3649 = vcombine.low %v3640, %v3647
        %v3651 = vunpack.c.l.s4 1966171168
        %v3652 = vunpack.c.0.s8 %v3651
        %v3653 = vlaneseq
        %v3654 = vshrl.u32 %v3653, 7
        %v3655 = vsub.s32 %v3652, %v3654
        %v3656 = vrot.slane %v3648, %v3655
        %v3658 = vunpack.c.l.s4 1966171168
        %v3659 = vunpack.c.0.s8 %v3658
        %v3660 = vlaneseq
        %v3661 = vshrl.u32 %v3660, 7
        %v3662 = vsub.s32 %v3659, %v3661
        %v3663 = vrot.slane %v3649, %v3662
        %v3664 = vcombine.low %v3656, %v3663
        %v3665 = vcombine.low %v2935, %v2939
        %v3666 = vcombine.low %v2943, %v2947
        %v3667 = vcombine.low %v2951, %v2955
        %v3668 = vcombine.low %v2959, %v2963
        %v3670 = vunpack.c.l.s4 1966171168
        %v3671 = vunpack.c.0.s8 %v3670
        %v3672 = vlaneseq
        %v3673 = vshrl.u32 %v3672, 7
        %v3674 = vsub.s32 %v3671, %v3673
        %v3675 = vrot.slane %v3665, %v3674
        %v3677 = vunpack.c.l.s4 1966171168
        %v3678 = vunpack.c.0.s8 %v3677
        %v3679 = vlaneseq
        %v3680 = vshrl.u32 %v3679, 7
        %v3681 = vsub.s32 %v3678, %v3680
        %v3682 = vrot.slane %v3666, %v3681
        %v3684 = vunpack.c.l.s4 1966171168
        %v3685 = vunpack.c.0.s8 %v3684
        %v3686 = vlaneseq
        %v3687 = vshrl.u32 %v3686, 7
        %v3688 = vsub.s32 %v3685, %v3687
        %v3689 = vrot.slane %v3667, %v3688
        %v3691 = vunpack.c.l.s4 1966171168
        %v3692 = vunpack.c.0.s8 %v3691
        %v3693 = vlaneseq
        %v3694 = vshrl.u32 %v3693, 7
        %v3695 = vsub.s32 %v3692, %v3694
        %v3696 = vrot.slane %v3668, %v3695
        %v3697 = vcombine.low %v3675, %v3682
        %v3698 = vcombine.low %v3689, %v3696
        %v3700 = vunpack.c.l.s4 1966171168
        %v3701 = vunpack.c.0.s8 %v3700
        %v3702 = vlaneseq
        %v3703 = vshrl.u32 %v3702, 7
        %v3704 = vsub.s32 %v3701, %v3703
        %v3705 = vrot.slane %v3697, %v3704
        %v3707 = vunpack.c.l.s4 1966171168
        %v3708 = vunpack.c.0.s8 %v3707
        %v3709 = vlaneseq
        %v3710 = vshrl.u32 %v3709, 7
        %v3711 = vsub.s32 %v3708, %v3710
        %v3712 = vrot.slane %v3698, %v3711
        %v3713 = vcombine.low %v3705, %v3712
        %v3714 = vcombine.low %v2967, %v2971
        %v3715 = vcombine.low %v2975, %v2979
        %v3716 = vcombine.low %v2983, %v2987
        %v3717 = vcombine.low %v2991, %v2995
        %v3719 = vunpack.c.l.s4 1966171168
        %v3720 = vunpack.c.0.s8 %v3719
        %v3721 = vlaneseq
        %v3722 = vshrl.u32 %v3721, 7
        %v3723 = vsub.s32 %v3720, %v3722
        %v3724 = vrot.slane %v3714, %v3723
        %v3726 = vunpack.c.l.s4 1966171168
        %v3727 = vunpack.c.0.s8 %v3726
        %v3728 = vlaneseq
        %v3729 = vshrl.u32 %v3728, 7
        %v3730 = vsub.s32 %v3727, %v3729
        %v3731 = vrot.slane %v3715, %v3730
        %v3733 = vunpack.c.l.s4 1966171168
        %v3734 = vunpack.c.0.s8 %v3733
        %v3735 = vlaneseq
        %v3736 = vshrl.u32 %v3735, 7
        %v3737 = vsub.s32 %v3734, %v3736
        %v3738 = vrot.slane %v3716, %v3737
        %v3740 = vunpack.c.l.s4 1966171168
        %v3741 = vunpack.c.0.s8 %v3740
        %v3742 = vlaneseq
        %v3743 = vshrl.u32 %v3742, 7
        %v3744 = vsub.s32 %v3741, %v3743
        %v3745 = vrot.slane %v3717, %v3744
        %v3746 = vcombine.low %v3724, %v3731
        %v3747 = vcombine.low %v3738, %v3745
        %v3749 = vunpack.c.l.s4 1966171168
        %v3750 = vunpack.c.0.s8 %v3749
        %v3751 = vlaneseq
        %v3752 = vshrl.u32 %v3751, 7
        %v3753 = vsub.s32 %v3750, %v3752
        %v3754 = vrot.slane %v3746, %v3753
        %v3756 = vunpack.c.l.s4 1966171168
        %v3757 = vunpack.c.0.s8 %v3756
        %v3758 = vlaneseq
        %v3759 = vshrl.u32 %v3758, 7
        %v3760 = vsub.s32 %v3757, %v3759
        %v3761 = vrot.slane %v3747, %v3760
        %v3762 = vcombine.low %v3754, %v3761
        %v3763 = vcombine.low %v2999, %v3003
        %v3764 = vcombine.low %v3007, %v3011
        %v3765 = vcombine.low %v3015, %v3019
        %v3766 = vcombine.low %v3023, %v3027
        %v3768 = vunpack.c.l.s4 1966171168
        %v3769 = vunpack.c.0.s8 %v3768
        %v3770 = vlaneseq
        %v3771 = vshrl.u32 %v3770, 7
        %v3772 = vsub.s32 %v3769, %v3771
        %v3773 = vrot.slane %v3763, %v3772
        %v3775 = vunpack.c.l.s4 1966171168
        %v3776 = vunpack.c.0.s8 %v3775
        %v3777 = vlaneseq
        %v3778 = vshrl.u32 %v3777, 7
        %v3779 = vsub.s32 %v3776, %v3778
        %v3780 = vrot.slane %v3764, %v3779
        %v3782 = vunpack.c.l.s4 1966171168
        %v3783 = vunpack.c.0.s8 %v3782
        %v3784 = vlaneseq
        %v3785 = vshrl.u32 %v3784, 7
        %v3786 = vsub.s32 %v3783, %v3785
        %v3787 = vrot.slane %v3765, %v3786
        %v3789 = vunpack.c.l.s4 1966171168
        %v3790 = vunpack.c.0.s8 %v3789
        %v3791 = vlaneseq
        %v3792 = vshrl.u32 %v3791, 7
        %v3793 = vsub.s32 %v3790, %v3792
        %v3794 = vrot.slane %v3766, %v3793
        %v3795 = vcombine.low %v3773, %v3780
        %v3796 = vcombine.low %v3787, %v3794
        %v3798 = vunpack.c.l.s4 1966171168
        %v3799 = vunpack.c.0.s8 %v3798
        %v3800 = vlaneseq
        %v3801 = vshrl.u32 %v3800, 7
        %v3802 = vsub.s32 %v3799, %v3801
        %v3803 = vrot.slane %v3795, %v3802
        %v3805 = vunpack.c.l.s4 1966171168
        %v3806 = vunpack.c.0.s8 %v3805
        %v3807 = vlaneseq
        %v3808 = vshrl.u32 %v3807, 7
        %v3809 = vsub.s32 %v3806, %v3808
        %v3810 = vrot.slane %v3796, %v3809
        %v3811 = vcombine.low %v3803, %v3810
        %3812 = vset.pattern.permute.xlu0 0
        %3813 = vperm.xlu0 %3812, %v3076
        %v3814 = vpop.permute.xlu0 %3813
        %3815 = vset.pattern.permute.xlu0 0
        %3816 = vperm.xlu0 %3815, %v3125
        %v3817 = vpop.permute.xlu0 %3816
        %3818 = vset.pattern.permute.xlu0 0
        %3819 = vperm.xlu0 %3818, %v3174
        %v3820 = vpop.permute.xlu0 %3819
        %3821 = vset.pattern.permute.xlu0 0
        %3822 = vperm.xlu0 %3821, %v3223
        %v3823 = vpop.permute.xlu0 %3822
        %3824 = vset.pattern.permute.xlu0 0
        %3825 = vperm.xlu0 %3824, %v3272
        %v3826 = vpop.permute.xlu0 %3825
        %3827 = vset.pattern.permute.xlu0 0
        %3828 = vperm.xlu0 %3827, %v3321
        %v3829 = vpop.permute.xlu0 %3828
        %3830 = vset.pattern.permute.xlu0 0
        %3831 = vperm.xlu0 %3830, %v3370
        %v3832 = vpop.permute.xlu0 %3831
        %3833 = vset.pattern.permute.xlu0 0
        %3834 = vperm.xlu0 %3833, %v3419
        %v3835 = vpop.permute.xlu0 %3834
        %3836 = vset.pattern.permute.xlu0 0
        %3837 = vperm.xlu0 %3836, %v3468
        %v3838 = vpop.permute.xlu0 %3837
        %3839 = vset.pattern.permute.xlu0 0
        %3840 = vperm.xlu0 %3839, %v3517
        %v3841 = vpop.permute.xlu0 %3840
        %3842 = vset.pattern.permute.xlu0 0
        %3843 = vperm.xlu0 %3842, %v3566
        %v3844 = vpop.permute.xlu0 %3843
        %3845 = vset.pattern.permute.xlu0 0
        %3846 = vperm.xlu0 %3845, %v3615
        %v3847 = vpop.permute.xlu0 %3846
        %3848 = vset.pattern.permute.xlu0 0
        %3849 = vperm.xlu0 %3848, %v3664
        %v3850 = vpop.permute.xlu0 %3849
        %3851 = vset.pattern.permute.xlu0 0
        %3852 = vperm.xlu0 %3851, %v3713
        %v3853 = vpop.permute.xlu0 %3852
        %3854 = vset.pattern.permute.xlu0 0
        %3855 = vperm.xlu0 %3854, %v3762
        %v3856 = vpop.permute.xlu0 %3855
        %3857 = vset.pattern.permute.xlu0 0
        %3858 = vperm.xlu0 %3857, %v3811
        %v3859 = vpop.permute.xlu0 %3858
        %v3860 = vlaneseq
        %v3861 = vshrl.u32 %v3860, 7
        %v3862 = vsub.s32 %v2340, %v3861
        %v3863 = vrot.slane %v3814, %v3862
        %v3864 = vlaneseq
        %v3865 = vshrl.u32 %v3864, 7
        %v3866 = vsub.s32 %v2345, %v3865
        %v3867 = vrot.slane %v3817, %v3866
        %v3868 = vsel %vm2350, %v3867, %v3863
        %v3869 = vlaneseq
        %v3870 = vshrl.u32 %v3869, 7
        %v3871 = vsub.s32 %v2352, %v3870
        %v3872 = vrot.slane %v3820, %v3871
        %v3873 = vsel %vm2357, %v3872, %v3868
        %v3874 = vlaneseq
        %v3875 = vshrl.u32 %v3874, 7
        %v3876 = vsub.s32 %v2359, %v3875
        %v3877 = vrot.slane %v3823, %v3876
        %v3878 = vsel %vm2364, %v3877, %v3873
        %v3879 = vlaneseq
        %v3880 = vshrl.u32 %v3879, 7
        %v3881 = vsub.s32 %v2366, %v3880
        %v3882 = vrot.slane %v3826, %v3881
        %v3883 = vsel %vm2371, %v3882, %v3878
        %v3884 = vlaneseq
        %v3885 = vshrl.u32 %v3884, 7
        %v3886 = vsub.s32 %v2373, %v3885
        %v3887 = vrot.slane %v3829, %v3886
        %v3888 = vsel %vm2378, %v3887, %v3883
        %v3889 = vlaneseq
        %v3890 = vshrl.u32 %v3889, 7
        %v3891 = vsub.s32 %v2380, %v3890
        %v3892 = vrot.slane %v3832, %v3891
        %v3893 = vsel %vm2385, %v3892, %v3888
        %v3894 = vlaneseq
        %v3895 = vshrl.u32 %v3894, 7
        %v3896 = vsub.s32 %v2387, %v3895
        %v3897 = vrot.slane %v3835, %v3896
        %v3898 = vsel %vm2392, %v3897, %v3893
        %v3899 = vlaneseq
        %v3900 = vshrl.u32 %v3899, 7
        %v3901 = vsub.s32 %v2394, %v3900
        %v3902 = vrot.slane %v3838, %v3901
        %v3903 = vsel %vm2399, %v3902, %v3898
        %v3904 = vlaneseq
        %v3905 = vshrl.u32 %v3904, 7
        %v3906 = vsub.s32 %v2401, %v3905
        %v3907 = vrot.slane %v3841, %v3906
        %v3908 = vsel %vm2406, %v3907, %v3903
        %v3909 = vlaneseq
        %v3910 = vshrl.u32 %v3909, 7
        %v3911 = vsub.s32 %v2408, %v3910
        %v3912 = vrot.slane %v3844, %v3911
        %v3913 = vsel %vm2413, %v3912, %v3908
        %v3914 = vlaneseq
        %v3915 = vshrl.u32 %v3914, 7
        %v3916 = vsub.s32 %v2415, %v3915
        %v3917 = vrot.slane %v3847, %v3916
        %v3918 = vsel %vm2420, %v3917, %v3913
        %v3919 = vlaneseq
        %v3920 = vshrl.u32 %v3919, 7
        %v3921 = vsub.s32 %v2422, %v3920
        %v3922 = vrot.slane %v3850, %v3921
        %v3923 = vsel %vm2427, %v3922, %v3918
        %v3924 = vlaneseq
        %v3925 = vshrl.u32 %v3924, 7
        %v3926 = vsub.s32 %v2429, %v3925
        %v3927 = vrot.slane %v3853, %v3926
        %v3928 = vsel %vm2434, %v3927, %v3923
        %v3929 = vlaneseq
        %v3930 = vshrl.u32 %v3929, 7
        %v3931 = vsub.s32 %v2436, %v3930
        %v3932 = vrot.slane %v3856, %v3931
        %v3933 = vsel %vm2441, %v3932, %v3928
        %v3934 = vlaneseq
        %v3935 = vshrl.u32 %v3934, 7
        %v3936 = vsub.s32 %v2443, %v3935
        %v3937 = vrot.slane %v3859, %v3936
        %v3938 = vsel %vm2448, %v3937, %v3933
        %v3940 = vunpack.c.l.s4 1966171168
        %v3941 = vunpack.c.0.s8 %v3940
        %v3942 = vlaneseq
        %v3943 = vshrl.u32 %v3942, 7
        %v3944 = vsub.s32 %v3941, %v3943
        %v3945 = vrot.slane %v3938, %v3944
        %v3947 = vunpack.c.l.s4 1966171168
        %v3948 = vunpack.c.0.s8 %v3947
        %v3949 = vlaneseq
        %v3950 = vshrl.u32 %v3949, 7
        %v3951 = vsub.s32 %v3948, %v3950
        %v3952 = vrot.slane %v3945, %v3951
        %v3954 = vadd.f32 %v2467, %v3952
        %3955 = vst [vmem:[#allocation5] sm:$0x1] %v3954
        %v3956 = vld [vmem:[#allocation6] sm:$0xff]
        %v3957 = vld [vmem:[#allocation6 + $0x8] sm:$0xff]
        %v3958 = vunpack.c.l.bf16 %v452
        %v3959 = vunpack.c.l.bf16 %v453
        %3960 = vadd.xlane.f32.xlu0 %v3958
        %v3961 = vpop.xlane.xlu0 %3960
        %3962 = vadd.xlane.f32.xlu0 %v3959
        %v3963 = vpop.xlane.xlu0 %3962
        %v3964 = vadd.f32 %v3956, %v3961
        %v3965 = vadd.f32 %v3957, %v3963
        %vm3966 = vcmask 7168
        %3967 = vst.msk [vmem:[#allocation6] sm:$0xff] %vm3966, %v3964
        %3968 = vst.msk [vmem:[#allocation6 + $0x8] sm:$0xff] %vm3966, %v3965
        %p3969 = scmp.eq.s32.totalorder %s23, 1
        // Predicated region
        $region123: #{_matcher_cost_forward.1} parent=109 // pred_check
          %p3970 = pneg %p3969
        $region124: #{_matcher_cost_forward.1} parent=109 // pred_check_branch
          %3972 = sbr.rel (%p3970) target = $region126
        $region125: #{_matcher_cost_forward.1} parent=109 // pred_region
          %v3973 = vld [vmem:[%s416] sm:$0xff]
          %v3974 = vld [vmem:[%s416 + $0x8] sm:$0xff]
          %v3975 = vld [vmem:[%s416 + $0x10] sm:$0xff]
          %v3976 = vld [vmem:[%s416 + $0x18] sm:$0xff]
          %v3977 = vld [vmem:[%s416 + $0x20] sm:$0xff]
          %v3978 = vld [vmem:[%s416 + $0x28] sm:$0xff]
          %v3979 = vld [vmem:[%s416 + $0x30] sm:$0xff]
          %v3980 = vld [vmem:[%s416 + $0x38] sm:$0xff]
          %v3981 = vld [vmem:[%s416 + $0x40] sm:$0xff]
          %v3982 = vld [vmem:[%s416 + $0x48] sm:$0xff]
          %v3983 = vld [vmem:[%s416 + $0x50] sm:$0xff]
          %v3984 = vld [vmem:[%s416 + $0x58] sm:$0xff]
          %v3985 = vld [vmem:[%s416 + $0x60] sm:$0xff]
          %v3986 = vld [vmem:[%s416 + $0x68] sm:$0xff]
          %v3987 = vld [vmem:[%s416 + $0x70] sm:$0xff]
          %v3988 = vld [vmem:[%s416 + $0x78] sm:$0xff]
          %vm3989 = vcmask 64512
          %v3990 = vsel %vm3989, %v3973, -inf
          %3991 = vmax.xlane.f32.xlu0 %v3990
          %v3992 = vpop.xlane.xlu0 %3991
          %v3993 = vsel %vm3989, %v3974, -inf
          %3994 = vmax.xlane.f32.xlu0 %v3993
          %v3995 = vpop.xlane.xlu0 %3994
          %v3996 = vsel %vm3989, %v3975, -inf
          %3997 = vmax.xlane.f32.xlu0 %v3996
          %v3998 = vpop.xlane.xlu0 %3997
          %v3999 = vsel %vm3989, %v3976, -inf
          %4000 = vmax.xlane.f32.xlu0 %v3999
          %v4001 = vpop.xlane.xlu0 %4000
          %v4002 = vsel %vm3989, %v3977, -inf
          %4003 = vmax.xlane.f32.xlu0 %v4002
          %v4004 = vpop.xlane.xlu0 %4003
          %v4005 = vsel %vm3989, %v3978, -inf
          %4006 = vmax.xlane.f32.xlu0 %v4005
          %v4007 = vpop.xlane.xlu0 %4006
          %v4008 = vsel %vm3989, %v3979, -inf
          %4009 = vmax.xlane.f32.xlu0 %v4008
          %v4010 = vpop.xlane.xlu0 %4009
          %v4011 = vsel %vm3989, %v3980, -inf
          %4012 = vmax.xlane.f32.xlu0 %v4011
          %v4013 = vpop.xlane.xlu0 %4012
          %v4014 = vsel %vm3989, %v3981, -inf
          %4015 = vmax.xlane.f32.xlu0 %v4014
          %v4016 = vpop.xlane.xlu0 %4015
          %v4017 = vsel %vm3989, %v3982, -inf
          %4018 = vmax.xlane.f32.xlu0 %v4017
          %v4019 = vpop.xlane.xlu0 %4018
          %v4020 = vsel %vm3989, %v3983, -inf
          %4021 = vmax.xlane.f32.xlu0 %v4020
          %v4022 = vpop.xlane.xlu0 %4021
          %v4023 = vsel %vm3989, %v3984, -inf
          %4024 = vmax.xlane.f32.xlu0 %v4023
          %v4025 = vpop.xlane.xlu0 %4024
          %v4026 = vsel %vm3989, %v3985, -inf
          %4027 = vmax.xlane.f32.xlu0 %v4026
          %v4028 = vpop.xlane.xlu0 %4027
          %v4029 = vsel %vm3989, %v3986, -inf
          %4030 = vmax.xlane.f32.xlu0 %v4029
          %v4031 = vpop.xlane.xlu0 %4030
          %v4032 = vsel %vm3989, %v3987, -inf
          %4033 = vmax.xlane.f32.xlu0 %v4032
          %v4034 = vpop.xlane.xlu0 %4033
          %v4035 = vsel %vm3989, %v3988, -inf
          %4036 = vmax.xlane.f32.xlu0 %v4035
          %v4037 = vpop.xlane.xlu0 %4036
          %v4038 = vsub.f32 %v3973, %v3992
          %v4039 = vsub.f32 %v3974, %v3995
          %v4040 = vsub.f32 %v3975, %v3998
          %v4041 = vsub.f32 %v3976, %v4001
          %v4042 = vsub.f32 %v3977, %v4004
          %v4043 = vsub.f32 %v3978, %v4007
          %v4044 = vsub.f32 %v3979, %v4010
          %v4045 = vsub.f32 %v3980, %v4013
          %v4046 = vsub.f32 %v3981, %v4016
          %v4047 = vsub.f32 %v3982, %v4019
          %v4048 = vsub.f32 %v3983, %v4022
          %v4049 = vsub.f32 %v3984, %v4025
          %v4050 = vsub.f32 %v3985, %v4028
          %v4051 = vsub.f32 %v3986, %v4031
          %v4052 = vsub.f32 %v3987, %v4034
          %v4053 = vsub.f32 %v3988, %v4037
          %v4054 = vmul.f32 %v4038, 1.442695
          %v4055 = vpow.pop %v4054
          %v4056 = vmul.f32 %v4039, 1.442695
          %v4057 = vpow.pop %v4056
          %v4058 = vmul.f32 %v4040, 1.442695
          %v4059 = vpow.pop %v4058
          %v4060 = vmul.f32 %v4041, 1.442695
          %v4061 = vpow.pop %v4060
          %v4062 = vmul.f32 %v4042, 1.442695
          %v4063 = vpow.pop %v4062
          %v4064 = vmul.f32 %v4043, 1.442695
          %v4065 = vpow.pop %v4064
          %v4066 = vmul.f32 %v4044, 1.442695
          %v4067 = vpow.pop %v4066
          %v4068 = vmul.f32 %v4045, 1.442695
          %v4069 = vpow.pop %v4068
          %v4070 = vmul.f32 %v4046, 1.442695
          %v4071 = vpow.pop %v4070
          %v4072 = vmul.f32 %v4047, 1.442695
          %v4073 = vpow.pop %v4072
          %v4074 = vmul.f32 %v4048, 1.442695
          %v4075 = vpow.pop %v4074
          %v4076 = vmul.f32 %v4049, 1.442695
          %v4077 = vpow.pop %v4076
          %v4078 = vmul.f32 %v4050, 1.442695
          %v4079 = vpow.pop %v4078
          %v4080 = vmul.f32 %v4051, 1.442695
          %v4081 = vpow.pop %v4080
          %v4082 = vmul.f32 %v4052, 1.442695
          %v4083 = vpow.pop %v4082
          %v4084 = vmul.f32 %v4053, 1.442695
          %v4085 = vpow.pop %v4084
          %v4086 = vsel %vm3989, %v4055, 0.0
          %4087 = vadd.xlane.f32.xlu0 %v4086
          %v4088 = vpop.xlane.xlu0 %4087
          %v4089 = vsel %vm3989, %v4057, 0.0
          %4090 = vadd.xlane.f32.xlu0 %v4089
          %v4091 = vpop.xlane.xlu0 %4090
          %v4092 = vsel %vm3989, %v4059, 0.0
          %4093 = vadd.xlane.f32.xlu0 %v4092
          %v4094 = vpop.xlane.xlu0 %4093
          %v4095 = vsel %vm3989, %v4061, 0.0
          %4096 = vadd.xlane.f32.xlu0 %v4095
          %v4097 = vpop.xlane.xlu0 %4096
          %v4098 = vsel %vm3989, %v4063, 0.0
          %4099 = vadd.xlane.f32.xlu0 %v4098
          %v4100 = vpop.xlane.xlu0 %4099
          %v4101 = vsel %vm3989, %v4065, 0.0
          %4102 = vadd.xlane.f32.xlu0 %v4101
          %v4103 = vpop.xlane.xlu0 %4102
          %v4104 = vsel %vm3989, %v4067, 0.0
          %4105 = vadd.xlane.f32.xlu0 %v4104
          %v4106 = vpop.xlane.xlu0 %4105
          %v4107 = vsel %vm3989, %v4069, 0.0
          %4108 = vadd.xlane.f32.xlu0 %v4107
          %v4109 = vpop.xlane.xlu0 %4108
          %v4110 = vsel %vm3989, %v4071, 0.0
          %4111 = vadd.xlane.f32.xlu0 %v4110
          %v4112 = vpop.xlane.xlu0 %4111
          %v4113 = vsel %vm3989, %v4073, 0.0
          %4114 = vadd.xlane.f32.xlu0 %v4113
          %v4115 = vpop.xlane.xlu0 %4114
          %v4116 = vsel %vm3989, %v4075, 0.0
          %4117 = vadd.xlane.f32.xlu0 %v4116
          %v4118 = vpop.xlane.xlu0 %4117
          %v4119 = vsel %vm3989, %v4077, 0.0
          %4120 = vadd.xlane.f32.xlu0 %v4119
          %v4121 = vpop.xlane.xlu0 %4120
          %v4122 = vsel %vm3989, %v4079, 0.0
          %4123 = vadd.xlane.f32.xlu0 %v4122
          %v4124 = vpop.xlane.xlu0 %4123
          %v4125 = vsel %vm3989, %v4081, 0.0
          %4126 = vadd.xlane.f32.xlu0 %v4125
          %v4127 = vpop.xlane.xlu0 %4126
          %v4128 = vsel %vm3989, %v4083, 0.0
          %4129 = vadd.xlane.f32.xlu0 %v4128
          %v4130 = vpop.xlane.xlu0 %4129
          %v4131 = vsel %vm3989, %v4085, 0.0
          %4132 = vadd.xlane.f32.xlu0 %v4131
          %v4133 = vpop.xlane.xlu0 %4132
          %v4134 = vrcp.pop %v4088
          %v4135 = vmul.f32 %v4055, %v4134
          %v4136 = vrcp.pop %v4091
          %v4137 = vmul.f32 %v4057, %v4136
          %v4138 = vrcp.pop %v4094
          %v4139 = vmul.f32 %v4059, %v4138
          %v4140 = vrcp.pop %v4097
          %v4141 = vmul.f32 %v4061, %v4140
          %v4142 = vrcp.pop %v4100
          %v4143 = vmul.f32 %v4063, %v4142
          %v4144 = vrcp.pop %v4103
          %v4145 = vmul.f32 %v4065, %v4144
          %v4146 = vrcp.pop %v4106
          %v4147 = vmul.f32 %v4067, %v4146
          %v4148 = vrcp.pop %v4109
          %v4149 = vmul.f32 %v4069, %v4148
          %v4150 = vrcp.pop %v4112
          %v4151 = vmul.f32 %v4071, %v4150
          %v4152 = vrcp.pop %v4115
          %v4153 = vmul.f32 %v4073, %v4152
          %v4154 = vrcp.pop %v4118
          %v4155 = vmul.f32 %v4075, %v4154
          %v4156 = vrcp.pop %v4121
          %v4157 = vmul.f32 %v4077, %v4156
          %v4158 = vrcp.pop %v4124
          %v4159 = vmul.f32 %v4079, %v4158
          %v4160 = vrcp.pop %v4127
          %v4161 = vmul.f32 %v4081, %v4160
          %v4162 = vrcp.pop %v4130
          %v4163 = vmul.f32 %v4083, %v4162
          %v4164 = vrcp.pop %v4133
          %v4165 = vmul.f32 %v4085, %v4164
          %v4166 = vld [vmem:[%s421] sm:$0xf]
          %v4167 = vld [vmem:[%s421 + $0x4] sm:$0xf]
          %v4168 = vunpack.c.l.bf16 %v4166
          %v4169 = vunpack.c.l.bf16 %v4167
          %v4171 = vsel %vm3989, %v4168, 0
          %v4174 = vsel %vm3989, %v4169, 0
          %v4177 = vsel %vm3989, %v4135, 0
          %v4180 = vsel %vm3989, %v4137, 0
          %v4183 = vsel %vm3989, %v4139, 0
          %v4186 = vsel %vm3989, %v4141, 0
          %v4189 = vsel %vm3989, %v4143, 0
          %v4192 = vsel %vm3989, %v4145, 0
          %v4195 = vsel %vm3989, %v4147, 0
          %v4198 = vsel %vm3989, %v4149, 0
          %v4201 = vsel %vm3989, %v4151, 0
          %v4204 = vsel %vm3989, %v4153, 0
          %v4207 = vsel %vm3989, %v4155, 0
          %v4210 = vsel %vm3989, %v4157, 0
          %v4213 = vsel %vm3989, %v4159, 0
          %v4216 = vsel %vm3989, %v4161, 0
          %v4219 = vsel %vm3989, %v4163, 0
          %v4222 = vsel %vm3989, %v4165, 0
          %4224 = vmatprep.subr.mxu0 0.0
          %4225 = vmatpush1.xpose.msra.mxu0 %v4177
          %4226 = vmatprep.subr.mxu0 0.0
          %4227 = vmatpush1.xpose.msra.mxu0 %v4180
          %4228 = vmatprep.subr.mxu0 0.0
          %4229 = vmatpush1.xpose.msra.mxu0 %v4183
          %4230 = vmatprep.subr.mxu0 0.0
          %4231 = vmatpush1.xpose.msra.mxu0 %v4186
          %4232 = vmatprep.subr.mxu0 0.0
          %4233 = vmatpush1.xpose.msra.mxu0 %v4189
          %4234 = vmatprep.subr.mxu0 0.0
          %4235 = vmatpush1.xpose.msra.mxu0 %v4192
          %4236 = vmatprep.subr.mxu0 0.0
          %4237 = vmatpush1.xpose.msra.mxu0 %v4195
          %4238 = vmatprep.subr.mxu0 0.0
          %4239 = vmatpush1.xpose.msra.mxu0 %v4198
          %4240 = vmatprep.subr.mxu0 0.0
          %4241 = vmatpush1.xpose.msra.mxu0 %v4201
          %4242 = vmatprep.subr.mxu0 0.0
          %4243 = vmatpush1.xpose.msra.mxu0 %v4204
          %4244 = vmatprep.subr.mxu0 0.0
          %4245 = vmatpush1.xpose.msra.mxu0 %v4207
          %4246 = vmatprep.subr.mxu0 0.0
          %4247 = vmatpush1.xpose.msra.mxu0 %v4210
          %4248 = vmatprep.subr.mxu0 0.0
          %4249 = vmatpush1.xpose.msra.mxu0 %v4213
          %4250 = vmatprep.subr.mxu0 0.0
          %4251 = vmatpush1.xpose.msra.mxu0 %v4216
          %4252 = vmatprep.subr.mxu0 0.0
          %4253 = vmatpush1.xpose.msra.mxu0 %v4219
          %4254 = vmatprep.subr.mxu0 0.0
          %4255 = vmatpush1.xpose.msra.mxu0 %v4222
          %4256 = vmatprep.subr.mxu0 0.0
          %4257 = vmatpush1.xpose.msra.mxu0 0.0
          %4258 = vmatprep.subr.mxu0 0.0
          %4259 = vmatpush1.xpose.msra.mxu0 0.0
          %4260 = vmatprep.subr.mxu0 0.0
          %4261 = vmatpush1.xpose.msra.mxu0 0.0
          %4262 = vmatprep.subr.mxu0 0.0
          %4263 = vmatpush1.xpose.msra.mxu0 0.0
          %4264 = vmatprep.subr.mxu0 0.0
          %4265 = vmatpush1.xpose.msra.mxu0 0.0
          %4266 = vmatprep.subr.mxu0 0.0
          %4267 = vmatpush1.xpose.msra.mxu0 0.0
          %4268 = vmatprep.subr.mxu0 0.0
          %4269 = vmatpush1.xpose.msra.mxu0 0.0
          %4270 = vmatprep.subr.mxu0 0.0
          %4271 = vmatpush1.xpose.msra.mxu0 0.0
          %4272 = vmatprep.subr.mxu0 0.0
          %4273 = vmatpush1.xpose.msra.mxu0 0.0
          %4274 = vmatprep.subr.mxu0 0.0
          %4275 = vmatpush1.xpose.msra.mxu0 0.0
          %4276 = vmatprep.subr.mxu0 0.0
          %4277 = vmatpush1.xpose.msra.mxu0 0.0
          %4278 = vmatprep.subr.mxu0 0.0
          %4279 = vmatpush1.xpose.msra.mxu0 0.0
          %4280 = vmatprep.subr.mxu0 0.0
          %4281 = vmatpush1.xpose.msra.mxu0 0.0
          %4282 = vmatprep.subr.mxu0 0.0
          %4283 = vmatpush1.xpose.msra.mxu0 0.0
          %4284 = vmatprep.subr.mxu0 0.0
          %4285 = vmatpush1.xpose.msra.mxu0 0.0
          %4286 = vmatprep.subr.mxu0 0.0
          %4287 = vmatpush1.xpose.msra.mxu0 0.0
          %4288 = vmatprep.mubr.f32.mxu0 0.0
          %4289 = vmatmul.mubr.f32.gmra.mrb[0].mxu0 %v4171
          %v4290 = vpop.f32.mrb[0].mxu0
          %v4291 = vadd.f32 0.0, %v4290
          %v4292 = vpop.f32.mrb[0].mxu0
          %4293 = vmatprep.mubr.f32.mxu0 0.0
          %4294 = vmatmul.mubr.f32.gmra.mrb[0].mxu0 %v4174
          %v4295 = vpop.f32.mrb[0].mxu0
          %v4296 = vadd.f32 0.0, %v4295
          %v4297 = vpop.f32.mrb[0].mxu0
          %4298 = vdwg.mxu0
          %v4299 = vsub.f32 0.0, %v4291
          %v4300 = vsub.f32 0.0, %v4296
          %v4301 = vld [vmem:[#allocation4] sm:$0x1]
          %v4302 = vld [vmem:[#allocation2] sm:$0xff]
          %v4303 = vld [vmem:[#allocation2 + $0x8] sm:$0xff]
          %v4305 = vlaneseq
          %v4306 = vshrl.u32 %v4305, 7
          %v4307 = vsub.s32 0, %v4306
          %v4308 = vrot.slane %v4301, %v4307
          %v4310 = vsub.f32 %v4308, %v4302
          %v4311 = vsub.f32 %v4308, %v4303
          %v4312 = vmul.f32 %v4310, 0.00390625
          %v4313 = vmul.f32 %v4311, 0.00390625
          %v4314 = vld [vmem:[#allocation5] sm:$0x1]
          %v4315 = vld [vmem:[#allocation6] sm:$0xff]
          %v4316 = vld [vmem:[#allocation6 + $0x8] sm:$0xff]
          %v4318 = vlaneseq
          %v4319 = vshrl.u32 %v4318, 7
          %v4320 = vsub.s32 0, %v4319
          %v4321 = vrot.slane %v4314, %v4320
          %4324 = vset.pattern.permute.xlu0 0
          %4325 = vperm.xlu0 %4324, %v4315
          %v4326 = vpop.permute.xlu0 %4325
          %4329 = vset.pattern.permute.xlu0 0
          %4330 = vperm.xlu0 %4329, %v4316
          %v4331 = vpop.permute.xlu0 %4330
          %v4333 = vadd.f32 %v4321, %v4326
          %v4334 = vadd.f32 %v4321, %v4331
          %v4335 = vld [vmem:[#allocation3] sm:$0xff]
          %v4336 = vld [vmem:[#allocation3 + $0x8] sm:$0xff]
          %v4337 = vmul.f32 %v4335, 2.0
          %v4338 = vmul.f32 %v4336, 2.0
          %v4339 = vadd.f32 %v4337, 1.0
          %v4340 = vadd.f32 %v4338, 1.0
          %v4341 = vadd.f32 %v4333, 1.0
          %v4342 = vadd.f32 %v4334, 1.0
          %v4343 = vrcp.pop %v4341
          %v4344 = vmul.f32 %v4339, %v4343
          %v4345 = vrcp.pop %v4342
          %v4346 = vmul.f32 %v4340, %v4345
          %v4347 = vsub.f32 1.0, %v4344
          %v4348 = vsub.f32 1.0, %v4346
          %v4349 = vmul.f32 %v4312, 5.0
          %v4350 = vmul.f32 %v4313, 5.0
          %v4351 = vmul.f32 %v4299, 2.0
          %v4352 = vmul.f32 %v4300, 2.0
          %v4353 = vadd.f32 %v4349, %v4351
          %v4354 = vadd.f32 %v4350, %v4352
          %v4355 = vmul.f32 %v4347, 5.0
          %v4356 = vmul.f32 %v4348, 5.0
          %v4357 = vadd.f32 %v4353, %v4355
          %v4358 = vadd.f32 %v4354, %v4356
          %4359 = vst [vmem:[%s411] sm:$0xff] %v4357
          %4360 = vst [vmem:[%s411 + $0x8] sm:$0xff] %v4358
        $region126: #{_matcher_cost_forward.1} parent=109 // pred_fallthru
          _
        %s4361 = sand.u32 %s146, 1
        %s4362 = scalar_lea.sflag [#allocation10], %s4361
        %s4363 = sand.u32 %s146, 1
        %s4364 = smul.addr %s4363, 16
        %s4365 = scalar_lea.vmem [#allocation9], %s4364
        // Predicated region
        $region127: #{_matcher_cost_forward.1} parent=109 // pred_check
          %p4366 = pneg %p156
        $region128: #{_matcher_cost_forward.1} parent=109 // pred_check_branch
          %4368 = sbr.rel (%p4366) target = $region130
        $region129: #{_matcher_cost_forward.1} parent=109 // pred_region
          %s4370 = ssub.s32 256, 256
          %4371 = vsyncadd %s4362, %s4370
          %s4372 = smul.addr %s22, 2
          %s4373 = smul.addr %s4372, 128
          %s4374 = scalar_lea.hbm %s4, %s4373
          %s4375 = sshll.u32 %s4365, 4
          %s4376 = int_to_ptr.vmem [resolvable:$true] %s4375
          %4381 = dma.vmem_to_hbm [thread:$0]  %s4376, 256, %s4374, %s4362, 128, 128, 8
        $region130: #{_matcher_cost_forward.1} parent=109 // pred_fallthru
          _
      $region110: #{_matcher_cost_forward.1} parent=5 // pred_fallthru
        _
      %p4382 = scmp.le.s32.totalorder 2, %s13
      // Predicated region
      $region131: #{_matcher_cost_forward.1} parent=5 // pred_check
        %p4383 = pneg %p4382
      $region132: #{_matcher_cost_forward.1} parent=5 // pred_check_branch
        %4385 = sbr.rel (%p4383) target = $region134
      $region133: #{_matcher_cost_forward.1} parent=5 // pred_region
        %s4386 = ssub.s32 %s13, 2
        // Predicated region
        $region135: #{_matcher_cost_forward.1} parent=133 // pred_check
          %p4387 = pneg %p162
        $region136: #{_matcher_cost_forward.1} parent=133 // pred_check_branch
          %4389 = sbr.rel (%p4387) target = $region138
        $region137: #{_matcher_cost_forward.1} parent=133 // pred_region
          %s4390 = sand.u32 %s147, 1
          %s4391 = scalar_lea.sflag [#allocation10], %s4390
          %s4392 = sand.u32 %s147, 1
          %s4393 = smul.addr %s4392, 16
          %s4394 = scalar_lea.vmem [#allocation9], %s4393
          %4395 = dma.done %s4391, 256
        $region138: #{_matcher_cost_forward.1} parent=133 // pred_fallthru
          _
      $region134: #{_matcher_cost_forward.1} parent=5 // pred_fallthru
        _
    $region6: #{_matcher_cost_forward.1} parent=1 // loop_footer
      %s17 = sadd.s32 1, %s13
    $region7: #{_matcher_cost_forward.1} parent=1 // loop_footer_branch
      %12 = sbr.rel target = $region3
    $region8: #{_matcher_cost_forward.1} parent=1 // loop_exit
      _
    %4396 = vsyncpa [#allocation10], 1
    %s4397 = scalar_lea.sflag [#allocation10], 1
    %4398 = vsyncpa %s4397, 1

</llo_original>
